<compile_context>
chip_gen: v7x
topology: tpu7x:2x2x1
jax: 0.10.0
libtpu: 0.0.40
codegen_flags: <defaults>
</compile_context>

<pallas_src>
import jax
import jax.numpy as jnp
import numpy as np
from jax import lax
from jax.experimental import pallas as pl
from jax.experimental.pallas import tpu as pltpu


def _make_kernel(H, W, Cin, Cmid, Cout):
    """Fused conv3x3 -> ReLU -> conv3x3 for one batch element (NHWC)."""
    HW = H * W

    def kernel(x_ref, w1_ref, b1_ref, w2_ref, b2_ref, o_ref,
               xpad_ref, midpad_ref, col1_ref, col2_ref):
        # x_ref   : (1, H, W, Cin)        unpadded input tile (this batch elem)
        # w1_ref  : (9*Cin, Cmid)         conv1 im2col weights (tap-major K)
        # w2_ref  : (9*Cmid, Cout)        conv2 im2col weights
        # b1_ref  : (1, Cmid)  b2_ref : (1, Cout)
        # o_ref   : (1, H*W, Cout)        flattened spatial output slab
        # xpad_ref  : (H+2, W+2, Cin)     zero-padded input scratch
        # midpad_ref: (H+2, W+2, Cmid)    zero-padded ReLU(conv1) scratch
        # col1_ref  : (H*W, 9*Cin)        conv1 im2col scratch (matmul LHS)
        # col2_ref  : (H*W, 9*Cmid)       conv2 im2col scratch (matmul LHS)
        f32 = jnp.float32

        # ---- zero ONLY the 1-px halo ring of the padded scratches.  The
        #      interiors are fully rewritten every grid step, so this is all
        #      that is needed and it keeps the batch axis "parallel"-safe. ----
        xpad_ref[0:1, :, :] = jnp.zeros((1, W + 2, Cin), f32)
        xpad_ref[H + 1:H + 2, :, :] = jnp.zeros((1, W + 2, Cin), f32)
        xpad_ref[:, 0:1, :] = jnp.zeros((H + 2, 1, Cin), f32)
        xpad_ref[:, W + 1:W + 2, :] = jnp.zeros((H + 2, 1, Cin), f32)

        midpad_ref[0:1, :, :] = jnp.zeros((1, W + 2, Cmid), f32)
        midpad_ref[H + 1:H + 2, :, :] = jnp.zeros((1, W + 2, Cmid), f32)
        midpad_ref[:, 0:1, :] = jnp.zeros((H + 2, 1, Cmid), f32)
        midpad_ref[:, W + 1:W + 2, :] = jnp.zeros((H + 2, 1, Cmid), f32)

        # padding folded into the kernel: write the unpadded input interior.
        xpad_ref[1:H + 1, 1:W + 1, :] = x_ref[0]

        # ---- conv1: fold the 9 taps into K (im2col) -> ONE MXU matmul,
        #      then bias + ReLU on the VPU. ----
        for t in range(9):
            dh, dw = divmod(t, 3)
            col1_ref[:, t * Cin:(t + 1) * Cin] = (
                xpad_ref[dh:dh + H, dw:dw + W, :].reshape(HW, Cin))
        mid = jnp.dot(col1_ref[...], w1_ref[...],
                      preferred_element_type=jnp.float32)          # (H*W, Cmid)
        mid = jnp.maximum(mid + b1_ref[...], 0.0)
        midpad_ref[1:H + 1, 1:W + 1, :] = mid.reshape(H, W, Cmid)

        # ---- conv2: same im2col fold over the padded intermediate. ----
        for t in range(9):
            dh, dw = divmod(t, 3)
            col2_ref[:, t * Cmid:(t + 1) * Cmid] = (
                midpad_ref[dh:dh + H, dw:dw + W, :].reshape(HW, Cmid))
        out = jnp.dot(col2_ref[...], w2_ref[...],
                      preferred_element_type=jnp.float32)           # (H*W, Cout)
        o_ref[0] = (out + b2_ref[...]).astype(o_ref.dtype)

    return kernel


def hor_block_forward(x_nchw, w1, b1, w2, b2):
    """x_nchw: (N, Cin, H, W); w1: (Cmid, Cin, 3, 3) OIHW; w2: (Cout, Cmid, 3, 3)."""
    N, Cin, H, W = x_nchw.shape
    Cmid = w1.shape[0]
    Cout = w2.shape[0]

    # Glue: NCHW -> NHWC; weights as im2col matrices (row = (dh*3+dw)*C + c).
    x_nhwc = jnp.transpose(x_nchw, (0, 2, 3, 1)).astype(jnp.float32)
    w1_k = jnp.transpose(w1, (2, 3, 1, 0)).reshape(9 * Cin, Cmid).astype(jnp.float32)
    w2_k = jnp.transpose(w2, (2, 3, 1, 0)).reshape(9 * Cmid, Cout).astype(jnp.float32)
    b1_k = b1.reshape(1, Cmid).astype(jnp.float32)
    b2_k = b2.reshape(1, Cout).astype(jnp.float32)

    flops = 2 * N * H * W * 9 * (Cin * Cmid + Cmid * Cout)
    bytes_accessed = 4 * (x_nhwc.size + w1_k.size + w2_k.size + b1_k.size + b2_k.size
                          + N * H * W * Cout)

    out_flat = pl.pallas_call(
        _make_kernel(H, W, Cin, Cmid, Cout),
        out_shape=jax.ShapeDtypeStruct((N, H * W, Cout), jnp.float32),
        grid=(N,),
        in_specs=[
            pl.BlockSpec((1, H, W, Cin), lambda b: (b, 0, 0, 0)),
            pl.BlockSpec((9 * Cin, Cmid), lambda b: (0, 0)),
            pl.BlockSpec((1, Cmid), lambda b: (0, 0)),
            pl.BlockSpec((9 * Cmid, Cout), lambda b: (0, 0)),
            pl.BlockSpec((1, Cout), lambda b: (0, 0)),
        ],
        out_specs=pl.BlockSpec((1, H * W, Cout), lambda b: (b, 0, 0)),
        scratch_shapes=[
            pltpu.VMEM((H + 2, W + 2, Cin), jnp.float32),    # zero-padded input
            pltpu.VMEM((H + 2, W + 2, Cmid), jnp.float32),   # zero-padded ReLU(conv1)
            pltpu.VMEM((H * W, 9 * Cin), jnp.float32),       # conv1 im2col (2-D)
            pltpu.VMEM((H * W, 9 * Cmid), jnp.float32),      # conv2 im2col (2-D)
        ],
        compiler_params=pltpu.CompilerParams(
            dimension_semantics=("parallel",)),
        cost_estimate=pl.CostEstimate(flops=flops, transcendentals=0,
                                      bytes_accessed=bytes_accessed),
    )(x_nhwc, w1_k, b1_k, w2_k, b2_k)

    out_nhwc = out_flat.reshape(N, H, W, Cout)
    return jnp.transpose(out_nhwc, (0, 3, 1, 2))  # back to NCHW


def _reference(x, w1, b1, w2, b2):
    dn = ("NCHW", "OIHW", "NCHW")
    y = lax.conv_general_dilated(x, w1, (1, 1), ((1, 1), (1, 1)),
                                 dimension_numbers=dn)
    y = jnp.maximum(y + b1[None, :, None, None], 0.0)
    z = lax.conv_general_dilated(y, w2, (1, 1), ((1, 1), (1, 1)),
                                 dimension_numbers=dn)
    return z + b2[None, :, None, None]


if __name__ == "__main__":
    key = jax.random.PRNGKey(0)
    N, Cin, Cout, H, W = 2, 4, 8, 16, 16

    k1, k2, k3, k4, k5 = jax.random.split(key, 5)
    x = jax.random.normal(k1, (N, Cin, H, W), jnp.float32)

    # Deterministic parameter init (kaiming-uniform-ish, PyTorch Conv2d OIHW shapes).
    fan1 = Cin * 9
    w1 = jax.random.uniform(k2, (Cout, Cin, 3, 3), jnp.float32, -1.0, 1.0) / np.sqrt(fan1)
    b1 = jax.random.uniform(k3, (Cout,), jnp.float32, -1.0, 1.0) / np.sqrt(fan1)
    fan2 = Cout * 9
    w2 = jax.random.uniform(k4, (Cout, Cout, 3, 3), jnp.float32, -1.0, 1.0) / np.sqrt(fan2)
    b2 = jax.random.uniform(k5, (Cout,), jnp.float32, -1.0, 1.0) / np.sqrt(fan2)

    out = jax.jit(hor_block_forward)(x, w1, b1, w2, b2)
    out = jax.block_until_ready(out)

    ref = jax.block_until_ready(_reference(x, w1, b1, w2, b2))
    assert out.shape == (N, Cout, H, W), out.shape
    np.testing.assert_allclose(np.asarray(out), np.asarray(ref), rtol=1e-4, atol=1e-4)
    print("KERNEL_OK")
</pallas_src>

<mosaic_0001>
module attributes {stable_mosaic.version = 11 : i64} {
  func.func @kernel(%arg0: i32, %arg1: memref<1x16x16x4xf32, #tpu.memory_space<vmem>>, %arg2: memref<36x8xf32, #tpu.memory_space<vmem>>, %arg3: memref<1x8xf32, #tpu.memory_space<vmem>>, %arg4: memref<72x8xf32, #tpu.memory_space<vmem>>, %arg5: memref<1x8xf32, #tpu.memory_space<vmem>>, %arg6: memref<1x256x8xf32, #tpu.memory_space<vmem>>, %arg7: memref<18x18x4xf32, #tpu.memory_space<vmem>>, %arg8: memref<18x18x8xf32, #tpu.memory_space<vmem>>, %arg9: memref<256x36xf32, #tpu.memory_space<vmem>>, %arg10: memref<256x72xf32, #tpu.memory_space<vmem>>) attributes {dimension_semantics = [#tpu.dimension_semantics<parallel>], iteration_bounds = array<i64: 2>, scalar_prefetch = 0 : i64, scratch_operands = 4 : i64, tpu.core_type = #tpu.core_type<tc>, window_params = [{transform_indices = @transform_0, window_bounds = array<i64: 1, 16, 16, 4>}, {pipeline_mode = #tpu.pipeline_mode<synchronous>, transform_indices = @transform_1, window_bounds = array<i64: 36, 8>}, {pipeline_mode = #tpu.pipeline_mode<synchronous>, transform_indices = @transform_2, window_bounds = array<i64: 1, 8>}, {pipeline_mode = #tpu.pipeline_mode<synchronous>, transform_indices = @transform_3, window_bounds = array<i64: 72, 8>}, {pipeline_mode = #tpu.pipeline_mode<synchronous>, transform_indices = @transform_4, window_bounds = array<i64: 1, 8>}, {transform_indices = @transform_5, window_bounds = array<i64: 1, 256, 8>}]} {
    %cst = arith.constant 0.000000e+00 : f32
    %0 = vector.broadcast %cst : f32 to vector<1x18x4xf32>
    %c0 = arith.constant 0 : index
    %c0_0 = arith.constant 0 : index
    %c0_1 = arith.constant 0 : index
    %1 = vector.load %arg7[%c0, %c0_0, %c0_1] : memref<18x18x4xf32, #tpu.memory_space<vmem>>, vector<1x18x4xf32>
    tpu.vector_store %arg7[%c0, %c0_0, %c0_1], %0 {strides = array<i32>} : memref<18x18x4xf32, #tpu.memory_space<vmem>>, vector<1x18x4xf32>,
    %cst_2 = arith.constant 0.000000e+00 : f32
    %2 = vector.broadcast %cst_2 : f32 to vector<1x18x4xf32>
    %c17 = arith.constant 17 : index
    %c0_3 = arith.constant 0 : index
    %c0_4 = arith.constant 0 : index
    %3 = vector.load %arg7[%c17, %c0_3, %c0_4] : memref<18x18x4xf32, #tpu.memory_space<vmem>>, vector<1x18x4xf32>
    tpu.vector_store %arg7[%c17, %c0_3, %c0_4], %2 {strides = array<i32>} : memref<18x18x4xf32, #tpu.memory_space<vmem>>, vector<1x18x4xf32>,
    %cst_5 = arith.constant 0.000000e+00 : f32
    %4 = vector.broadcast %cst_5 : f32 to vector<18x1x4xf32>
    %c0_6 = arith.constant 0 : index
    %c0_7 = arith.constant 0 : index
    %c0_8 = arith.constant 0 : index
    %5 = vector.load %arg7[%c0_6, %c0_7, %c0_8] : memref<18x18x4xf32, #tpu.memory_space<vmem>>, vector<18x1x4xf32>
    tpu.vector_store %arg7[%c0_6, %c0_7, %c0_8], %4 {strides = array<i32>} : memref<18x18x4xf32, #tpu.memory_space<vmem>>, vector<18x1x4xf32>,
    %cst_9 = arith.constant 0.000000e+00 : f32
    %6 = vector.broadcast %cst_9 : f32 to vector<18x1x4xf32>
    %c0_10 = arith.constant 0 : index
    %c17_11 = arith.constant 17 : index
    %c0_12 = arith.constant 0 : index
    %7 = vector.load %arg7[%c0_10, %c17_11, %c0_12] : memref<18x18x4xf32, #tpu.memory_space<vmem>>, vector<18x1x4xf32>
    tpu.vector_store %arg7[%c0_10, %c17_11, %c0_12], %6 {strides = array<i32>} : memref<18x18x4xf32, #tpu.memory_space<vmem>>, vector<18x1x4xf32>,
    %cst_13 = arith.constant 0.000000e+00 : f32
    %8 = vector.broadcast %cst_13 : f32 to vector<1x18x8xf32>
    %c0_14 = arith.constant 0 : index
    %c0_15 = arith.constant 0 : index
    %c0_16 = arith.constant 0 : index
    %9 = vector.load %arg8[%c0_14, %c0_15, %c0_16] : memref<18x18x8xf32, #tpu.memory_space<vmem>>, vector<1x18x8xf32>
    tpu.vector_store %arg8[%c0_14, %c0_15, %c0_16], %8 {strides = array<i32>} : memref<18x18x8xf32, #tpu.memory_space<vmem>>, vector<1x18x8xf32>,
    %cst_17 = arith.constant 0.000000e+00 : f32
    %10 = vector.broadcast %cst_17 : f32 to vector<1x18x8xf32>
    %c17_18 = arith.constant 17 : index
    %c0_19 = arith.constant 0 : index
    %c0_20 = arith.constant 0 : index
    %11 = vector.load %arg8[%c17_18, %c0_19, %c0_20] : memref<18x18x8xf32, #tpu.memory_space<vmem>>, vector<1x18x8xf32>
    tpu.vector_store %arg8[%c17_18, %c0_19, %c0_20], %10 {strides = array<i32>} : memref<18x18x8xf32, #tpu.memory_space<vmem>>, vector<1x18x8xf32>,
    %cst_21 = arith.constant 0.000000e+00 : f32
    %12 = vector.broadcast %cst_21 : f32 to vector<18x1x8xf32>
    %c0_22 = arith.constant 0 : index
    %c0_23 = arith.constant 0 : index
    %c0_24 = arith.constant 0 : index
    %13 = vector.load %arg8[%c0_22, %c0_23, %c0_24] : memref<18x18x8xf32, #tpu.memory_space<vmem>>, vector<18x1x8xf32>
    tpu.vector_store %arg8[%c0_22, %c0_23, %c0_24], %12 {strides = array<i32>} : memref<18x18x8xf32, #tpu.memory_space<vmem>>, vector<18x1x8xf32>,
    %cst_25 = arith.constant 0.000000e+00 : f32
    %14 = vector.broadcast %cst_25 : f32 to vector<18x1x8xf32>
    %c0_26 = arith.constant 0 : index
    %c17_27 = arith.constant 17 : index
    %c0_28 = arith.constant 0 : index
    %15 = vector.load %arg8[%c0_26, %c17_27, %c0_28] : memref<18x18x8xf32, #tpu.memory_space<vmem>>, vector<18x1x8xf32>
    tpu.vector_store %arg8[%c0_26, %c17_27, %c0_28], %14 {strides = array<i32>} : memref<18x18x8xf32, #tpu.memory_space<vmem>>, vector<18x1x8xf32>,
    %c0_29 = arith.constant 0 : index
    %c0_30 = arith.constant 0 : index
    %c0_31 = arith.constant 0 : index
    %c0_32 = arith.constant 0 : index
    %16 = vector.load %arg1[%c0_29, %c0_30, %c0_31, %c0_32] : memref<1x16x16x4xf32, #tpu.memory_space<vmem>>, vector<1x16x16x4xf32>
    %17 = vector.shape_cast %16 : vector<1x16x16x4xf32> to vector<16x16x4xf32>
    %c1 = arith.constant 1 : index
    %c1_33 = arith.constant 1 : index
    %c0_34 = arith.constant 0 : index
    %18 = vector.load %arg7[%c1, %c1_33, %c0_34] : memref<18x18x4xf32, #tpu.memory_space<vmem>>, vector<16x16x4xf32>
    tpu.vector_store %arg7[%c1, %c1_33, %c0_34], %17 {strides = array<i32>} : memref<18x18x4xf32, #tpu.memory_space<vmem>>, vector<16x16x4xf32>,
    %c0_35 = arith.constant 0 : index
    %c0_36 = arith.constant 0 : index
    %c0_37 = arith.constant 0 : index
    %19 = vector.load %arg7[%c0_35, %c0_36, %c0_37] : memref<18x18x4xf32, #tpu.memory_space<vmem>>, vector<16x16x4xf32>
    %20 = vector.shape_cast %19 : vector<16x16x4xf32> to vector<256x4xf32>
    %c0_38 = arith.constant 0 : index
    %c0_39 = arith.constant 0 : index
    %21 = vector.load %arg9[%c0_38, %c0_39] : memref<256x36xf32, #tpu.memory_space<vmem>>, vector<256x4xf32>
    tpu.vector_store %arg9[%c0_38, %c0_39], %20 {strides = array<i32>} : memref<256x36xf32, #tpu.memory_space<vmem>>, vector<256x4xf32>,
    %c0_40 = arith.constant 0 : index
    %c1_41 = arith.constant 1 : index
    %c0_42 = arith.constant 0 : index
    %22 = vector.load %arg7[%c0_40, %c1_41, %c0_42] : memref<18x18x4xf32, #tpu.memory_space<vmem>>, vector<16x16x4xf32>
    %23 = vector.shape_cast %22 : vector<16x16x4xf32> to vector<256x4xf32>
    %c0_43 = arith.constant 0 : index
    %c4 = arith.constant 4 : index
    %24 = vector.load %arg9[%c0_43, %c4] : memref<256x36xf32, #tpu.memory_space<vmem>>, vector<256x4xf32>
    tpu.vector_store %arg9[%c0_43, %c4], %23 {strides = array<i32>} : memref<256x36xf32, #tpu.memory_space<vmem>>, vector<256x4xf32>,
    %c0_44 = arith.constant 0 : index
    %c2 = arith.constant 2 : index
    %c0_45 = arith.constant 0 : index
    %25 = vector.load %arg7[%c0_44, %c2, %c0_45] : memref<18x18x4xf32, #tpu.memory_space<vmem>>, vector<16x16x4xf32>
    %26 = vector.shape_cast %25 : vector<16x16x4xf32> to vector<256x4xf32>
    %c0_46 = arith.constant 0 : index
    %c8 = arith.constant 8 : index
    %27 = vector.load %arg9[%c0_46, %c8] : memref<256x36xf32, #tpu.memory_space<vmem>>, vector<256x4xf32>
    tpu.vector_store %arg9[%c0_46, %c8], %26 {strides = array<i32>} : memref<256x36xf32, #tpu.memory_space<vmem>>, vector<256x4xf32>,
    %c1_47 = arith.constant 1 : index
    %c0_48 = arith.constant 0 : index
    %c0_49 = arith.constant 0 : index
    %28 = vector.load %arg7[%c1_47, %c0_48, %c0_49] : memref<18x18x4xf32, #tpu.memory_space<vmem>>, vector<16x16x4xf32>
    %29 = vector.shape_cast %28 : vector<16x16x4xf32> to vector<256x4xf32>
    %c0_50 = arith.constant 0 : index
    %c12 = arith.constant 12 : index
    %30 = vector.load %arg9[%c0_50, %c12] : memref<256x36xf32, #tpu.memory_space<vmem>>, vector<256x4xf32>
    tpu.vector_store %arg9[%c0_50, %c12], %29 {strides = array<i32>} : memref<256x36xf32, #tpu.memory_space<vmem>>, vector<256x4xf32>,
    %c1_51 = arith.constant 1 : index
    %c1_52 = arith.constant 1 : index
    %c0_53 = arith.constant 0 : index
    %31 = vector.load %arg7[%c1_51, %c1_52, %c0_53] : memref<18x18x4xf32, #tpu.memory_space<vmem>>, vector<16x16x4xf32>
    %32 = vector.shape_cast %31 : vector<16x16x4xf32> to vector<256x4xf32>
    %c0_54 = arith.constant 0 : index
    %c16 = arith.constant 16 : index
    %33 = vector.load %arg9[%c0_54, %c16] : memref<256x36xf32, #tpu.memory_space<vmem>>, vector<256x4xf32>
    tpu.vector_store %arg9[%c0_54, %c16], %32 {strides = array<i32>} : memref<256x36xf32, #tpu.memory_space<vmem>>, vector<256x4xf32>,
    %c1_55 = arith.constant 1 : index
    %c2_56 = arith.constant 2 : index
    %c0_57 = arith.constant 0 : index
    %34 = vector.load %arg7[%c1_55, %c2_56, %c0_57] : memref<18x18x4xf32, #tpu.memory_space<vmem>>, vector<16x16x4xf32>
    %35 = vector.shape_cast %34 : vector<16x16x4xf32> to vector<256x4xf32>
    %c0_58 = arith.constant 0 : index
    %c20 = arith.constant 20 : index
    %36 = vector.load %arg9[%c0_58, %c20] : memref<256x36xf32, #tpu.memory_space<vmem>>, vector<256x4xf32>
    tpu.vector_store %arg9[%c0_58, %c20], %35 {strides = array<i32>} : memref<256x36xf32, #tpu.memory_space<vmem>>, vector<256x4xf32>,
    %c2_59 = arith.constant 2 : index
    %c0_60 = arith.constant 0 : index
    %c0_61 = arith.constant 0 : index
    %37 = vector.load %arg7[%c2_59, %c0_60, %c0_61] : memref<18x18x4xf32, #tpu.memory_space<vmem>>, vector<16x16x4xf32>
    %38 = vector.shape_cast %37 : vector<16x16x4xf32> to vector<256x4xf32>
    %c0_62 = arith.constant 0 : index
    %c24 = arith.constant 24 : index
    %39 = vector.load %arg9[%c0_62, %c24] : memref<256x36xf32, #tpu.memory_space<vmem>>, vector<256x4xf32>
    tpu.vector_store %arg9[%c0_62, %c24], %38 {strides = array<i32>} : memref<256x36xf32, #tpu.memory_space<vmem>>, vector<256x4xf32>,
    %c2_63 = arith.constant 2 : index
    %c1_64 = arith.constant 1 : index
    %c0_65 = arith.constant 0 : index
    %40 = vector.load %arg7[%c2_63, %c1_64, %c0_65] : memref<18x18x4xf32, #tpu.memory_space<vmem>>, vector<16x16x4xf32>
    %41 = vector.shape_cast %40 : vector<16x16x4xf32> to vector<256x4xf32>
    %c0_66 = arith.constant 0 : index
    %c28 = arith.constant 28 : index
    %42 = vector.load %arg9[%c0_66, %c28] : memref<256x36xf32, #tpu.memory_space<vmem>>, vector<256x4xf32>
    tpu.vector_store %arg9[%c0_66, %c28], %41 {strides = array<i32>} : memref<256x36xf32, #tpu.memory_space<vmem>>, vector<256x4xf32>,
    %c2_67 = arith.constant 2 : index
    %c2_68 = arith.constant 2 : index
    %c0_69 = arith.constant 0 : index
    %43 = vector.load %arg7[%c2_67, %c2_68, %c0_69] : memref<18x18x4xf32, #tpu.memory_space<vmem>>, vector<16x16x4xf32>
    %44 = vector.shape_cast %43 : vector<16x16x4xf32> to vector<256x4xf32>
    %c0_70 = arith.constant 0 : index
    %c32 = arith.constant 32 : index
    %45 = vector.load %arg9[%c0_70, %c32] : memref<256x36xf32, #tpu.memory_space<vmem>>, vector<256x4xf32>
    tpu.vector_store %arg9[%c0_70, %c32], %44 {strides = array<i32>} : memref<256x36xf32, #tpu.memory_space<vmem>>, vector<256x4xf32>,
    %c0_71 = arith.constant 0 : index
    %c0_72 = arith.constant 0 : index
    %46 = vector.load %arg9[%c0_71, %c0_72] : memref<256x36xf32, #tpu.memory_space<vmem>>, vector<256x36xf32>
    %c0_73 = arith.constant 0 : index
    %c0_74 = arith.constant 0 : index
    %47 = vector.load %arg2[%c0_73, %c0_74] : memref<36x8xf32, #tpu.memory_space<vmem>>, vector<36x8xf32>
    %cst_75 = arith.constant dense<0.000000e+00> : vector<256x8xf32>
    %48 = tpu.matmul %46, %47, %cst_75 {dimension_numbers = #tpu.dot_dimension_numbers<[1], [0], [0], [1], [0, 0, 1, 1], [], []>} : vector<256x36xf32>, vector<36x8xf32>, vector<256x8xf32> -> vector<256x8xf32>
    %c0_76 = arith.constant 0 : index
    %c0_77 = arith.constant 0 : index
    %49 = vector.load %arg3[%c0_76, %c0_77] : memref<1x8xf32, #tpu.memory_space<vmem>>, vector<1x8xf32>
    %50 = vector.broadcast %49 : vector<1x8xf32> to vector<256x8xf32>
    %51 = arith.addf %48, %50 : vector<256x8xf32>
    %cst_78 = arith.constant 0.000000e+00 : f32
    %52 = vector.broadcast %cst_78 : f32 to vector<256x8xf32>
    %53 = arith.maximumf %51, %52 : vector<256x8xf32>
    %54 = vector.shape_cast %53 : vector<256x8xf32> to vector<16x16x8xf32>
    %c1_79 = arith.constant 1 : index
    %c1_80 = arith.constant 1 : index
    %c0_81 = arith.constant 0 : index
    %55 = vector.load %arg8[%c1_79, %c1_80, %c0_81] : memref<18x18x8xf32, #tpu.memory_space<vmem>>, vector<16x16x8xf32>
    tpu.vector_store %arg8[%c1_79, %c1_80, %c0_81], %54 {strides = array<i32>} : memref<18x18x8xf32, #tpu.memory_space<vmem>>, vector<16x16x8xf32>,
    %c0_82 = arith.constant 0 : index
    %c0_83 = arith.constant 0 : index
    %c0_84 = arith.constant 0 : index
    %56 = vector.load %arg8[%c0_82, %c0_83, %c0_84] : memref<18x18x8xf32, #tpu.memory_space<vmem>>, vector<16x16x8xf32>
    %57 = vector.shape_cast %56 : vector<16x16x8xf32> to vector<256x8xf32>
    %c0_85 = arith.constant 0 : index
    %c0_86 = arith.constant 0 : index
    %58 = vector.load %arg10[%c0_85, %c0_86] : memref<256x72xf32, #tpu.memory_space<vmem>>, vector<256x8xf32>
    tpu.vector_store %arg10[%c0_85, %c0_86], %57 {strides = array<i32>} : memref<256x72xf32, #tpu.memory_space<vmem>>, vector<256x8xf32>,
    %c0_87 = arith.constant 0 : index
    %c1_88 = arith.constant 1 : index
    %c0_89 = arith.constant 0 : index
    %59 = vector.load %arg8[%c0_87, %c1_88, %c0_89] : memref<18x18x8xf32, #tpu.memory_space<vmem>>, vector<16x16x8xf32>
    %60 = vector.shape_cast %59 : vector<16x16x8xf32> to vector<256x8xf32>
    %c0_90 = arith.constant 0 : index
    %c8_91 = arith.constant 8 : index
    %61 = vector.load %arg10[%c0_90, %c8_91] : memref<256x72xf32, #tpu.memory_space<vmem>>, vector<256x8xf32>
    tpu.vector_store %arg10[%c0_90, %c8_91], %60 {strides = array<i32>} : memref<256x72xf32, #tpu.memory_space<vmem>>, vector<256x8xf32>,
    %c0_92 = arith.constant 0 : index
    %c2_93 = arith.constant 2 : index
    %c0_94 = arith.constant 0 : index
    %62 = vector.load %arg8[%c0_92, %c2_93, %c0_94] : memref<18x18x8xf32, #tpu.memory_space<vmem>>, vector<16x16x8xf32>
    %63 = vector.shape_cast %62 : vector<16x16x8xf32> to vector<256x8xf32>
    %c0_95 = arith.constant 0 : index
    %c16_96 = arith.constant 16 : index
    %64 = vector.load %arg10[%c0_95, %c16_96] : memref<256x72xf32, #tpu.memory_space<vmem>>, vector<256x8xf32>
    tpu.vector_store %arg10[%c0_95, %c16_96], %63 {strides = array<i32>} : memref<256x72xf32, #tpu.memory_space<vmem>>, vector<256x8xf32>,
    %c1_97 = arith.constant 1 : index
    %c0_98 = arith.constant 0 : index
    %c0_99 = arith.constant 0 : index
    %65 = vector.load %arg8[%c1_97, %c0_98, %c0_99] : memref<18x18x8xf32, #tpu.memory_space<vmem>>, vector<16x16x8xf32>
    %66 = vector.shape_cast %65 : vector<16x16x8xf32> to vector<256x8xf32>
    %c0_100 = arith.constant 0 : index
    %c24_101 = arith.constant 24 : index
    %67 = vector.load %arg10[%c0_100, %c24_101] : memref<256x72xf32, #tpu.memory_space<vmem>>, vector<256x8xf32>
    tpu.vector_store %arg10[%c0_100, %c24_101], %66 {strides = array<i32>} : memref<256x72xf32, #tpu.memory_space<vmem>>, vector<256x8xf32>,
    %c1_102 = arith.constant 1 : index
    %c1_103 = arith.constant 1 : index
    %c0_104 = arith.constant 0 : index
    %68 = vector.load %arg8[%c1_102, %c1_103, %c0_104] : memref<18x18x8xf32, #tpu.memory_space<vmem>>, vector<16x16x8xf32>
    %69 = vector.shape_cast %68 : vector<16x16x8xf32> to vector<256x8xf32>
    %c0_105 = arith.constant 0 : index
    %c32_106 = arith.constant 32 : index
    %70 = vector.load %arg10[%c0_105, %c32_106] : memref<256x72xf32, #tpu.memory_space<vmem>>, vector<256x8xf32>
    tpu.vector_store %arg10[%c0_105, %c32_106], %69 {strides = array<i32>} : memref<256x72xf32, #tpu.memory_space<vmem>>, vector<256x8xf32>,
    %c1_107 = arith.constant 1 : index
    %c2_108 = arith.constant 2 : index
    %c0_109 = arith.constant 0 : index
    %71 = vector.load %arg8[%c1_107, %c2_108, %c0_109] : memref<18x18x8xf32, #tpu.memory_space<vmem>>, vector<16x16x8xf32>
    %72 = vector.shape_cast %71 : vector<16x16x8xf32> to vector<256x8xf32>
    %c0_110 = arith.constant 0 : index
    %c40 = arith.constant 40 : index
    %73 = vector.load %arg10[%c0_110, %c40] : memref<256x72xf32, #tpu.memory_space<vmem>>, vector<256x8xf32>
    tpu.vector_store %arg10[%c0_110, %c40], %72 {strides = array<i32>} : memref<256x72xf32, #tpu.memory_space<vmem>>, vector<256x8xf32>,
    %c2_111 = arith.constant 2 : index
    %c0_112 = arith.constant 0 : index
    %c0_113 = arith.constant 0 : index
    %74 = vector.load %arg8[%c2_111, %c0_112, %c0_113] : memref<18x18x8xf32, #tpu.memory_space<vmem>>, vector<16x16x8xf32>
    %75 = vector.shape_cast %74 : vector<16x16x8xf32> to vector<256x8xf32>
    %c0_114 = arith.constant 0 : index
    %c48 = arith.constant 48 : index
    %76 = vector.load %arg10[%c0_114, %c48] : memref<256x72xf32, #tpu.memory_space<vmem>>, vector<256x8xf32>
    tpu.vector_store %arg10[%c0_114, %c48], %75 {strides = array<i32>} : memref<256x72xf32, #tpu.memory_space<vmem>>, vector<256x8xf32>,
    %c2_115 = arith.constant 2 : index
    %c1_116 = arith.constant 1 : index
    %c0_117 = arith.constant 0 : index
    %77 = vector.load %arg8[%c2_115, %c1_116, %c0_117] : memref<18x18x8xf32, #tpu.memory_space<vmem>>, vector<16x16x8xf32>
    %78 = vector.shape_cast %77 : vector<16x16x8xf32> to vector<256x8xf32>
    %c0_118 = arith.constant 0 : index
    %c56 = arith.constant 56 : index
    %79 = vector.load %arg10[%c0_118, %c56] : memref<256x72xf32, #tpu.memory_space<vmem>>, vector<256x8xf32>
    tpu.vector_store %arg10[%c0_118, %c56], %78 {strides = array<i32>} : memref<256x72xf32, #tpu.memory_space<vmem>>, vector<256x8xf32>,
    %c2_119 = arith.constant 2 : index
    %c2_120 = arith.constant 2 : index
    %c0_121 = arith.constant 0 : index
    %80 = vector.load %arg8[%c2_119, %c2_120, %c0_121] : memref<18x18x8xf32, #tpu.memory_space<vmem>>, vector<16x16x8xf32>
    %81 = vector.shape_cast %80 : vector<16x16x8xf32> to vector<256x8xf32>
    %c0_122 = arith.constant 0 : index
    %c64 = arith.constant 64 : index
    %82 = vector.load %arg10[%c0_122, %c64] : memref<256x72xf32, #tpu.memory_space<vmem>>, vector<256x8xf32>
    tpu.vector_store %arg10[%c0_122, %c64], %81 {strides = array<i32>} : memref<256x72xf32, #tpu.memory_space<vmem>>, vector<256x8xf32>,
    %c0_123 = arith.constant 0 : index
    %c0_124 = arith.constant 0 : index
    %83 = vector.load %arg10[%c0_123, %c0_124] : memref<256x72xf32, #tpu.memory_space<vmem>>, vector<256x72xf32>
    %c0_125 = arith.constant 0 : index
    %c0_126 = arith.constant 0 : index
    %84 = vector.load %arg4[%c0_125, %c0_126] : memref<72x8xf32, #tpu.memory_space<vmem>>, vector<72x8xf32>
    %cst_127 = arith.constant dense<0.000000e+00> : vector<256x8xf32>
    %85 = tpu.matmul %83, %84, %cst_127 {dimension_numbers = #tpu.dot_dimension_numbers<[1], [0], [0], [1], [0, 0, 1, 1], [], []>} : vector<256x72xf32>, vector<72x8xf32>, vector<256x8xf32> -> vector<256x8xf32>
    %c0_128 = arith.constant 0 : index
    %c0_129 = arith.constant 0 : index
    %86 = vector.load %arg5[%c0_128, %c0_129] : memref<1x8xf32, #tpu.memory_space<vmem>>, vector<1x8xf32>
    %87 = vector.broadcast %86 : vector<1x8xf32> to vector<256x8xf32>
    %88 = arith.addf %85, %87 : vector<256x8xf32>
    %c0_130 = arith.constant 0 : index
    %c0_131 = arith.constant 0 : index
    %c0_132 = arith.constant 0 : index
    %89 = vector.load %arg6[%c0_130, %c0_131, %c0_132] : memref<1x256x8xf32, #tpu.memory_space<vmem>>, vector<1x256x8xf32>
    %90 = vector.shape_cast %89 : vector<1x256x8xf32> to vector<256x8xf32>
    %91 = vector.shape_cast %88 : vector<256x8xf32> to vector<1x256x8xf32>
    tpu.vector_store %arg6[%c0_130, %c0_131, %c0_132], %91 {strides = array<i32>} : memref<1x256x8xf32, #tpu.memory_space<vmem>>, vector<1x256x8xf32>,
    return
  }
  func.func @transform_0(%arg0: i32) -> (i32, i32, i32, i32) {
    %c0_i32 = arith.constant 0 : i32
    %c0_i32_0 = arith.constant 0 : i32
    %c0_i32_1 = arith.constant 0 : i32
    %c0_i32_2 = arith.constant 0 : i32
    return %arg0, %c0_i32, %c0_i32_0, %c0_i32_1 : i32, i32, i32, i32
  }
  func.func @transform_1(%arg0: i32) -> (i32, i32) {
    %c0_i32 = arith.constant 0 : i32
    %c0_i32_0 = arith.constant 0 : i32
    %c0_i32_1 = arith.constant 0 : i32
    return %c0_i32, %c0_i32_0 : i32, i32
  }
  func.func @transform_2(%arg0: i32) -> (i32, i32) {
    %c0_i32 = arith.constant 0 : i32
    %c0_i32_0 = arith.constant 0 : i32
    %c0_i32_1 = arith.constant 0 : i32
    return %c0_i32, %c0_i32_0 : i32, i32
  }
  func.func @transform_3(%arg0: i32) -> (i32, i32) {
    %c0_i32 = arith.constant 0 : i32
    %c0_i32_0 = arith.constant 0 : i32
    %c0_i32_1 = arith.constant 0 : i32
    return %c0_i32, %c0_i32_0 : i32, i32
  }
  func.func @transform_4(%arg0: i32) -> (i32, i32) {
    %c0_i32 = arith.constant 0 : i32
    %c0_i32_0 = arith.constant 0 : i32
    %c0_i32_1 = arith.constant 0 : i32
    return %c0_i32, %c0_i32_0 : i32, i32
  }
  func.func @transform_5(%arg0: i32) -> (i32, i32, i32) {
    %c0_i32 = arith.constant 0 : i32
    %c0_i32_0 = arith.constant 0 : i32
    %c0_i32_1 = arith.constant 0 : i32
    return %arg0, %c0_i32, %c0_i32_0 : i32, i32, i32
  }
}

</mosaic_0001>

<llo_original>
// kernel: hor_block_forward.1
$region0: #{hor_block_forward.1}
  #allocation0 [shape = 'u32[]', space=smem, size = 0x4, offset = 0x4, fixed_abs, tag = 'smem constant byte address 0x4 - core index']
  #allocation1 [shape = 'u32[144,128]{1,0:T(1,128)}', space=vmem, size = 0x12000, scoped, tag = 'internal scratch']
  #allocation2 [shape = 'f32[18,18,4]{2,1,0:T(8,128)}', space=vmem, size = 0x36000, scoped, tag = 'scratch operand']
  #allocation3 [shape = 'f32[18,18,8]{2,1,0:T(8,128)}', space=vmem, size = 0x36000, scoped, tag = 'scratch operand']
  #allocation4 [shape = 'f32[256,36]{1,0:T(8,128)}', space=vmem, size = 0x20000, scoped, tag = 'scratch operand']
  #allocation5 [shape = 'f32[256,72]{1,0:T(8,128)}', space=vmem, size = 0x20000, scoped, tag = 'scratch operand']
  %s0 = inlined_call_operand.vmem [shape: f32[2,16,16,4], index: 0, kind: input, shape index: {}]
  %s1 = inlined_call_operand.vmem [shape: f32[36,8], index: 1, kind: input, shape index: {}]
  %s2 = inlined_call_operand.vmem [shape: f32[1,8], index: 2, kind: input, shape index: {}]
  %s3 = inlined_call_operand.vmem [shape: f32[72,8], index: 3, kind: input, shape index: {}]
  %s4 = inlined_call_operand.vmem [shape: f32[1,8], index: 4, kind: input, shape index: {}]
  %s5 = inlined_call_operand.vmem [shape: f32[2,256,8], index: 5, kind: output, shape index: {}]
  %s6 = sld [smem:[#allocation0]]
  $region53: #{hor_block_forward.1} parent=0
    _
  %s8 = ssub.s32 1, %s6
  %s9 = scalar_select 0, %s8, %s6
  loop: start=0, step=1, limit=4
  $region2: #{hor_block_forward.1} parent=0 // loop_pre_header
    _
  $region3: #{hor_block_forward.1} parent=0 // loop_header
    %s11 = sphi 0, %s15
    %p12 = scmp.ge.s32.totalorder %s11, 4
    %s21 = sphi 0, %s23
    %s24 = sphi 0, %s21
    %s25 = sphi 0, %s24
    %s41 = sphi 0, %s25
    %s45 = sphi 0, %s45
    %s47 = sphi 0, %s45
    %s48 = sphi 0, %s47
    %s62 = sphi 0, %s48
    %s66 = sphi 0, %s66
    %s68 = sphi 0, %s66
    %s69 = sphi 0, %s68
    %s83 = sphi 0, %s69
    %s87 = sphi 0, %s87
    %s89 = sphi 0, %s87
    %s90 = sphi 0, %s89
    %s104 = sphi 0, %s90
    %s108 = sphi 0, %s108
    %s110 = sphi 0, %s108
    %s111 = sphi 0, %s110
    %s125 = sphi 0, %s111
    %s131 = sphi 0, %s133
    %s134 = sphi 0, %s131
    %s135 = sphi 0, %s134
    %s151 = sphi 0, %s135
  $region4: #{hor_block_forward.1} parent=0 // loop_header_branch
    %14 = sbr.rel (%p12) target = $region8
  $region5: #{hor_block_forward.1} parent=0 // loop_body
    %s16 = ssub.s32 %s11, 1
    %s17 = ssub.s32 %s11, 2
    %s18 = sadd.s32 %s11, 1
    %s19 = ssub.s32 %s11, %s18
    %p20 = scmp.eq.s32.totalorder %s19, 0
    %s22 = sadd.s32 %s21, 1
    %s23 = scalar_select %p20, %s21, %s22
    %p26 = pneg %p20
    %p27 = scmp.eq.s32.totalorder %s11, 1
    %p28 = por %p26, %p27
    %p29 = scmp.ne.s32.totalorder %s21, %s24
    %p30 = scmp.eq.s32.totalorder %s11, 0
    %p31 = por %p29, %p30
    %p32 = scmp.ne.s32.totalorder %s21, %s24
    %p33 = scmp.eq.s32.totalorder %s16, 1
    %p34 = por %p32, %p33
    %p35 = scmp.ne.s32.totalorder %s24, %s25
    %p36 = scmp.eq.s32.totalorder %s16, 0
    %p37 = por %p35, %p36
    %p38 = scmp.ne.s32.totalorder %s24, %s25
    %p39 = scmp.eq.s32.totalorder %s17, 1
    %p40 = por %p38, %p39
    %p42 = scmp.ne.s32.totalorder %s25, %s41
    %p43 = scmp.eq.s32.totalorder %s17, 0
    %p44 = por %p42, %p43
    %s46 = sadd.s32 %s45, 1
    %p49 = scmp.eq.s32.totalorder %s11, 1
    %p50 = scmp.ne.s32.totalorder %s45, %s47
    %p51 = scmp.eq.s32.totalorder %s11, 0
    %p52 = por %p50, %p51
    %p53 = scmp.ne.s32.totalorder %s45, %s47
    %p54 = scmp.eq.s32.totalorder %s16, 1
    %p55 = por %p53, %p54
    %p56 = scmp.ne.s32.totalorder %s47, %s48
    %p57 = scmp.eq.s32.totalorder %s16, 0
    %p58 = por %p56, %p57
    %p59 = scmp.ne.s32.totalorder %s47, %s48
    %p60 = scmp.eq.s32.totalorder %s17, 1
    %p61 = por %p59, %p60
    %p63 = scmp.ne.s32.totalorder %s48, %s62
    %p64 = scmp.eq.s32.totalorder %s17, 0
    %p65 = por %p63, %p64
    %s67 = sadd.s32 %s66, 1
    %p70 = scmp.eq.s32.totalorder %s11, 1
    %p71 = scmp.ne.s32.totalorder %s66, %s68
    %p72 = scmp.eq.s32.totalorder %s11, 0
    %p73 = por %p71, %p72
    %p74 = scmp.ne.s32.totalorder %s66, %s68
    %p75 = scmp.eq.s32.totalorder %s16, 1
    %p76 = por %p74, %p75
    %p77 = scmp.ne.s32.totalorder %s68, %s69
    %p78 = scmp.eq.s32.totalorder %s16, 0
    %p79 = por %p77, %p78
    %p80 = scmp.ne.s32.totalorder %s68, %s69
    %p81 = scmp.eq.s32.totalorder %s17, 1
    %p82 = por %p80, %p81
    %p84 = scmp.ne.s32.totalorder %s69, %s83
    %p85 = scmp.eq.s32.totalorder %s17, 0
    %p86 = por %p84, %p85
    %s88 = sadd.s32 %s87, 1
    %p91 = scmp.eq.s32.totalorder %s11, 1
    %p92 = scmp.ne.s32.totalorder %s87, %s89
    %p93 = scmp.eq.s32.totalorder %s11, 0
    %p94 = por %p92, %p93
    %p95 = scmp.ne.s32.totalorder %s87, %s89
    %p96 = scmp.eq.s32.totalorder %s16, 1
    %p97 = por %p95, %p96
    %p98 = scmp.ne.s32.totalorder %s89, %s90
    %p99 = scmp.eq.s32.totalorder %s16, 0
    %p100 = por %p98, %p99
    %p101 = scmp.ne.s32.totalorder %s89, %s90
    %p102 = scmp.eq.s32.totalorder %s17, 1
    %p103 = por %p101, %p102
    %p105 = scmp.ne.s32.totalorder %s90, %s104
    %p106 = scmp.eq.s32.totalorder %s17, 0
    %p107 = por %p105, %p106
    %s109 = sadd.s32 %s108, 1
    %p112 = scmp.eq.s32.totalorder %s11, 1
    %p113 = scmp.ne.s32.totalorder %s108, %s110
    %p114 = scmp.eq.s32.totalorder %s11, 0
    %p115 = por %p113, %p114
    %p116 = scmp.ne.s32.totalorder %s108, %s110
    %p117 = scmp.eq.s32.totalorder %s16, 1
    %p118 = por %p116, %p117
    %p119 = scmp.ne.s32.totalorder %s110, %s111
    %p120 = scmp.eq.s32.totalorder %s16, 0
    %p121 = por %p119, %p120
    %p122 = scmp.ne.s32.totalorder %s110, %s111
    %p123 = scmp.eq.s32.totalorder %s17, 1
    %p124 = por %p122, %p123
    %p126 = scmp.ne.s32.totalorder %s111, %s125
    %p127 = scmp.eq.s32.totalorder %s17, 0
    %p128 = por %p126, %p127
    %s129 = ssub.s32 %s11, %s18
    %p130 = scmp.eq.s32.totalorder %s129, 0
    %s132 = sadd.s32 %s131, 1
    %s133 = scalar_select %p130, %s131, %s132
    %p136 = pneg %p130
    %p137 = scmp.eq.s32.totalorder %s11, 1
    %p138 = por %p136, %p137
    %p139 = scmp.ne.s32.totalorder %s131, %s134
    %p140 = scmp.eq.s32.totalorder %s11, 0
    %p141 = por %p139, %p140
    %p142 = scmp.ne.s32.totalorder %s131, %s134
    %p143 = scmp.eq.s32.totalorder %s16, 1
    %p144 = por %p142, %p143
    %p145 = scmp.ne.s32.totalorder %s134, %s135
    %p146 = scmp.eq.s32.totalorder %s16, 0
    %p147 = por %p145, %p146
    %p148 = scmp.ne.s32.totalorder %s134, %s135
    %p149 = scmp.eq.s32.totalorder %s17, 1
    %p150 = por %p148, %p149
    %p152 = scmp.ne.s32.totalorder %s135, %s151
    %p153 = scmp.eq.s32.totalorder %s17, 0
    %p154 = por %p152, %p153
    %p155 = scmp.le.s32.totalorder 1, %s11
    %p156 = scmp.lt.s32.totalorder %s11, 3
    %p157 = pnand %p155, %p156
    %p158 = pneg %p157
    // Predicated region
    $region9: #{hor_block_forward.1} parent=5 // pred_check
      _
    $region10: #{hor_block_forward.1} parent=5 // pred_check_branch
      %160 = sbr.rel (%p157) target = $region12
    $region11: #{hor_block_forward.1} parent=5 // pred_region
      %s161 = ssub.s32 %s11, 1
      // Predicated region
      $region13: #{hor_block_forward.1} parent=11 // pred_check
        %p162 = pneg %p58
      $region14: #{hor_block_forward.1} parent=11 // pred_check_branch
        %164 = sbr.rel (%p162) target = $region16
      $region15: #{hor_block_forward.1} parent=11 // pred_region
        _
      $region16: #{hor_block_forward.1} parent=11 // pred_fallthru
        _
      // Predicated region
      $region17: #{hor_block_forward.1} parent=11 // pred_check
        %p165 = pneg %p79
      $region18: #{hor_block_forward.1} parent=11 // pred_check_branch
        %167 = sbr.rel (%p165) target = $region20
      $region19: #{hor_block_forward.1} parent=11 // pred_region
        _
      $region20: #{hor_block_forward.1} parent=11 // pred_fallthru
        _
      // Predicated region
      $region21: #{hor_block_forward.1} parent=11 // pred_check
        %p168 = pneg %p100
      $region22: #{hor_block_forward.1} parent=11 // pred_check_branch
        %170 = sbr.rel (%p168) target = $region24
      $region23: #{hor_block_forward.1} parent=11 // pred_region
        _
      $region24: #{hor_block_forward.1} parent=11 // pred_fallthru
        _
      // Predicated region
      $region25: #{hor_block_forward.1} parent=11 // pred_check
        %p171 = pneg %p121
      $region26: #{hor_block_forward.1} parent=11 // pred_check_branch
        %173 = sbr.rel (%p171) target = $region28
      $region27: #{hor_block_forward.1} parent=11 // pred_region
        _
      $region28: #{hor_block_forward.1} parent=11 // pred_fallthru
        _
    $region12: #{hor_block_forward.1} parent=5 // pred_fallthru
      _
    %p174 = scmp.lt.s32.totalorder %s11, 2
    // Predicated region
    $region29: #{hor_block_forward.1} parent=5 // pred_check
      %p175 = pneg %p174
    $region30: #{hor_block_forward.1} parent=5 // pred_check_branch
      %177 = sbr.rel (%p175) target = $region32
    $region31: #{hor_block_forward.1} parent=5 // pred_region
      // Predicated region
      $region33: #{hor_block_forward.1} parent=31 // pred_check
        %p178 = pneg %p31
      $region34: #{hor_block_forward.1} parent=31 // pred_check_branch
        %180 = sbr.rel (%p178) target = $region36
      $region35: #{hor_block_forward.1} parent=31 // pred_region
        %p181 = scmp.lt.s32.totalorder %s11, 1
        %s182 = scalar_select %p181, %s11, 1
        %s183 = smul.addr %s182, 32
        %s184 = smul.addr %s183, 8
        %s185 = scalar_lea.vmem %s0, %s184
      $region36: #{hor_block_forward.1} parent=31 // pred_fallthru
        _
    $region32: #{hor_block_forward.1} parent=5 // pred_fallthru
      _
    %p186 = scmp.le.s32.totalorder 1, %s11
    %p187 = scmp.lt.s32.totalorder %s11, 3
    %p188 = pnand %p186, %p187
    %p189 = pneg %p188
    // Predicated region
    $region37: #{hor_block_forward.1} parent=5 // pred_check
      _
    $region38: #{hor_block_forward.1} parent=5 // pred_check_branch
      %191 = sbr.rel (%p188) target = $region40
    $region39: #{hor_block_forward.1} parent=5 // pred_region
      %s192 = ssub.s32 %s11, 1
      %p193 = scmp.lt.s32.totalorder %s16, 1
      %s194 = scalar_select %p193, %s16, 1
      %s195 = smul.addr %s194, 32
      %s196 = smul.addr %s195, 8
      %s197 = scalar_lea.vmem %s0, %s196
      %p198 = pneg %p37
      %p199 = pneg %p34
      %p200 = pneg %p58
      %p201 = pneg %p55
      %p202 = pneg %p79
      %p203 = pneg %p76
      %p204 = pneg %p100
      %p205 = pneg %p97
      %p206 = pneg %p121
      %p207 = pneg %p118
      %p208 = pneg %p147
      %p209 = pneg %p144
      %p210 = scmp.lt.s32.totalorder %s16, 1
      %s211 = scalar_select %p210, %s16, 1
      %s212 = smul.addr %s211, 32
      %s213 = smul.addr %s212, 8
      %s214 = scalar_lea.vmem %s5, %s213
      %p215 = scmp.lt.s32.totalorder %s16, 1
      %s216 = scalar_select %p215, %s16, 1
      %s217 = smul.addr %s216, 32
      %s218 = smul.addr %s217, 8
      %s219 = scalar_lea.vmem %s0, %s218
      %p220 = scmp.lt.s32.totalorder %s16, 1
      %s221 = scalar_select %p220, %s16, 1
      %s222 = smul.addr %s221, 32
      %s223 = smul.addr %s222, 8
      %s224 = scalar_lea.vmem %s5, %s223
      %vm225 = vcmask 31744
      %226 = vst.msk [vmem:[#allocation2] sm:$0xff] %vm225, 0.0
      %227 = vst.msk [vmem:[#allocation2 + $0x8] sm:$0xff] %vm225, 0.0
      %vm228 = vcmask 25600
      %229 = vst.msk [vmem:[#allocation2 + $0x10] sm:$0x3] %vm228, 0.0
      %s230 = scalar_lea.vmem [#allocation2], 408
      %231 = vst.msk [vmem:[%s230] sm:$0xff] %vm225, 0.0
      %232 = vst.msk [vmem:[%s230 + $0x8] sm:$0xff] %vm225, 0.0
      %233 = vst.msk [vmem:[%s230 + $0x10] sm:$0x3] %vm228, 0.0
      %vm234 = vcmask 24576
      %235 = vst.msk [vmem:[#allocation2] sm:$0x1] %vm234, 0.0
      %236 = vst.msk [vmem:[#allocation2 + $0x18] sm:$0x1] %vm234, 0.0
      %237 = vst.msk [vmem:[#allocation2 + $0x30] sm:$0x1] %vm234, 0.0
      %238 = vst.msk [vmem:[#allocation2 + $0x48] sm:$0x1] %vm234, 0.0
      %239 = vst.msk [vmem:[#allocation2 + $0x60] sm:$0x1] %vm234, 0.0
      %240 = vst.msk [vmem:[#allocation2 + $0x78] sm:$0x1] %vm234, 0.0
      %241 = vst.msk [vmem:[#allocation2 + $0x90] sm:$0x1] %vm234, 0.0
      %242 = vst.msk [vmem:[#allocation2 + $0xa8] sm:$0x1] %vm234, 0.0
      %243 = vst.msk [vmem:[#allocation2 + $0xc0] sm:$0x1] %vm234, 0.0
      %244 = vst.msk [vmem:[#allocation2 + $0xd8] sm:$0x1] %vm234, 0.0
      %245 = vst.msk [vmem:[#allocation2 + $0xf0] sm:$0x1] %vm234, 0.0
      %246 = vst.msk [vmem:[#allocation2 + $0x108] sm:$0x1] %vm234, 0.0
      %247 = vst.msk [vmem:[#allocation2 + $0x120] sm:$0x1] %vm234, 0.0
      %248 = vst.msk [vmem:[#allocation2 + $0x138] sm:$0x1] %vm234, 0.0
      %249 = vst.msk [vmem:[#allocation2 + $0x150] sm:$0x1] %vm234, 0.0
      %250 = vst.msk [vmem:[#allocation2 + $0x168] sm:$0x1] %vm234, 0.0
      %251 = vst.msk [vmem:[#allocation2 + $0x180] sm:$0x1] %vm234, 0.0
      %252 = vst.msk [vmem:[#allocation2 + $0x198] sm:$0x1] %vm234, 0.0
      %253 = vst.msk [vmem:[#allocation2 + $0x11] sm:$0x1] %vm234, 0.0
      %254 = vst.msk [vmem:[#allocation2 + $0x29] sm:$0x1] %vm234, 0.0
      %255 = vst.msk [vmem:[#allocation2 + $0x41] sm:$0x1] %vm234, 0.0
      %256 = vst.msk [vmem:[#allocation2 + $0x59] sm:$0x1] %vm234, 0.0
      %257 = vst.msk [vmem:[#allocation2 + $0x71] sm:$0x1] %vm234, 0.0
      %258 = vst.msk [vmem:[#allocation2 + $0x89] sm:$0x1] %vm234, 0.0
      %259 = vst.msk [vmem:[#allocation2 + $0xa1] sm:$0x1] %vm234, 0.0
      %260 = vst.msk [vmem:[#allocation2 + $0xb9] sm:$0x1] %vm234, 0.0
      %261 = vst.msk [vmem:[#allocation2 + $0xd1] sm:$0x1] %vm234, 0.0
      %262 = vst.msk [vmem:[#allocation2 + $0xe9] sm:$0x1] %vm234, 0.0
      %263 = vst.msk [vmem:[#allocation2 + $0x101] sm:$0x1] %vm234, 0.0
      %264 = vst.msk [vmem:[#allocation2 + $0x119] sm:$0x1] %vm234, 0.0
      %265 = vst.msk [vmem:[#allocation2 + $0x131] sm:$0x1] %vm234, 0.0
      %266 = vst.msk [vmem:[#allocation2 + $0x149] sm:$0x1] %vm234, 0.0
      %267 = vst.msk [vmem:[#allocation2 + $0x161] sm:$0x1] %vm234, 0.0
      %268 = vst.msk [vmem:[#allocation2 + $0x179] sm:$0x1] %vm234, 0.0
      %269 = vst.msk [vmem:[#allocation2 + $0x191] sm:$0x1] %vm234, 0.0
      %270 = vst.msk [vmem:[#allocation2 + $0x1a9] sm:$0x1] %vm234, 0.0
      %vm271 = vcmask 64512
      %272 = vst.msk [vmem:[#allocation3] sm:$0xff] %vm271, 0.0
      %273 = vst.msk [vmem:[#allocation3 + $0x8] sm:$0xff] %vm271, 0.0
      %vm274 = vcmask 58368
      %275 = vst.msk [vmem:[#allocation3 + $0x10] sm:$0x3] %vm274, 0.0
      %s276 = scalar_lea.vmem [#allocation3], 408
      %277 = vst.msk [vmem:[%s276] sm:$0xff] %vm271, 0.0
      %278 = vst.msk [vmem:[%s276 + $0x8] sm:$0xff] %vm271, 0.0
      %279 = vst.msk [vmem:[%s276 + $0x10] sm:$0x3] %vm274, 0.0
      %vm280 = vcmask 57344
      %281 = vst.msk [vmem:[#allocation3] sm:$0x1] %vm280, 0.0
      %282 = vst.msk [vmem:[#allocation3 + $0x18] sm:$0x1] %vm280, 0.0
      %283 = vst.msk [vmem:[#allocation3 + $0x30] sm:$0x1] %vm280, 0.0
      %284 = vst.msk [vmem:[#allocation3 + $0x48] sm:$0x1] %vm280, 0.0
      %285 = vst.msk [vmem:[#allocation3 + $0x60] sm:$0x1] %vm280, 0.0
      %286 = vst.msk [vmem:[#allocation3 + $0x78] sm:$0x1] %vm280, 0.0
      %287 = vst.msk [vmem:[#allocation3 + $0x90] sm:$0x1] %vm280, 0.0
      %288 = vst.msk [vmem:[#allocation3 + $0xa8] sm:$0x1] %vm280, 0.0
      %289 = vst.msk [vmem:[#allocation3 + $0xc0] sm:$0x1] %vm280, 0.0
      %290 = vst.msk [vmem:[#allocation3 + $0xd8] sm:$0x1] %vm280, 0.0
      %291 = vst.msk [vmem:[#allocation3 + $0xf0] sm:$0x1] %vm280, 0.0
      %292 = vst.msk [vmem:[#allocation3 + $0x108] sm:$0x1] %vm280, 0.0
      %293 = vst.msk [vmem:[#allocation3 + $0x120] sm:$0x1] %vm280, 0.0
      %294 = vst.msk [vmem:[#allocation3 + $0x138] sm:$0x1] %vm280, 0.0
      %295 = vst.msk [vmem:[#allocation3 + $0x150] sm:$0x1] %vm280, 0.0
      %296 = vst.msk [vmem:[#allocation3 + $0x168] sm:$0x1] %vm280, 0.0
      %297 = vst.msk [vmem:[#allocation3 + $0x180] sm:$0x1] %vm280, 0.0
      %298 = vst.msk [vmem:[#allocation3 + $0x198] sm:$0x1] %vm280, 0.0
      %299 = vst.msk [vmem:[#allocation3 + $0x11] sm:$0x1] %vm280, 0.0
      %300 = vst.msk [vmem:[#allocation3 + $0x29] sm:$0x1] %vm280, 0.0
      %301 = vst.msk [vmem:[#allocation3 + $0x41] sm:$0x1] %vm280, 0.0
      %302 = vst.msk [vmem:[#allocation3 + $0x59] sm:$0x1] %vm280, 0.0
      %303 = vst.msk [vmem:[#allocation3 + $0x71] sm:$0x1] %vm280, 0.0
      %304 = vst.msk [vmem:[#allocation3 + $0x89] sm:$0x1] %vm280, 0.0
      %305 = vst.msk [vmem:[#allocation3 + $0xa1] sm:$0x1] %vm280, 0.0
      %306 = vst.msk [vmem:[#allocation3 + $0xb9] sm:$0x1] %vm280, 0.0
      %307 = vst.msk [vmem:[#allocation3 + $0xd1] sm:$0x1] %vm280, 0.0
      %308 = vst.msk [vmem:[#allocation3 + $0xe9] sm:$0x1] %vm280, 0.0
      %309 = vst.msk [vmem:[#allocation3 + $0x101] sm:$0x1] %vm280, 0.0
      %310 = vst.msk [vmem:[#allocation3 + $0x119] sm:$0x1] %vm280, 0.0
      %311 = vst.msk [vmem:[#allocation3 + $0x131] sm:$0x1] %vm280, 0.0
      %312 = vst.msk [vmem:[#allocation3 + $0x149] sm:$0x1] %vm280, 0.0
      %313 = vst.msk [vmem:[#allocation3 + $0x161] sm:$0x1] %vm280, 0.0
      %314 = vst.msk [vmem:[#allocation3 + $0x179] sm:$0x1] %vm280, 0.0
      %315 = vst.msk [vmem:[#allocation3 + $0x191] sm:$0x1] %vm280, 0.0
      %316 = vst.msk [vmem:[#allocation3 + $0x1a9] sm:$0x1] %vm280, 0.0
      %v317 = vld [vmem:[%s219] sm:$0xff]
      %v318 = vld [vmem:[%s219 + $0x8] sm:$0xff]
      %v319 = vld [vmem:[%s219 + $0x10] sm:$0xff]
      %v320 = vld [vmem:[%s219 + $0x18] sm:$0xff]
      %v321 = vld [vmem:[%s219 + $0x20] sm:$0xff]
      %v322 = vld [vmem:[%s219 + $0x28] sm:$0xff]
      %v323 = vld [vmem:[%s219 + $0x30] sm:$0xff]
      %v324 = vld [vmem:[%s219 + $0x38] sm:$0xff]
      %v325 = vld [vmem:[%s219 + $0x40] sm:$0xff]
      %v326 = vld [vmem:[%s219 + $0x48] sm:$0xff]
      %v327 = vld [vmem:[%s219 + $0x50] sm:$0xff]
      %v328 = vld [vmem:[%s219 + $0x58] sm:$0xff]
      %v329 = vld [vmem:[%s219 + $0x60] sm:$0xff]
      %v330 = vld [vmem:[%s219 + $0x68] sm:$0xff]
      %v331 = vld [vmem:[%s219 + $0x70] sm:$0xff]
      %v332 = vld [vmem:[%s219 + $0x78] sm:$0xff]
      %v333 = vld [vmem:[%s219 + $0x80] sm:$0xff]
      %v334 = vld [vmem:[%s219 + $0x88] sm:$0xff]
      %v335 = vld [vmem:[%s219 + $0x90] sm:$0xff]
      %v336 = vld [vmem:[%s219 + $0x98] sm:$0xff]
      %v337 = vld [vmem:[%s219 + $0xa0] sm:$0xff]
      %v338 = vld [vmem:[%s219 + $0xa8] sm:$0xff]
      %v339 = vld [vmem:[%s219 + $0xb0] sm:$0xff]
      %v340 = vld [vmem:[%s219 + $0xb8] sm:$0xff]
      %v341 = vld [vmem:[%s219 + $0xc0] sm:$0xff]
      %v342 = vld [vmem:[%s219 + $0xc8] sm:$0xff]
      %v343 = vld [vmem:[%s219 + $0xd0] sm:$0xff]
      %v344 = vld [vmem:[%s219 + $0xd8] sm:$0xff]
      %v345 = vld [vmem:[%s219 + $0xe0] sm:$0xff]
      %v346 = vld [vmem:[%s219 + $0xe8] sm:$0xff]
      %v347 = vld [vmem:[%s219 + $0xf0] sm:$0xff]
      %v348 = vld [vmem:[%s219 + $0xf8] sm:$0xff]
      %s349 = scalar_lea.vmem [#allocation2], 24
      %350 = vst.msk [vmem:[%s349 + $0x1] sm:$0xff] %vm225, %v317
      %351 = vst.msk [vmem:[%s349 + $0x9] sm:$0xff] %vm225, %v318
      %352 = vst.msk [vmem:[%s349 + $0x19] sm:$0xff] %vm225, %v319
      %353 = vst.msk [vmem:[%s349 + $0x21] sm:$0xff] %vm225, %v320
      %354 = vst.msk [vmem:[%s349 + $0x31] sm:$0xff] %vm225, %v321
      %355 = vst.msk [vmem:[%s349 + $0x39] sm:$0xff] %vm225, %v322
      %356 = vst.msk [vmem:[%s349 + $0x49] sm:$0xff] %vm225, %v323
      %357 = vst.msk [vmem:[%s349 + $0x51] sm:$0xff] %vm225, %v324
      %358 = vst.msk [vmem:[%s349 + $0x61] sm:$0xff] %vm225, %v325
      %359 = vst.msk [vmem:[%s349 + $0x69] sm:$0xff] %vm225, %v326
      %360 = vst.msk [vmem:[%s349 + $0x79] sm:$0xff] %vm225, %v327
      %361 = vst.msk [vmem:[%s349 + $0x81] sm:$0xff] %vm225, %v328
      %362 = vst.msk [vmem:[%s349 + $0x91] sm:$0xff] %vm225, %v329
      %363 = vst.msk [vmem:[%s349 + $0x99] sm:$0xff] %vm225, %v330
      %364 = vst.msk [vmem:[%s349 + $0xa9] sm:$0xff] %vm225, %v331
      %365 = vst.msk [vmem:[%s349 + $0xb1] sm:$0xff] %vm225, %v332
      %366 = vst.msk [vmem:[%s349 + $0xc1] sm:$0xff] %vm225, %v333
      %367 = vst.msk [vmem:[%s349 + $0xc9] sm:$0xff] %vm225, %v334
      %368 = vst.msk [vmem:[%s349 + $0xd9] sm:$0xff] %vm225, %v335
      %369 = vst.msk [vmem:[%s349 + $0xe1] sm:$0xff] %vm225, %v336
      %370 = vst.msk [vmem:[%s349 + $0xf1] sm:$0xff] %vm225, %v337
      %371 = vst.msk [vmem:[%s349 + $0xf9] sm:$0xff] %vm225, %v338
      %372 = vst.msk [vmem:[%s349 + $0x109] sm:$0xff] %vm225, %v339
      %373 = vst.msk [vmem:[%s349 + $0x111] sm:$0xff] %vm225, %v340
      %374 = vst.msk [vmem:[%s349 + $0x121] sm:$0xff] %vm225, %v341
      %375 = vst.msk [vmem:[%s349 + $0x129] sm:$0xff] %vm225, %v342
      %376 = vst.msk [vmem:[%s349 + $0x139] sm:$0xff] %vm225, %v343
      %377 = vst.msk [vmem:[%s349 + $0x141] sm:$0xff] %vm225, %v344
      %378 = vst.msk [vmem:[%s349 + $0x151] sm:$0xff] %vm225, %v345
      %379 = vst.msk [vmem:[%s349 + $0x159] sm:$0xff] %vm225, %v346
      %380 = vst.msk [vmem:[%s349 + $0x169] sm:$0xff] %vm225, %v347
      %381 = vst.msk [vmem:[%s349 + $0x171] sm:$0xff] %vm225, %v348
      %v382 = vld [vmem:[#allocation2] sm:$0xff]
      %v383 = vld [vmem:[#allocation2 + $0x8] sm:$0xff]
      %v384 = vld [vmem:[#allocation2 + $0x18] sm:$0xff]
      %v385 = vld [vmem:[#allocation2 + $0x20] sm:$0xff]
      %v386 = vld [vmem:[#allocation2 + $0x30] sm:$0xff]
      %v387 = vld [vmem:[#allocation2 + $0x38] sm:$0xff]
      %v388 = vld [vmem:[#allocation2 + $0x48] sm:$0xff]
      %v389 = vld [vmem:[#allocation2 + $0x50] sm:$0xff]
      %v390 = vld [vmem:[#allocation2 + $0x60] sm:$0xff]
      %v391 = vld [vmem:[#allocation2 + $0x68] sm:$0xff]
      %v392 = vld [vmem:[#allocation2 + $0x78] sm:$0xff]
      %v393 = vld [vmem:[#allocation2 + $0x80] sm:$0xff]
      %v394 = vld [vmem:[#allocation2 + $0x90] sm:$0xff]
      %v395 = vld [vmem:[#allocation2 + $0x98] sm:$0xff]
      %v396 = vld [vmem:[#allocation2 + $0xa8] sm:$0xff]
      %v397 = vld [vmem:[#allocation2 + $0xb0] sm:$0xff]
      %v398 = vld [vmem:[#allocation2 + $0xc0] sm:$0xff]
      %v399 = vld [vmem:[#allocation2 + $0xc8] sm:$0xff]
      %v400 = vld [vmem:[#allocation2 + $0xd8] sm:$0xff]
      %v401 = vld [vmem:[#allocation2 + $0xe0] sm:$0xff]
      %v402 = vld [vmem:[#allocation2 + $0xf0] sm:$0xff]
      %v403 = vld [vmem:[#allocation2 + $0xf8] sm:$0xff]
      %v404 = vld [vmem:[#allocation2 + $0x108] sm:$0xff]
      %v405 = vld [vmem:[#allocation2 + $0x110] sm:$0xff]
      %v406 = vld [vmem:[#allocation2 + $0x120] sm:$0xff]
      %v407 = vld [vmem:[#allocation2 + $0x128] sm:$0xff]
      %v408 = vld [vmem:[#allocation2 + $0x138] sm:$0xff]
      %v409 = vld [vmem:[#allocation2 + $0x140] sm:$0xff]
      %v410 = vld [vmem:[#allocation2 + $0x150] sm:$0xff]
      %v411 = vld [vmem:[#allocation2 + $0x158] sm:$0xff]
      %v412 = vld [vmem:[#allocation2 + $0x168] sm:$0xff]
      %v413 = vld [vmem:[#allocation2 + $0x170] sm:$0xff]
      %414 = vst.msk [vmem:[#allocation4] sm:$0xff] %vm225, %v382
      %415 = vst.msk [vmem:[#allocation4 + $0x8] sm:$0xff] %vm225, %v383
      %416 = vst.msk [vmem:[#allocation4 + $0x10] sm:$0xff] %vm225, %v384
      %417 = vst.msk [vmem:[#allocation4 + $0x18] sm:$0xff] %vm225, %v385
      %418 = vst.msk [vmem:[#allocation4 + $0x20] sm:$0xff] %vm225, %v386
      %419 = vst.msk [vmem:[#allocation4 + $0x28] sm:$0xff] %vm225, %v387
      %420 = vst.msk [vmem:[#allocation4 + $0x30] sm:$0xff] %vm225, %v388
      %421 = vst.msk [vmem:[#allocation4 + $0x38] sm:$0xff] %vm225, %v389
      %422 = vst.msk [vmem:[#allocation4 + $0x40] sm:$0xff] %vm225, %v390
      %423 = vst.msk [vmem:[#allocation4 + $0x48] sm:$0xff] %vm225, %v391
      %424 = vst.msk [vmem:[#allocation4 + $0x50] sm:$0xff] %vm225, %v392
      %425 = vst.msk [vmem:[#allocation4 + $0x58] sm:$0xff] %vm225, %v393
      %426 = vst.msk [vmem:[#allocation4 + $0x60] sm:$0xff] %vm225, %v394
      %427 = vst.msk [vmem:[#allocation4 + $0x68] sm:$0xff] %vm225, %v395
      %428 = vst.msk [vmem:[#allocation4 + $0x70] sm:$0xff] %vm225, %v396
      %429 = vst.msk [vmem:[#allocation4 + $0x78] sm:$0xff] %vm225, %v397
      %430 = vst.msk [vmem:[#allocation4 + $0x80] sm:$0xff] %vm225, %v398
      %431 = vst.msk [vmem:[#allocation4 + $0x88] sm:$0xff] %vm225, %v399
      %432 = vst.msk [vmem:[#allocation4 + $0x90] sm:$0xff] %vm225, %v400
      %433 = vst.msk [vmem:[#allocation4 + $0x98] sm:$0xff] %vm225, %v401
      %434 = vst.msk [vmem:[#allocation4 + $0xa0] sm:$0xff] %vm225, %v402
      %435 = vst.msk [vmem:[#allocation4 + $0xa8] sm:$0xff] %vm225, %v403
      %436 = vst.msk [vmem:[#allocation4 + $0xb0] sm:$0xff] %vm225, %v404
      %437 = vst.msk [vmem:[#allocation4 + $0xb8] sm:$0xff] %vm225, %v405
      %438 = vst.msk [vmem:[#allocation4 + $0xc0] sm:$0xff] %vm225, %v406
      %439 = vst.msk [vmem:[#allocation4 + $0xc8] sm:$0xff] %vm225, %v407
      %440 = vst.msk [vmem:[#allocation4 + $0xd0] sm:$0xff] %vm225, %v408
      %441 = vst.msk [vmem:[#allocation4 + $0xd8] sm:$0xff] %vm225, %v409
      %442 = vst.msk [vmem:[#allocation4 + $0xe0] sm:$0xff] %vm225, %v410
      %443 = vst.msk [vmem:[#allocation4 + $0xe8] sm:$0xff] %vm225, %v411
      %444 = vst.msk [vmem:[#allocation4 + $0xf0] sm:$0xff] %vm225, %v412
      %445 = vst.msk [vmem:[#allocation4 + $0xf8] sm:$0xff] %vm225, %v413
      %v446 = vld [vmem:[#allocation2 + $0x1] sm:$0xff]
      %v447 = vld [vmem:[#allocation2 + $0x9] sm:$0xff]
      %v448 = vld [vmem:[#allocation2 + $0x19] sm:$0xff]
      %v449 = vld [vmem:[#allocation2 + $0x21] sm:$0xff]
      %v450 = vld [vmem:[#allocation2 + $0x31] sm:$0xff]
      %v451 = vld [vmem:[#allocation2 + $0x39] sm:$0xff]
      %v452 = vld [vmem:[#allocation2 + $0x49] sm:$0xff]
      %v453 = vld [vmem:[#allocation2 + $0x51] sm:$0xff]
      %v454 = vld [vmem:[#allocation2 + $0x61] sm:$0xff]
      %v455 = vld [vmem:[#allocation2 + $0x69] sm:$0xff]
      %v456 = vld [vmem:[#allocation2 + $0x79] sm:$0xff]
      %v457 = vld [vmem:[#allocation2 + $0x81] sm:$0xff]
      %v458 = vld [vmem:[#allocation2 + $0x91] sm:$0xff]
      %v459 = vld [vmem:[#allocation2 + $0x99] sm:$0xff]
      %v460 = vld [vmem:[#allocation2 + $0xa9] sm:$0xff]
      %v461 = vld [vmem:[#allocation2 + $0xb1] sm:$0xff]
      %v462 = vld [vmem:[#allocation2 + $0xc1] sm:$0xff]
      %v463 = vld [vmem:[#allocation2 + $0xc9] sm:$0xff]
      %v464 = vld [vmem:[#allocation2 + $0xd9] sm:$0xff]
      %v465 = vld [vmem:[#allocation2 + $0xe1] sm:$0xff]
      %v466 = vld [vmem:[#allocation2 + $0xf1] sm:$0xff]
      %v467 = vld [vmem:[#allocation2 + $0xf9] sm:$0xff]
      %v468 = vld [vmem:[#allocation2 + $0x109] sm:$0xff]
      %v469 = vld [vmem:[#allocation2 + $0x111] sm:$0xff]
      %v470 = vld [vmem:[#allocation2 + $0x121] sm:$0xff]
      %v471 = vld [vmem:[#allocation2 + $0x129] sm:$0xff]
      %v472 = vld [vmem:[#allocation2 + $0x139] sm:$0xff]
      %v473 = vld [vmem:[#allocation2 + $0x141] sm:$0xff]
      %v474 = vld [vmem:[#allocation2 + $0x151] sm:$0xff]
      %v475 = vld [vmem:[#allocation2 + $0x159] sm:$0xff]
      %v476 = vld [vmem:[#allocation2 + $0x169] sm:$0xff]
      %v477 = vld [vmem:[#allocation2 + $0x171] sm:$0xff]
      %510 = vrot.lane.b32.xlu0 %v446, 4
      %v511 = vpop.permute.xlu0 %510
      %512 = vrot.lane.b32.xlu0 %v447, 4
      %v513 = vpop.permute.xlu0 %512
      %514 = vrot.lane.b32.xlu0 %v448, 4
      %v515 = vpop.permute.xlu0 %514
      %516 = vrot.lane.b32.xlu0 %v449, 4
      %v517 = vpop.permute.xlu0 %516
      %518 = vrot.lane.b32.xlu0 %v450, 4
      %v519 = vpop.permute.xlu0 %518
      %520 = vrot.lane.b32.xlu0 %v451, 4
      %v521 = vpop.permute.xlu0 %520
      %522 = vrot.lane.b32.xlu0 %v452, 4
      %v523 = vpop.permute.xlu0 %522
      %524 = vrot.lane.b32.xlu0 %v453, 4
      %v525 = vpop.permute.xlu0 %524
      %526 = vrot.lane.b32.xlu0 %v454, 4
      %v527 = vpop.permute.xlu0 %526
      %528 = vrot.lane.b32.xlu0 %v455, 4
      %v529 = vpop.permute.xlu0 %528
      %530 = vrot.lane.b32.xlu0 %v456, 4
      %v531 = vpop.permute.xlu0 %530
      %532 = vrot.lane.b32.xlu0 %v457, 4
      %v533 = vpop.permute.xlu0 %532
      %534 = vrot.lane.b32.xlu0 %v458, 4
      %v535 = vpop.permute.xlu0 %534
      %536 = vrot.lane.b32.xlu0 %v459, 4
      %v537 = vpop.permute.xlu0 %536
      %538 = vrot.lane.b32.xlu0 %v460, 4
      %v539 = vpop.permute.xlu0 %538
      %540 = vrot.lane.b32.xlu0 %v461, 4
      %v541 = vpop.permute.xlu0 %540
      %542 = vrot.lane.b32.xlu0 %v462, 4
      %v543 = vpop.permute.xlu0 %542
      %544 = vrot.lane.b32.xlu0 %v463, 4
      %v545 = vpop.permute.xlu0 %544
      %546 = vrot.lane.b32.xlu0 %v464, 4
      %v547 = vpop.permute.xlu0 %546
      %548 = vrot.lane.b32.xlu0 %v465, 4
      %v549 = vpop.permute.xlu0 %548
      %550 = vrot.lane.b32.xlu0 %v466, 4
      %v551 = vpop.permute.xlu0 %550
      %552 = vrot.lane.b32.xlu0 %v467, 4
      %v553 = vpop.permute.xlu0 %552
      %554 = vrot.lane.b32.xlu0 %v468, 4
      %v555 = vpop.permute.xlu0 %554
      %556 = vrot.lane.b32.xlu0 %v469, 4
      %v557 = vpop.permute.xlu0 %556
      %558 = vrot.lane.b32.xlu0 %v470, 4
      %v559 = vpop.permute.xlu0 %558
      %560 = vrot.lane.b32.xlu0 %v471, 4
      %v561 = vpop.permute.xlu0 %560
      %562 = vrot.lane.b32.xlu0 %v472, 4
      %v563 = vpop.permute.xlu0 %562
      %564 = vrot.lane.b32.xlu0 %v473, 4
      %v565 = vpop.permute.xlu0 %564
      %566 = vrot.lane.b32.xlu0 %v474, 4
      %v567 = vpop.permute.xlu0 %566
      %568 = vrot.lane.b32.xlu0 %v475, 4
      %v569 = vpop.permute.xlu0 %568
      %570 = vrot.lane.b32.xlu0 %v476, 4
      %v571 = vpop.permute.xlu0 %570
      %572 = vrot.lane.b32.xlu0 %v477, 4
      %v573 = vpop.permute.xlu0 %572
      %vm606 = vcmask 64544
      %607 = vst.msk [vmem:[#allocation4] sm:$0xff] %vm606, %v511
      %608 = vst.msk [vmem:[#allocation4 + $0x8] sm:$0xff] %vm606, %v513
      %609 = vst.msk [vmem:[#allocation4 + $0x10] sm:$0xff] %vm606, %v515
      %610 = vst.msk [vmem:[#allocation4 + $0x18] sm:$0xff] %vm606, %v517
      %611 = vst.msk [vmem:[#allocation4 + $0x20] sm:$0xff] %vm606, %v519
      %612 = vst.msk [vmem:[#allocation4 + $0x28] sm:$0xff] %vm606, %v521
      %613 = vst.msk [vmem:[#allocation4 + $0x30] sm:$0xff] %vm606, %v523
      %614 = vst.msk [vmem:[#allocation4 + $0x38] sm:$0xff] %vm606, %v525
      %615 = vst.msk [vmem:[#allocation4 + $0x40] sm:$0xff] %vm606, %v527
      %616 = vst.msk [vmem:[#allocation4 + $0x48] sm:$0xff] %vm606, %v529
      %617 = vst.msk [vmem:[#allocation4 + $0x50] sm:$0xff] %vm606, %v531
      %618 = vst.msk [vmem:[#allocation4 + $0x58] sm:$0xff] %vm606, %v533
      %619 = vst.msk [vmem:[#allocation4 + $0x60] sm:$0xff] %vm606, %v535
      %620 = vst.msk [vmem:[#allocation4 + $0x68] sm:$0xff] %vm606, %v537
      %621 = vst.msk [vmem:[#allocation4 + $0x70] sm:$0xff] %vm606, %v539
      %622 = vst.msk [vmem:[#allocation4 + $0x78] sm:$0xff] %vm606, %v541
      %623 = vst.msk [vmem:[#allocation4 + $0x80] sm:$0xff] %vm606, %v543
      %624 = vst.msk [vmem:[#allocation4 + $0x88] sm:$0xff] %vm606, %v545
      %625 = vst.msk [vmem:[#allocation4 + $0x90] sm:$0xff] %vm606, %v547
      %626 = vst.msk [vmem:[#allocation4 + $0x98] sm:$0xff] %vm606, %v549
      %627 = vst.msk [vmem:[#allocation4 + $0xa0] sm:$0xff] %vm606, %v551
      %628 = vst.msk [vmem:[#allocation4 + $0xa8] sm:$0xff] %vm606, %v553
      %629 = vst.msk [vmem:[#allocation4 + $0xb0] sm:$0xff] %vm606, %v555
      %630 = vst.msk [vmem:[#allocation4 + $0xb8] sm:$0xff] %vm606, %v557
      %631 = vst.msk [vmem:[#allocation4 + $0xc0] sm:$0xff] %vm606, %v559
      %632 = vst.msk [vmem:[#allocation4 + $0xc8] sm:$0xff] %vm606, %v561
      %633 = vst.msk [vmem:[#allocation4 + $0xd0] sm:$0xff] %vm606, %v563
      %634 = vst.msk [vmem:[#allocation4 + $0xd8] sm:$0xff] %vm606, %v565
      %635 = vst.msk [vmem:[#allocation4 + $0xe0] sm:$0xff] %vm606, %v567
      %636 = vst.msk [vmem:[#allocation4 + $0xe8] sm:$0xff] %vm606, %v569
      %637 = vst.msk [vmem:[#allocation4 + $0xf0] sm:$0xff] %vm606, %v571
      %638 = vst.msk [vmem:[#allocation4 + $0xf8] sm:$0xff] %vm606, %v573
      %v639 = vld [vmem:[#allocation2 + $0x2] sm:$0xff]
      %v640 = vld [vmem:[#allocation2 + $0xa] sm:$0xff]
      %v641 = vld [vmem:[#allocation2 + $0x1a] sm:$0xff]
      %v642 = vld [vmem:[#allocation2 + $0x22] sm:$0xff]
      %v643 = vld [vmem:[#allocation2 + $0x32] sm:$0xff]
      %v644 = vld [vmem:[#allocation2 + $0x3a] sm:$0xff]
      %v645 = vld [vmem:[#allocation2 + $0x4a] sm:$0xff]
      %v646 = vld [vmem:[#allocation2 + $0x52] sm:$0xff]
      %v647 = vld [vmem:[#allocation2 + $0x62] sm:$0xff]
      %v648 = vld [vmem:[#allocation2 + $0x6a] sm:$0xff]
      %v649 = vld [vmem:[#allocation2 + $0x7a] sm:$0xff]
      %v650 = vld [vmem:[#allocation2 + $0x82] sm:$0xff]
      %v651 = vld [vmem:[#allocation2 + $0x92] sm:$0xff]
      %v652 = vld [vmem:[#allocation2 + $0x9a] sm:$0xff]
      %v653 = vld [vmem:[#allocation2 + $0xaa] sm:$0xff]
      %v654 = vld [vmem:[#allocation2 + $0xb2] sm:$0xff]
      %v655 = vld [vmem:[#allocation2 + $0xc2] sm:$0xff]
      %v656 = vld [vmem:[#allocation2 + $0xca] sm:$0xff]
      %v657 = vld [vmem:[#allocation2 + $0xda] sm:$0xff]
      %v658 = vld [vmem:[#allocation2 + $0xe2] sm:$0xff]
      %v659 = vld [vmem:[#allocation2 + $0xf2] sm:$0xff]
      %v660 = vld [vmem:[#allocation2 + $0xfa] sm:$0xff]
      %v661 = vld [vmem:[#allocation2 + $0x10a] sm:$0xff]
      %v662 = vld [vmem:[#allocation2 + $0x112] sm:$0xff]
      %v663 = vld [vmem:[#allocation2 + $0x122] sm:$0xff]
      %v664 = vld [vmem:[#allocation2 + $0x12a] sm:$0xff]
      %v665 = vld [vmem:[#allocation2 + $0x13a] sm:$0xff]
      %v666 = vld [vmem:[#allocation2 + $0x142] sm:$0xff]
      %v667 = vld [vmem:[#allocation2 + $0x152] sm:$0xff]
      %v668 = vld [vmem:[#allocation2 + $0x15a] sm:$0xff]
      %v669 = vld [vmem:[#allocation2 + $0x16a] sm:$0xff]
      %v670 = vld [vmem:[#allocation2 + $0x172] sm:$0xff]
      %703 = vrot.lane.b32.xlu0 %v639, 8
      %v704 = vpop.permute.xlu0 %703
      %705 = vrot.lane.b32.xlu0 %v640, 8
      %v706 = vpop.permute.xlu0 %705
      %707 = vrot.lane.b32.xlu0 %v641, 8
      %v708 = vpop.permute.xlu0 %707
      %709 = vrot.lane.b32.xlu0 %v642, 8
      %v710 = vpop.permute.xlu0 %709
      %711 = vrot.lane.b32.xlu0 %v643, 8
      %v712 = vpop.permute.xlu0 %711
      %713 = vrot.lane.b32.xlu0 %v644, 8
      %v714 = vpop.permute.xlu0 %713
      %715 = vrot.lane.b32.xlu0 %v645, 8
      %v716 = vpop.permute.xlu0 %715
      %717 = vrot.lane.b32.xlu0 %v646, 8
      %v718 = vpop.permute.xlu0 %717
      %719 = vrot.lane.b32.xlu0 %v647, 8
      %v720 = vpop.permute.xlu0 %719
      %721 = vrot.lane.b32.xlu0 %v648, 8
      %v722 = vpop.permute.xlu0 %721
      %723 = vrot.lane.b32.xlu0 %v649, 8
      %v724 = vpop.permute.xlu0 %723
      %725 = vrot.lane.b32.xlu0 %v650, 8
      %v726 = vpop.permute.xlu0 %725
      %727 = vrot.lane.b32.xlu0 %v651, 8
      %v728 = vpop.permute.xlu0 %727
      %729 = vrot.lane.b32.xlu0 %v652, 8
      %v730 = vpop.permute.xlu0 %729
      %731 = vrot.lane.b32.xlu0 %v653, 8
      %v732 = vpop.permute.xlu0 %731
      %733 = vrot.lane.b32.xlu0 %v654, 8
      %v734 = vpop.permute.xlu0 %733
      %735 = vrot.lane.b32.xlu0 %v655, 8
      %v736 = vpop.permute.xlu0 %735
      %737 = vrot.lane.b32.xlu0 %v656, 8
      %v738 = vpop.permute.xlu0 %737
      %739 = vrot.lane.b32.xlu0 %v657, 8
      %v740 = vpop.permute.xlu0 %739
      %741 = vrot.lane.b32.xlu0 %v658, 8
      %v742 = vpop.permute.xlu0 %741
      %743 = vrot.lane.b32.xlu0 %v659, 8
      %v744 = vpop.permute.xlu0 %743
      %745 = vrot.lane.b32.xlu0 %v660, 8
      %v746 = vpop.permute.xlu0 %745
      %747 = vrot.lane.b32.xlu0 %v661, 8
      %v748 = vpop.permute.xlu0 %747
      %749 = vrot.lane.b32.xlu0 %v662, 8
      %v750 = vpop.permute.xlu0 %749
      %751 = vrot.lane.b32.xlu0 %v663, 8
      %v752 = vpop.permute.xlu0 %751
      %753 = vrot.lane.b32.xlu0 %v664, 8
      %v754 = vpop.permute.xlu0 %753
      %755 = vrot.lane.b32.xlu0 %v665, 8
      %v756 = vpop.permute.xlu0 %755
      %757 = vrot.lane.b32.xlu0 %v666, 8
      %v758 = vpop.permute.xlu0 %757
      %759 = vrot.lane.b32.xlu0 %v667, 8
      %v760 = vpop.permute.xlu0 %759
      %761 = vrot.lane.b32.xlu0 %v668, 8
      %v762 = vpop.permute.xlu0 %761
      %763 = vrot.lane.b32.xlu0 %v669, 8
      %v764 = vpop.permute.xlu0 %763
      %765 = vrot.lane.b32.xlu0 %v670, 8
      %v766 = vpop.permute.xlu0 %765
      %vm799 = vcmask 97344
      %800 = vst.msk [vmem:[#allocation4] sm:$0xff] %vm799, %v704
      %801 = vst.msk [vmem:[#allocation4 + $0x8] sm:$0xff] %vm799, %v706
      %802 = vst.msk [vmem:[#allocation4 + $0x10] sm:$0xff] %vm799, %v708
      %803 = vst.msk [vmem:[#allocation4 + $0x18] sm:$0xff] %vm799, %v710
      %804 = vst.msk [vmem:[#allocation4 + $0x20] sm:$0xff] %vm799, %v712
      %805 = vst.msk [vmem:[#allocation4 + $0x28] sm:$0xff] %vm799, %v714
      %806 = vst.msk [vmem:[#allocation4 + $0x30] sm:$0xff] %vm799, %v716
      %807 = vst.msk [vmem:[#allocation4 + $0x38] sm:$0xff] %vm799, %v718
      %808 = vst.msk [vmem:[#allocation4 + $0x40] sm:$0xff] %vm799, %v720
      %809 = vst.msk [vmem:[#allocation4 + $0x48] sm:$0xff] %vm799, %v722
      %810 = vst.msk [vmem:[#allocation4 + $0x50] sm:$0xff] %vm799, %v724
      %811 = vst.msk [vmem:[#allocation4 + $0x58] sm:$0xff] %vm799, %v726
      %812 = vst.msk [vmem:[#allocation4 + $0x60] sm:$0xff] %vm799, %v728
      %813 = vst.msk [vmem:[#allocation4 + $0x68] sm:$0xff] %vm799, %v730
      %814 = vst.msk [vmem:[#allocation4 + $0x70] sm:$0xff] %vm799, %v732
      %815 = vst.msk [vmem:[#allocation4 + $0x78] sm:$0xff] %vm799, %v734
      %816 = vst.msk [vmem:[#allocation4 + $0x80] sm:$0xff] %vm799, %v736
      %817 = vst.msk [vmem:[#allocation4 + $0x88] sm:$0xff] %vm799, %v738
      %818 = vst.msk [vmem:[#allocation4 + $0x90] sm:$0xff] %vm799, %v740
      %819 = vst.msk [vmem:[#allocation4 + $0x98] sm:$0xff] %vm799, %v742
      %820 = vst.msk [vmem:[#allocation4 + $0xa0] sm:$0xff] %vm799, %v744
      %821 = vst.msk [vmem:[#allocation4 + $0xa8] sm:$0xff] %vm799, %v746
      %822 = vst.msk [vmem:[#allocation4 + $0xb0] sm:$0xff] %vm799, %v748
      %823 = vst.msk [vmem:[#allocation4 + $0xb8] sm:$0xff] %vm799, %v750
      %824 = vst.msk [vmem:[#allocation4 + $0xc0] sm:$0xff] %vm799, %v752
      %825 = vst.msk [vmem:[#allocation4 + $0xc8] sm:$0xff] %vm799, %v754
      %826 = vst.msk [vmem:[#allocation4 + $0xd0] sm:$0xff] %vm799, %v756
      %827 = vst.msk [vmem:[#allocation4 + $0xd8] sm:$0xff] %vm799, %v758
      %828 = vst.msk [vmem:[#allocation4 + $0xe0] sm:$0xff] %vm799, %v760
      %829 = vst.msk [vmem:[#allocation4 + $0xe8] sm:$0xff] %vm799, %v762
      %830 = vst.msk [vmem:[#allocation4 + $0xf0] sm:$0xff] %vm799, %v764
      %831 = vst.msk [vmem:[#allocation4 + $0xf8] sm:$0xff] %vm799, %v766
      %v832 = vld [vmem:[%s349] sm:$0xff]
      %v833 = vld [vmem:[%s349 + $0x8] sm:$0xff]
      %v834 = vld [vmem:[%s349 + $0x18] sm:$0xff]
      %v835 = vld [vmem:[%s349 + $0x20] sm:$0xff]
      %v836 = vld [vmem:[%s349 + $0x30] sm:$0xff]
      %v837 = vld [vmem:[%s349 + $0x38] sm:$0xff]
      %v838 = vld [vmem:[%s349 + $0x48] sm:$0xff]
      %v839 = vld [vmem:[%s349 + $0x50] sm:$0xff]
      %v840 = vld [vmem:[%s349 + $0x60] sm:$0xff]
      %v841 = vld [vmem:[%s349 + $0x68] sm:$0xff]
      %v842 = vld [vmem:[%s349 + $0x78] sm:$0xff]
      %v843 = vld [vmem:[%s349 + $0x80] sm:$0xff]
      %v844 = vld [vmem:[%s349 + $0x90] sm:$0xff]
      %v845 = vld [vmem:[%s349 + $0x98] sm:$0xff]
      %v846 = vld [vmem:[%s349 + $0xa8] sm:$0xff]
      %v847 = vld [vmem:[%s349 + $0xb0] sm:$0xff]
      %v848 = vld [vmem:[%s349 + $0xc0] sm:$0xff]
      %v849 = vld [vmem:[%s349 + $0xc8] sm:$0xff]
      %v850 = vld [vmem:[%s349 + $0xd8] sm:$0xff]
      %v851 = vld [vmem:[%s349 + $0xe0] sm:$0xff]
      %v852 = vld [vmem:[%s349 + $0xf0] sm:$0xff]
      %v853 = vld [vmem:[%s349 + $0xf8] sm:$0xff]
      %v854 = vld [vmem:[%s349 + $0x108] sm:$0xff]
      %v855 = vld [vmem:[%s349 + $0x110] sm:$0xff]
      %v856 = vld [vmem:[%s349 + $0x120] sm:$0xff]
      %v857 = vld [vmem:[%s349 + $0x128] sm:$0xff]
      %v858 = vld [vmem:[%s349 + $0x138] sm:$0xff]
      %v859 = vld [vmem:[%s349 + $0x140] sm:$0xff]
      %v860 = vld [vmem:[%s349 + $0x150] sm:$0xff]
      %v861 = vld [vmem:[%s349 + $0x158] sm:$0xff]
      %v862 = vld [vmem:[%s349 + $0x168] sm:$0xff]
      %v863 = vld [vmem:[%s349 + $0x170] sm:$0xff]
      %896 = vrot.lane.b32.xlu0 %v832, 12
      %v897 = vpop.permute.xlu0 %896
      %898 = vrot.lane.b32.xlu0 %v833, 12
      %v899 = vpop.permute.xlu0 %898
      %900 = vrot.lane.b32.xlu0 %v834, 12
      %v901 = vpop.permute.xlu0 %900
      %902 = vrot.lane.b32.xlu0 %v835, 12
      %v903 = vpop.permute.xlu0 %902
      %904 = vrot.lane.b32.xlu0 %v836, 12
      %v905 = vpop.permute.xlu0 %904
      %906 = vrot.lane.b32.xlu0 %v837, 12
      %v907 = vpop.permute.xlu0 %906
      %908 = vrot.lane.b32.xlu0 %v838, 12
      %v909 = vpop.permute.xlu0 %908
      %910 = vrot.lane.b32.xlu0 %v839, 12
      %v911 = vpop.permute.xlu0 %910
      %912 = vrot.lane.b32.xlu0 %v840, 12
      %v913 = vpop.permute.xlu0 %912
      %914 = vrot.lane.b32.xlu0 %v841, 12
      %v915 = vpop.permute.xlu0 %914
      %916 = vrot.lane.b32.xlu0 %v842, 12
      %v917 = vpop.permute.xlu0 %916
      %918 = vrot.lane.b32.xlu0 %v843, 12
      %v919 = vpop.permute.xlu0 %918
      %920 = vrot.lane.b32.xlu0 %v844, 12
      %v921 = vpop.permute.xlu0 %920
      %922 = vrot.lane.b32.xlu0 %v845, 12
      %v923 = vpop.permute.xlu0 %922
      %924 = vrot.lane.b32.xlu0 %v846, 12
      %v925 = vpop.permute.xlu0 %924
      %926 = vrot.lane.b32.xlu0 %v847, 12
      %v927 = vpop.permute.xlu0 %926
      %928 = vrot.lane.b32.xlu0 %v848, 12
      %v929 = vpop.permute.xlu0 %928
      %930 = vrot.lane.b32.xlu0 %v849, 12
      %v931 = vpop.permute.xlu0 %930
      %932 = vrot.lane.b32.xlu0 %v850, 12
      %v933 = vpop.permute.xlu0 %932
      %934 = vrot.lane.b32.xlu0 %v851, 12
      %v935 = vpop.permute.xlu0 %934
      %936 = vrot.lane.b32.xlu0 %v852, 12
      %v937 = vpop.permute.xlu0 %936
      %938 = vrot.lane.b32.xlu0 %v853, 12
      %v939 = vpop.permute.xlu0 %938
      %940 = vrot.lane.b32.xlu0 %v854, 12
      %v941 = vpop.permute.xlu0 %940
      %942 = vrot.lane.b32.xlu0 %v855, 12
      %v943 = vpop.permute.xlu0 %942
      %944 = vrot.lane.b32.xlu0 %v856, 12
      %v945 = vpop.permute.xlu0 %944
      %946 = vrot.lane.b32.xlu0 %v857, 12
      %v947 = vpop.permute.xlu0 %946
      %948 = vrot.lane.b32.xlu0 %v858, 12
      %v949 = vpop.permute.xlu0 %948
      %950 = vrot.lane.b32.xlu0 %v859, 12
      %v951 = vpop.permute.xlu0 %950
      %952 = vrot.lane.b32.xlu0 %v860, 12
      %v953 = vpop.permute.xlu0 %952
      %954 = vrot.lane.b32.xlu0 %v861, 12
      %v955 = vpop.permute.xlu0 %954
      %956 = vrot.lane.b32.xlu0 %v862, 12
      %v957 = vpop.permute.xlu0 %956
      %958 = vrot.lane.b32.xlu0 %v863, 12
      %v959 = vpop.permute.xlu0 %958
      %vm992 = vcmask 130144
      %993 = vst.msk [vmem:[#allocation4] sm:$0xff] %vm992, %v897
      %994 = vst.msk [vmem:[#allocation4 + $0x8] sm:$0xff] %vm992, %v899
      %995 = vst.msk [vmem:[#allocation4 + $0x10] sm:$0xff] %vm992, %v901
      %996 = vst.msk [vmem:[#allocation4 + $0x18] sm:$0xff] %vm992, %v903
      %997 = vst.msk [vmem:[#allocation4 + $0x20] sm:$0xff] %vm992, %v905
      %998 = vst.msk [vmem:[#allocation4 + $0x28] sm:$0xff] %vm992, %v907
      %999 = vst.msk [vmem:[#allocation4 + $0x30] sm:$0xff] %vm992, %v909
      %1000 = vst.msk [vmem:[#allocation4 + $0x38] sm:$0xff] %vm992, %v911
      %1001 = vst.msk [vmem:[#allocation4 + $0x40] sm:$0xff] %vm992, %v913
      %1002 = vst.msk [vmem:[#allocation4 + $0x48] sm:$0xff] %vm992, %v915
      %1003 = vst.msk [vmem:[#allocation4 + $0x50] sm:$0xff] %vm992, %v917
      %1004 = vst.msk [vmem:[#allocation4 + $0x58] sm:$0xff] %vm992, %v919
      %1005 = vst.msk [vmem:[#allocation4 + $0x60] sm:$0xff] %vm992, %v921
      %1006 = vst.msk [vmem:[#allocation4 + $0x68] sm:$0xff] %vm992, %v923
      %1007 = vst.msk [vmem:[#allocation4 + $0x70] sm:$0xff] %vm992, %v925
      %1008 = vst.msk [vmem:[#allocation4 + $0x78] sm:$0xff] %vm992, %v927
      %1009 = vst.msk [vmem:[#allocation4 + $0x80] sm:$0xff] %vm992, %v929
      %1010 = vst.msk [vmem:[#allocation4 + $0x88] sm:$0xff] %vm992, %v931
      %1011 = vst.msk [vmem:[#allocation4 + $0x90] sm:$0xff] %vm992, %v933
      %1012 = vst.msk [vmem:[#allocation4 + $0x98] sm:$0xff] %vm992, %v935
      %1013 = vst.msk [vmem:[#allocation4 + $0xa0] sm:$0xff] %vm992, %v937
      %1014 = vst.msk [vmem:[#allocation4 + $0xa8] sm:$0xff] %vm992, %v939
      %1015 = vst.msk [vmem:[#allocation4 + $0xb0] sm:$0xff] %vm992, %v941
      %1016 = vst.msk [vmem:[#allocation4 + $0xb8] sm:$0xff] %vm992, %v943
      %1017 = vst.msk [vmem:[#allocation4 + $0xc0] sm:$0xff] %vm992, %v945
      %1018 = vst.msk [vmem:[#allocation4 + $0xc8] sm:$0xff] %vm992, %v947
      %1019 = vst.msk [vmem:[#allocation4 + $0xd0] sm:$0xff] %vm992, %v949
      %1020 = vst.msk [vmem:[#allocation4 + $0xd8] sm:$0xff] %vm992, %v951
      %1021 = vst.msk [vmem:[#allocation4 + $0xe0] sm:$0xff] %vm992, %v953
      %1022 = vst.msk [vmem:[#allocation4 + $0xe8] sm:$0xff] %vm992, %v955
      %1023 = vst.msk [vmem:[#allocation4 + $0xf0] sm:$0xff] %vm992, %v957
      %1024 = vst.msk [vmem:[#allocation4 + $0xf8] sm:$0xff] %vm992, %v959
      %v1025 = vld [vmem:[%s349 + $0x1] sm:$0xff]
      %v1026 = vld [vmem:[%s349 + $0x9] sm:$0xff]
      %v1027 = vld [vmem:[%s349 + $0x19] sm:$0xff]
      %v1028 = vld [vmem:[%s349 + $0x21] sm:$0xff]
      %v1029 = vld [vmem:[%s349 + $0x31] sm:$0xff]
      %v1030 = vld [vmem:[%s349 + $0x39] sm:$0xff]
      %v1031 = vld [vmem:[%s349 + $0x49] sm:$0xff]
      %v1032 = vld [vmem:[%s349 + $0x51] sm:$0xff]
      %v1033 = vld [vmem:[%s349 + $0x61] sm:$0xff]
      %v1034 = vld [vmem:[%s349 + $0x69] sm:$0xff]
      %v1035 = vld [vmem:[%s349 + $0x79] sm:$0xff]
      %v1036 = vld [vmem:[%s349 + $0x81] sm:$0xff]
      %v1037 = vld [vmem:[%s349 + $0x91] sm:$0xff]
      %v1038 = vld [vmem:[%s349 + $0x99] sm:$0xff]
      %v1039 = vld [vmem:[%s349 + $0xa9] sm:$0xff]
      %v1040 = vld [vmem:[%s349 + $0xb1] sm:$0xff]
      %v1041 = vld [vmem:[%s349 + $0xc1] sm:$0xff]
      %v1042 = vld [vmem:[%s349 + $0xc9] sm:$0xff]
      %v1043 = vld [vmem:[%s349 + $0xd9] sm:$0xff]
      %v1044 = vld [vmem:[%s349 + $0xe1] sm:$0xff]
      %v1045 = vld [vmem:[%s349 + $0xf1] sm:$0xff]
      %v1046 = vld [vmem:[%s349 + $0xf9] sm:$0xff]
      %v1047 = vld [vmem:[%s349 + $0x109] sm:$0xff]
      %v1048 = vld [vmem:[%s349 + $0x111] sm:$0xff]
      %v1049 = vld [vmem:[%s349 + $0x121] sm:$0xff]
      %v1050 = vld [vmem:[%s349 + $0x129] sm:$0xff]
      %v1051 = vld [vmem:[%s349 + $0x139] sm:$0xff]
      %v1052 = vld [vmem:[%s349 + $0x141] sm:$0xff]
      %v1053 = vld [vmem:[%s349 + $0x151] sm:$0xff]
      %v1054 = vld [vmem:[%s349 + $0x159] sm:$0xff]
      %v1055 = vld [vmem:[%s349 + $0x169] sm:$0xff]
      %v1056 = vld [vmem:[%s349 + $0x171] sm:$0xff]
      %1089 = vrot.lane.b32.xlu0 %v1025, 16
      %v1090 = vpop.permute.xlu0 %1089
      %1091 = vrot.lane.b32.xlu0 %v1026, 16
      %v1092 = vpop.permute.xlu0 %1091
      %1093 = vrot.lane.b32.xlu0 %v1027, 16
      %v1094 = vpop.permute.xlu0 %1093
      %1095 = vrot.lane.b32.xlu0 %v1028, 16
      %v1096 = vpop.permute.xlu0 %1095
      %1097 = vrot.lane.b32.xlu0 %v1029, 16
      %v1098 = vpop.permute.xlu0 %1097
      %1099 = vrot.lane.b32.xlu0 %v1030, 16
      %v1100 = vpop.permute.xlu0 %1099
      %1101 = vrot.lane.b32.xlu0 %v1031, 16
      %v1102 = vpop.permute.xlu0 %1101
      %1103 = vrot.lane.b32.xlu0 %v1032, 16
      %v1104 = vpop.permute.xlu0 %1103
      %1105 = vrot.lane.b32.xlu0 %v1033, 16
      %v1106 = vpop.permute.xlu0 %1105
      %1107 = vrot.lane.b32.xlu0 %v1034, 16
      %v1108 = vpop.permute.xlu0 %1107
      %1109 = vrot.lane.b32.xlu0 %v1035, 16
      %v1110 = vpop.permute.xlu0 %1109
      %1111 = vrot.lane.b32.xlu0 %v1036, 16
      %v1112 = vpop.permute.xlu0 %1111
      %1113 = vrot.lane.b32.xlu0 %v1037, 16
      %v1114 = vpop.permute.xlu0 %1113
      %1115 = vrot.lane.b32.xlu0 %v1038, 16
      %v1116 = vpop.permute.xlu0 %1115
      %1117 = vrot.lane.b32.xlu0 %v1039, 16
      %v1118 = vpop.permute.xlu0 %1117
      %1119 = vrot.lane.b32.xlu0 %v1040, 16
      %v1120 = vpop.permute.xlu0 %1119
      %1121 = vrot.lane.b32.xlu0 %v1041, 16
      %v1122 = vpop.permute.xlu0 %1121
      %1123 = vrot.lane.b32.xlu0 %v1042, 16
      %v1124 = vpop.permute.xlu0 %1123
      %1125 = vrot.lane.b32.xlu0 %v1043, 16
      %v1126 = vpop.permute.xlu0 %1125
      %1127 = vrot.lane.b32.xlu0 %v1044, 16
      %v1128 = vpop.permute.xlu0 %1127
      %1129 = vrot.lane.b32.xlu0 %v1045, 16
      %v1130 = vpop.permute.xlu0 %1129
      %1131 = vrot.lane.b32.xlu0 %v1046, 16
      %v1132 = vpop.permute.xlu0 %1131
      %1133 = vrot.lane.b32.xlu0 %v1047, 16
      %v1134 = vpop.permute.xlu0 %1133
      %1135 = vrot.lane.b32.xlu0 %v1048, 16
      %v1136 = vpop.permute.xlu0 %1135
      %1137 = vrot.lane.b32.xlu0 %v1049, 16
      %v1138 = vpop.permute.xlu0 %1137
      %1139 = vrot.lane.b32.xlu0 %v1050, 16
      %v1140 = vpop.permute.xlu0 %1139
      %1141 = vrot.lane.b32.xlu0 %v1051, 16
      %v1142 = vpop.permute.xlu0 %1141
      %1143 = vrot.lane.b32.xlu0 %v1052, 16
      %v1144 = vpop.permute.xlu0 %1143
      %1145 = vrot.lane.b32.xlu0 %v1053, 16
      %v1146 = vpop.permute.xlu0 %1145
      %1147 = vrot.lane.b32.xlu0 %v1054, 16
      %v1148 = vpop.permute.xlu0 %1147
      %1149 = vrot.lane.b32.xlu0 %v1055, 16
      %v1150 = vpop.permute.xlu0 %1149
      %1151 = vrot.lane.b32.xlu0 %v1056, 16
      %v1152 = vpop.permute.xlu0 %1151
      %vm1185 = vcmask 162944
      %1186 = vst.msk [vmem:[#allocation4] sm:$0xff] %vm1185, %v1090
      %1187 = vst.msk [vmem:[#allocation4 + $0x8] sm:$0xff] %vm1185, %v1092
      %1188 = vst.msk [vmem:[#allocation4 + $0x10] sm:$0xff] %vm1185, %v1094
      %1189 = vst.msk [vmem:[#allocation4 + $0x18] sm:$0xff] %vm1185, %v1096
      %1190 = vst.msk [vmem:[#allocation4 + $0x20] sm:$0xff] %vm1185, %v1098
      %1191 = vst.msk [vmem:[#allocation4 + $0x28] sm:$0xff] %vm1185, %v1100
      %1192 = vst.msk [vmem:[#allocation4 + $0x30] sm:$0xff] %vm1185, %v1102
      %1193 = vst.msk [vmem:[#allocation4 + $0x38] sm:$0xff] %vm1185, %v1104
      %1194 = vst.msk [vmem:[#allocation4 + $0x40] sm:$0xff] %vm1185, %v1106
      %1195 = vst.msk [vmem:[#allocation4 + $0x48] sm:$0xff] %vm1185, %v1108
      %1196 = vst.msk [vmem:[#allocation4 + $0x50] sm:$0xff] %vm1185, %v1110
      %1197 = vst.msk [vmem:[#allocation4 + $0x58] sm:$0xff] %vm1185, %v1112
      %1198 = vst.msk [vmem:[#allocation4 + $0x60] sm:$0xff] %vm1185, %v1114
      %1199 = vst.msk [vmem:[#allocation4 + $0x68] sm:$0xff] %vm1185, %v1116
      %1200 = vst.msk [vmem:[#allocation4 + $0x70] sm:$0xff] %vm1185, %v1118
      %1201 = vst.msk [vmem:[#allocation4 + $0x78] sm:$0xff] %vm1185, %v1120
      %1202 = vst.msk [vmem:[#allocation4 + $0x80] sm:$0xff] %vm1185, %v1122
      %1203 = vst.msk [vmem:[#allocation4 + $0x88] sm:$0xff] %vm1185, %v1124
      %1204 = vst.msk [vmem:[#allocation4 + $0x90] sm:$0xff] %vm1185, %v1126
      %1205 = vst.msk [vmem:[#allocation4 + $0x98] sm:$0xff] %vm1185, %v1128
      %1206 = vst.msk [vmem:[#allocation4 + $0xa0] sm:$0xff] %vm1185, %v1130
      %1207 = vst.msk [vmem:[#allocation4 + $0xa8] sm:$0xff] %vm1185, %v1132
      %1208 = vst.msk [vmem:[#allocation4 + $0xb0] sm:$0xff] %vm1185, %v1134
      %1209 = vst.msk [vmem:[#allocation4 + $0xb8] sm:$0xff] %vm1185, %v1136
      %1210 = vst.msk [vmem:[#allocation4 + $0xc0] sm:$0xff] %vm1185, %v1138
      %1211 = vst.msk [vmem:[#allocation4 + $0xc8] sm:$0xff] %vm1185, %v1140
      %1212 = vst.msk [vmem:[#allocation4 + $0xd0] sm:$0xff] %vm1185, %v1142
      %1213 = vst.msk [vmem:[#allocation4 + $0xd8] sm:$0xff] %vm1185, %v1144
      %1214 = vst.msk [vmem:[#allocation4 + $0xe0] sm:$0xff] %vm1185, %v1146
      %1215 = vst.msk [vmem:[#allocation4 + $0xe8] sm:$0xff] %vm1185, %v1148
      %1216 = vst.msk [vmem:[#allocation4 + $0xf0] sm:$0xff] %vm1185, %v1150
      %1217 = vst.msk [vmem:[#allocation4 + $0xf8] sm:$0xff] %vm1185, %v1152
      %v1218 = vld [vmem:[%s349 + $0x2] sm:$0xff]
      %v1219 = vld [vmem:[%s349 + $0xa] sm:$0xff]
      %v1220 = vld [vmem:[%s349 + $0x1a] sm:$0xff]
      %v1221 = vld [vmem:[%s349 + $0x22] sm:$0xff]
      %v1222 = vld [vmem:[%s349 + $0x32] sm:$0xff]
      %v1223 = vld [vmem:[%s349 + $0x3a] sm:$0xff]
      %v1224 = vld [vmem:[%s349 + $0x4a] sm:$0xff]
      %v1225 = vld [vmem:[%s349 + $0x52] sm:$0xff]
      %v1226 = vld [vmem:[%s349 + $0x62] sm:$0xff]
      %v1227 = vld [vmem:[%s349 + $0x6a] sm:$0xff]
      %v1228 = vld [vmem:[%s349 + $0x7a] sm:$0xff]
      %v1229 = vld [vmem:[%s349 + $0x82] sm:$0xff]
      %v1230 = vld [vmem:[%s349 + $0x92] sm:$0xff]
      %v1231 = vld [vmem:[%s349 + $0x9a] sm:$0xff]
      %v1232 = vld [vmem:[%s349 + $0xaa] sm:$0xff]
      %v1233 = vld [vmem:[%s349 + $0xb2] sm:$0xff]
      %v1234 = vld [vmem:[%s349 + $0xc2] sm:$0xff]
      %v1235 = vld [vmem:[%s349 + $0xca] sm:$0xff]
      %v1236 = vld [vmem:[%s349 + $0xda] sm:$0xff]
      %v1237 = vld [vmem:[%s349 + $0xe2] sm:$0xff]
      %v1238 = vld [vmem:[%s349 + $0xf2] sm:$0xff]
      %v1239 = vld [vmem:[%s349 + $0xfa] sm:$0xff]
      %v1240 = vld [vmem:[%s349 + $0x10a] sm:$0xff]
      %v1241 = vld [vmem:[%s349 + $0x112] sm:$0xff]
      %v1242 = vld [vmem:[%s349 + $0x122] sm:$0xff]
      %v1243 = vld [vmem:[%s349 + $0x12a] sm:$0xff]
      %v1244 = vld [vmem:[%s349 + $0x13a] sm:$0xff]
      %v1245 = vld [vmem:[%s349 + $0x142] sm:$0xff]
      %v1246 = vld [vmem:[%s349 + $0x152] sm:$0xff]
      %v1247 = vld [vmem:[%s349 + $0x15a] sm:$0xff]
      %v1248 = vld [vmem:[%s349 + $0x16a] sm:$0xff]
      %v1249 = vld [vmem:[%s349 + $0x172] sm:$0xff]
      %1282 = vrot.lane.b32.xlu0 %v1218, 20
      %v1283 = vpop.permute.xlu0 %1282
      %1284 = vrot.lane.b32.xlu0 %v1219, 20
      %v1285 = vpop.permute.xlu0 %1284
      %1286 = vrot.lane.b32.xlu0 %v1220, 20
      %v1287 = vpop.permute.xlu0 %1286
      %1288 = vrot.lane.b32.xlu0 %v1221, 20
      %v1289 = vpop.permute.xlu0 %1288
      %1290 = vrot.lane.b32.xlu0 %v1222, 20
      %v1291 = vpop.permute.xlu0 %1290
      %1292 = vrot.lane.b32.xlu0 %v1223, 20
      %v1293 = vpop.permute.xlu0 %1292
      %1294 = vrot.lane.b32.xlu0 %v1224, 20
      %v1295 = vpop.permute.xlu0 %1294
      %1296 = vrot.lane.b32.xlu0 %v1225, 20
      %v1297 = vpop.permute.xlu0 %1296
      %1298 = vrot.lane.b32.xlu0 %v1226, 20
      %v1299 = vpop.permute.xlu0 %1298
      %1300 = vrot.lane.b32.xlu0 %v1227, 20
      %v1301 = vpop.permute.xlu0 %1300
      %1302 = vrot.lane.b32.xlu0 %v1228, 20
      %v1303 = vpop.permute.xlu0 %1302
      %1304 = vrot.lane.b32.xlu0 %v1229, 20
      %v1305 = vpop.permute.xlu0 %1304
      %1306 = vrot.lane.b32.xlu0 %v1230, 20
      %v1307 = vpop.permute.xlu0 %1306
      %1308 = vrot.lane.b32.xlu0 %v1231, 20
      %v1309 = vpop.permute.xlu0 %1308
      %1310 = vrot.lane.b32.xlu0 %v1232, 20
      %v1311 = vpop.permute.xlu0 %1310
      %1312 = vrot.lane.b32.xlu0 %v1233, 20
      %v1313 = vpop.permute.xlu0 %1312
      %1314 = vrot.lane.b32.xlu0 %v1234, 20
      %v1315 = vpop.permute.xlu0 %1314
      %1316 = vrot.lane.b32.xlu0 %v1235, 20
      %v1317 = vpop.permute.xlu0 %1316
      %1318 = vrot.lane.b32.xlu0 %v1236, 20
      %v1319 = vpop.permute.xlu0 %1318
      %1320 = vrot.lane.b32.xlu0 %v1237, 20
      %v1321 = vpop.permute.xlu0 %1320
      %1322 = vrot.lane.b32.xlu0 %v1238, 20
      %v1323 = vpop.permute.xlu0 %1322
      %1324 = vrot.lane.b32.xlu0 %v1239, 20
      %v1325 = vpop.permute.xlu0 %1324
      %1326 = vrot.lane.b32.xlu0 %v1240, 20
      %v1327 = vpop.permute.xlu0 %1326
      %1328 = vrot.lane.b32.xlu0 %v1241, 20
      %v1329 = vpop.permute.xlu0 %1328
      %1330 = vrot.lane.b32.xlu0 %v1242, 20
      %v1331 = vpop.permute.xlu0 %1330
      %1332 = vrot.lane.b32.xlu0 %v1243, 20
      %v1333 = vpop.permute.xlu0 %1332
      %1334 = vrot.lane.b32.xlu0 %v1244, 20
      %v1335 = vpop.permute.xlu0 %1334
      %1336 = vrot.lane.b32.xlu0 %v1245, 20
      %v1337 = vpop.permute.xlu0 %1336
      %1338 = vrot.lane.b32.xlu0 %v1246, 20
      %v1339 = vpop.permute.xlu0 %1338
      %1340 = vrot.lane.b32.xlu0 %v1247, 20
      %v1341 = vpop.permute.xlu0 %1340
      %1342 = vrot.lane.b32.xlu0 %v1248, 20
      %v1343 = vpop.permute.xlu0 %1342
      %1344 = vrot.lane.b32.xlu0 %v1249, 20
      %v1345 = vpop.permute.xlu0 %1344
      %vm1378 = vcmask 195744
      %1379 = vst.msk [vmem:[#allocation4] sm:$0xff] %vm1378, %v1283
      %1380 = vst.msk [vmem:[#allocation4 + $0x8] sm:$0xff] %vm1378, %v1285
      %1381 = vst.msk [vmem:[#allocation4 + $0x10] sm:$0xff] %vm1378, %v1287
      %1382 = vst.msk [vmem:[#allocation4 + $0x18] sm:$0xff] %vm1378, %v1289
      %1383 = vst.msk [vmem:[#allocation4 + $0x20] sm:$0xff] %vm1378, %v1291
      %1384 = vst.msk [vmem:[#allocation4 + $0x28] sm:$0xff] %vm1378, %v1293
      %1385 = vst.msk [vmem:[#allocation4 + $0x30] sm:$0xff] %vm1378, %v1295
      %1386 = vst.msk [vmem:[#allocation4 + $0x38] sm:$0xff] %vm1378, %v1297
      %1387 = vst.msk [vmem:[#allocation4 + $0x40] sm:$0xff] %vm1378, %v1299
      %1388 = vst.msk [vmem:[#allocation4 + $0x48] sm:$0xff] %vm1378, %v1301
      %1389 = vst.msk [vmem:[#allocation4 + $0x50] sm:$0xff] %vm1378, %v1303
      %1390 = vst.msk [vmem:[#allocation4 + $0x58] sm:$0xff] %vm1378, %v1305
      %1391 = vst.msk [vmem:[#allocation4 + $0x60] sm:$0xff] %vm1378, %v1307
      %1392 = vst.msk [vmem:[#allocation4 + $0x68] sm:$0xff] %vm1378, %v1309
      %1393 = vst.msk [vmem:[#allocation4 + $0x70] sm:$0xff] %vm1378, %v1311
      %1394 = vst.msk [vmem:[#allocation4 + $0x78] sm:$0xff] %vm1378, %v1313
      %1395 = vst.msk [vmem:[#allocation4 + $0x80] sm:$0xff] %vm1378, %v1315
      %1396 = vst.msk [vmem:[#allocation4 + $0x88] sm:$0xff] %vm1378, %v1317
      %1397 = vst.msk [vmem:[#allocation4 + $0x90] sm:$0xff] %vm1378, %v1319
      %1398 = vst.msk [vmem:[#allocation4 + $0x98] sm:$0xff] %vm1378, %v1321
      %1399 = vst.msk [vmem:[#allocation4 + $0xa0] sm:$0xff] %vm1378, %v1323
      %1400 = vst.msk [vmem:[#allocation4 + $0xa8] sm:$0xff] %vm1378, %v1325
      %1401 = vst.msk [vmem:[#allocation4 + $0xb0] sm:$0xff] %vm1378, %v1327
      %1402 = vst.msk [vmem:[#allocation4 + $0xb8] sm:$0xff] %vm1378, %v1329
      %1403 = vst.msk [vmem:[#allocation4 + $0xc0] sm:$0xff] %vm1378, %v1331
      %1404 = vst.msk [vmem:[#allocation4 + $0xc8] sm:$0xff] %vm1378, %v1333
      %1405 = vst.msk [vmem:[#allocation4 + $0xd0] sm:$0xff] %vm1378, %v1335
      %1406 = vst.msk [vmem:[#allocation4 + $0xd8] sm:$0xff] %vm1378, %v1337
      %1407 = vst.msk [vmem:[#allocation4 + $0xe0] sm:$0xff] %vm1378, %v1339
      %1408 = vst.msk [vmem:[#allocation4 + $0xe8] sm:$0xff] %vm1378, %v1341
      %1409 = vst.msk [vmem:[#allocation4 + $0xf0] sm:$0xff] %vm1378, %v1343
      %1410 = vst.msk [vmem:[#allocation4 + $0xf8] sm:$0xff] %vm1378, %v1345
      %s1411 = scalar_lea.vmem [#allocation2], 48
      %v1412 = vld [vmem:[%s1411] sm:$0xff]
      %v1413 = vld [vmem:[%s1411 + $0x8] sm:$0xff]
      %v1414 = vld [vmem:[%s1411 + $0x18] sm:$0xff]
      %v1415 = vld [vmem:[%s1411 + $0x20] sm:$0xff]
      %v1416 = vld [vmem:[%s1411 + $0x30] sm:$0xff]
      %v1417 = vld [vmem:[%s1411 + $0x38] sm:$0xff]
      %v1418 = vld [vmem:[%s1411 + $0x48] sm:$0xff]
      %v1419 = vld [vmem:[%s1411 + $0x50] sm:$0xff]
      %v1420 = vld [vmem:[%s1411 + $0x60] sm:$0xff]
      %v1421 = vld [vmem:[%s1411 + $0x68] sm:$0xff]
      %v1422 = vld [vmem:[%s1411 + $0x78] sm:$0xff]
      %v1423 = vld [vmem:[%s1411 + $0x80] sm:$0xff]
      %v1424 = vld [vmem:[%s1411 + $0x90] sm:$0xff]
      %v1425 = vld [vmem:[%s1411 + $0x98] sm:$0xff]
      %v1426 = vld [vmem:[%s1411 + $0xa8] sm:$0xff]
      %v1427 = vld [vmem:[%s1411 + $0xb0] sm:$0xff]
      %v1428 = vld [vmem:[%s1411 + $0xc0] sm:$0xff]
      %v1429 = vld [vmem:[%s1411 + $0xc8] sm:$0xff]
      %v1430 = vld [vmem:[%s1411 + $0xd8] sm:$0xff]
      %v1431 = vld [vmem:[%s1411 + $0xe0] sm:$0xff]
      %v1432 = vld [vmem:[%s1411 + $0xf0] sm:$0xff]
      %v1433 = vld [vmem:[%s1411 + $0xf8] sm:$0xff]
      %v1434 = vld [vmem:[%s1411 + $0x108] sm:$0xff]
      %v1435 = vld [vmem:[%s1411 + $0x110] sm:$0xff]
      %v1436 = vld [vmem:[%s1411 + $0x120] sm:$0xff]
      %v1437 = vld [vmem:[%s1411 + $0x128] sm:$0xff]
      %v1438 = vld [vmem:[%s1411 + $0x138] sm:$0xff]
      %v1439 = vld [vmem:[%s1411 + $0x140] sm:$0xff]
      %v1440 = vld [vmem:[%s1411 + $0x150] sm:$0xff]
      %v1441 = vld [vmem:[%s1411 + $0x158] sm:$0xff]
      %v1442 = vld [vmem:[%s1411 + $0x168] sm:$0xff]
      %v1443 = vld [vmem:[%s1411 + $0x170] sm:$0xff]
      %1476 = vrot.lane.b32.xlu0 %v1412, 24
      %v1477 = vpop.permute.xlu0 %1476
      %1478 = vrot.lane.b32.xlu0 %v1413, 24
      %v1479 = vpop.permute.xlu0 %1478
      %1480 = vrot.lane.b32.xlu0 %v1414, 24
      %v1481 = vpop.permute.xlu0 %1480
      %1482 = vrot.lane.b32.xlu0 %v1415, 24
      %v1483 = vpop.permute.xlu0 %1482
      %1484 = vrot.lane.b32.xlu0 %v1416, 24
      %v1485 = vpop.permute.xlu0 %1484
      %1486 = vrot.lane.b32.xlu0 %v1417, 24
      %v1487 = vpop.permute.xlu0 %1486
      %1488 = vrot.lane.b32.xlu0 %v1418, 24
      %v1489 = vpop.permute.xlu0 %1488
      %1490 = vrot.lane.b32.xlu0 %v1419, 24
      %v1491 = vpop.permute.xlu0 %1490
      %1492 = vrot.lane.b32.xlu0 %v1420, 24
      %v1493 = vpop.permute.xlu0 %1492
      %1494 = vrot.lane.b32.xlu0 %v1421, 24
      %v1495 = vpop.permute.xlu0 %1494
      %1496 = vrot.lane.b32.xlu0 %v1422, 24
      %v1497 = vpop.permute.xlu0 %1496
      %1498 = vrot.lane.b32.xlu0 %v1423, 24
      %v1499 = vpop.permute.xlu0 %1498
      %1500 = vrot.lane.b32.xlu0 %v1424, 24
      %v1501 = vpop.permute.xlu0 %1500
      %1502 = vrot.lane.b32.xlu0 %v1425, 24
      %v1503 = vpop.permute.xlu0 %1502
      %1504 = vrot.lane.b32.xlu0 %v1426, 24
      %v1505 = vpop.permute.xlu0 %1504
      %1506 = vrot.lane.b32.xlu0 %v1427, 24
      %v1507 = vpop.permute.xlu0 %1506
      %1508 = vrot.lane.b32.xlu0 %v1428, 24
      %v1509 = vpop.permute.xlu0 %1508
      %1510 = vrot.lane.b32.xlu0 %v1429, 24
      %v1511 = vpop.permute.xlu0 %1510
      %1512 = vrot.lane.b32.xlu0 %v1430, 24
      %v1513 = vpop.permute.xlu0 %1512
      %1514 = vrot.lane.b32.xlu0 %v1431, 24
      %v1515 = vpop.permute.xlu0 %1514
      %1516 = vrot.lane.b32.xlu0 %v1432, 24
      %v1517 = vpop.permute.xlu0 %1516
      %1518 = vrot.lane.b32.xlu0 %v1433, 24
      %v1519 = vpop.permute.xlu0 %1518
      %1520 = vrot.lane.b32.xlu0 %v1434, 24
      %v1521 = vpop.permute.xlu0 %1520
      %1522 = vrot.lane.b32.xlu0 %v1435, 24
      %v1523 = vpop.permute.xlu0 %1522
      %1524 = vrot.lane.b32.xlu0 %v1436, 24
      %v1525 = vpop.permute.xlu0 %1524
      %1526 = vrot.lane.b32.xlu0 %v1437, 24
      %v1527 = vpop.permute.xlu0 %1526
      %1528 = vrot.lane.b32.xlu0 %v1438, 24
      %v1529 = vpop.permute.xlu0 %1528
      %1530 = vrot.lane.b32.xlu0 %v1439, 24
      %v1531 = vpop.permute.xlu0 %1530
      %1532 = vrot.lane.b32.xlu0 %v1440, 24
      %v1533 = vpop.permute.xlu0 %1532
      %1534 = vrot.lane.b32.xlu0 %v1441, 24
      %v1535 = vpop.permute.xlu0 %1534
      %1536 = vrot.lane.b32.xlu0 %v1442, 24
      %v1537 = vpop.permute.xlu0 %1536
      %1538 = vrot.lane.b32.xlu0 %v1443, 24
      %v1539 = vpop.permute.xlu0 %1538
      %vm1572 = vcmask 228544
      %1573 = vst.msk [vmem:[#allocation4] sm:$0xff] %vm1572, %v1477
      %1574 = vst.msk [vmem:[#allocation4 + $0x8] sm:$0xff] %vm1572, %v1479
      %1575 = vst.msk [vmem:[#allocation4 + $0x10] sm:$0xff] %vm1572, %v1481
      %1576 = vst.msk [vmem:[#allocation4 + $0x18] sm:$0xff] %vm1572, %v1483
      %1577 = vst.msk [vmem:[#allocation4 + $0x20] sm:$0xff] %vm1572, %v1485
      %1578 = vst.msk [vmem:[#allocation4 + $0x28] sm:$0xff] %vm1572, %v1487
      %1579 = vst.msk [vmem:[#allocation4 + $0x30] sm:$0xff] %vm1572, %v1489
      %1580 = vst.msk [vmem:[#allocation4 + $0x38] sm:$0xff] %vm1572, %v1491
      %1581 = vst.msk [vmem:[#allocation4 + $0x40] sm:$0xff] %vm1572, %v1493
      %1582 = vst.msk [vmem:[#allocation4 + $0x48] sm:$0xff] %vm1572, %v1495
      %1583 = vst.msk [vmem:[#allocation4 + $0x50] sm:$0xff] %vm1572, %v1497
      %1584 = vst.msk [vmem:[#allocation4 + $0x58] sm:$0xff] %vm1572, %v1499
      %1585 = vst.msk [vmem:[#allocation4 + $0x60] sm:$0xff] %vm1572, %v1501
      %1586 = vst.msk [vmem:[#allocation4 + $0x68] sm:$0xff] %vm1572, %v1503
      %1587 = vst.msk [vmem:[#allocation4 + $0x70] sm:$0xff] %vm1572, %v1505
      %1588 = vst.msk [vmem:[#allocation4 + $0x78] sm:$0xff] %vm1572, %v1507
      %1589 = vst.msk [vmem:[#allocation4 + $0x80] sm:$0xff] %vm1572, %v1509
      %1590 = vst.msk [vmem:[#allocation4 + $0x88] sm:$0xff] %vm1572, %v1511
      %1591 = vst.msk [vmem:[#allocation4 + $0x90] sm:$0xff] %vm1572, %v1513
      %1592 = vst.msk [vmem:[#allocation4 + $0x98] sm:$0xff] %vm1572, %v1515
      %1593 = vst.msk [vmem:[#allocation4 + $0xa0] sm:$0xff] %vm1572, %v1517
      %1594 = vst.msk [vmem:[#allocation4 + $0xa8] sm:$0xff] %vm1572, %v1519
      %1595 = vst.msk [vmem:[#allocation4 + $0xb0] sm:$0xff] %vm1572, %v1521
      %1596 = vst.msk [vmem:[#allocation4 + $0xb8] sm:$0xff] %vm1572, %v1523
      %1597 = vst.msk [vmem:[#allocation4 + $0xc0] sm:$0xff] %vm1572, %v1525
      %1598 = vst.msk [vmem:[#allocation4 + $0xc8] sm:$0xff] %vm1572, %v1527
      %1599 = vst.msk [vmem:[#allocation4 + $0xd0] sm:$0xff] %vm1572, %v1529
      %1600 = vst.msk [vmem:[#allocation4 + $0xd8] sm:$0xff] %vm1572, %v1531
      %1601 = vst.msk [vmem:[#allocation4 + $0xe0] sm:$0xff] %vm1572, %v1533
      %1602 = vst.msk [vmem:[#allocation4 + $0xe8] sm:$0xff] %vm1572, %v1535
      %1603 = vst.msk [vmem:[#allocation4 + $0xf0] sm:$0xff] %vm1572, %v1537
      %1604 = vst.msk [vmem:[#allocation4 + $0xf8] sm:$0xff] %vm1572, %v1539
      %v1605 = vld [vmem:[%s1411 + $0x1] sm:$0xff]
      %v1606 = vld [vmem:[%s1411 + $0x9] sm:$0xff]
      %v1607 = vld [vmem:[%s1411 + $0x19] sm:$0xff]
      %v1608 = vld [vmem:[%s1411 + $0x21] sm:$0xff]
      %v1609 = vld [vmem:[%s1411 + $0x31] sm:$0xff]
      %v1610 = vld [vmem:[%s1411 + $0x39] sm:$0xff]
      %v1611 = vld [vmem:[%s1411 + $0x49] sm:$0xff]
      %v1612 = vld [vmem:[%s1411 + $0x51] sm:$0xff]
      %v1613 = vld [vmem:[%s1411 + $0x61] sm:$0xff]
      %v1614 = vld [vmem:[%s1411 + $0x69] sm:$0xff]
      %v1615 = vld [vmem:[%s1411 + $0x79] sm:$0xff]
      %v1616 = vld [vmem:[%s1411 + $0x81] sm:$0xff]
      %v1617 = vld [vmem:[%s1411 + $0x91] sm:$0xff]
      %v1618 = vld [vmem:[%s1411 + $0x99] sm:$0xff]
      %v1619 = vld [vmem:[%s1411 + $0xa9] sm:$0xff]
      %v1620 = vld [vmem:[%s1411 + $0xb1] sm:$0xff]
      %v1621 = vld [vmem:[%s1411 + $0xc1] sm:$0xff]
      %v1622 = vld [vmem:[%s1411 + $0xc9] sm:$0xff]
      %v1623 = vld [vmem:[%s1411 + $0xd9] sm:$0xff]
      %v1624 = vld [vmem:[%s1411 + $0xe1] sm:$0xff]
      %v1625 = vld [vmem:[%s1411 + $0xf1] sm:$0xff]
      %v1626 = vld [vmem:[%s1411 + $0xf9] sm:$0xff]
      %v1627 = vld [vmem:[%s1411 + $0x109] sm:$0xff]
      %v1628 = vld [vmem:[%s1411 + $0x111] sm:$0xff]
      %v1629 = vld [vmem:[%s1411 + $0x121] sm:$0xff]
      %v1630 = vld [vmem:[%s1411 + $0x129] sm:$0xff]
      %v1631 = vld [vmem:[%s1411 + $0x139] sm:$0xff]
      %v1632 = vld [vmem:[%s1411 + $0x141] sm:$0xff]
      %v1633 = vld [vmem:[%s1411 + $0x151] sm:$0xff]
      %v1634 = vld [vmem:[%s1411 + $0x159] sm:$0xff]
      %v1635 = vld [vmem:[%s1411 + $0x169] sm:$0xff]
      %v1636 = vld [vmem:[%s1411 + $0x171] sm:$0xff]
      %1669 = vrot.lane.b32.xlu0 %v1605, 28
      %v1670 = vpop.permute.xlu0 %1669
      %1671 = vrot.lane.b32.xlu0 %v1606, 28
      %v1672 = vpop.permute.xlu0 %1671
      %1673 = vrot.lane.b32.xlu0 %v1607, 28
      %v1674 = vpop.permute.xlu0 %1673
      %1675 = vrot.lane.b32.xlu0 %v1608, 28
      %v1676 = vpop.permute.xlu0 %1675
      %1677 = vrot.lane.b32.xlu0 %v1609, 28
      %v1678 = vpop.permute.xlu0 %1677
      %1679 = vrot.lane.b32.xlu0 %v1610, 28
      %v1680 = vpop.permute.xlu0 %1679
      %1681 = vrot.lane.b32.xlu0 %v1611, 28
      %v1682 = vpop.permute.xlu0 %1681
      %1683 = vrot.lane.b32.xlu0 %v1612, 28
      %v1684 = vpop.permute.xlu0 %1683
      %1685 = vrot.lane.b32.xlu0 %v1613, 28
      %v1686 = vpop.permute.xlu0 %1685
      %1687 = vrot.lane.b32.xlu0 %v1614, 28
      %v1688 = vpop.permute.xlu0 %1687
      %1689 = vrot.lane.b32.xlu0 %v1615, 28
      %v1690 = vpop.permute.xlu0 %1689
      %1691 = vrot.lane.b32.xlu0 %v1616, 28
      %v1692 = vpop.permute.xlu0 %1691
      %1693 = vrot.lane.b32.xlu0 %v1617, 28
      %v1694 = vpop.permute.xlu0 %1693
      %1695 = vrot.lane.b32.xlu0 %v1618, 28
      %v1696 = vpop.permute.xlu0 %1695
      %1697 = vrot.lane.b32.xlu0 %v1619, 28
      %v1698 = vpop.permute.xlu0 %1697
      %1699 = vrot.lane.b32.xlu0 %v1620, 28
      %v1700 = vpop.permute.xlu0 %1699
      %1701 = vrot.lane.b32.xlu0 %v1621, 28
      %v1702 = vpop.permute.xlu0 %1701
      %1703 = vrot.lane.b32.xlu0 %v1622, 28
      %v1704 = vpop.permute.xlu0 %1703
      %1705 = vrot.lane.b32.xlu0 %v1623, 28
      %v1706 = vpop.permute.xlu0 %1705
      %1707 = vrot.lane.b32.xlu0 %v1624, 28
      %v1708 = vpop.permute.xlu0 %1707
      %1709 = vrot.lane.b32.xlu0 %v1625, 28
      %v1710 = vpop.permute.xlu0 %1709
      %1711 = vrot.lane.b32.xlu0 %v1626, 28
      %v1712 = vpop.permute.xlu0 %1711
      %1713 = vrot.lane.b32.xlu0 %v1627, 28
      %v1714 = vpop.permute.xlu0 %1713
      %1715 = vrot.lane.b32.xlu0 %v1628, 28
      %v1716 = vpop.permute.xlu0 %1715
      %1717 = vrot.lane.b32.xlu0 %v1629, 28
      %v1718 = vpop.permute.xlu0 %1717
      %1719 = vrot.lane.b32.xlu0 %v1630, 28
      %v1720 = vpop.permute.xlu0 %1719
      %1721 = vrot.lane.b32.xlu0 %v1631, 28
      %v1722 = vpop.permute.xlu0 %1721
      %1723 = vrot.lane.b32.xlu0 %v1632, 28
      %v1724 = vpop.permute.xlu0 %1723
      %1725 = vrot.lane.b32.xlu0 %v1633, 28
      %v1726 = vpop.permute.xlu0 %1725
      %1727 = vrot.lane.b32.xlu0 %v1634, 28
      %v1728 = vpop.permute.xlu0 %1727
      %1729 = vrot.lane.b32.xlu0 %v1635, 28
      %v1730 = vpop.permute.xlu0 %1729
      %1731 = vrot.lane.b32.xlu0 %v1636, 28
      %v1732 = vpop.permute.xlu0 %1731
      %vm1765 = vcmask 261344
      %1766 = vst.msk [vmem:[#allocation4] sm:$0xff] %vm1765, %v1670
      %1767 = vst.msk [vmem:[#allocation4 + $0x8] sm:$0xff] %vm1765, %v1672
      %1768 = vst.msk [vmem:[#allocation4 + $0x10] sm:$0xff] %vm1765, %v1674
      %1769 = vst.msk [vmem:[#allocation4 + $0x18] sm:$0xff] %vm1765, %v1676
      %1770 = vst.msk [vmem:[#allocation4 + $0x20] sm:$0xff] %vm1765, %v1678
      %1771 = vst.msk [vmem:[#allocation4 + $0x28] sm:$0xff] %vm1765, %v1680
      %1772 = vst.msk [vmem:[#allocation4 + $0x30] sm:$0xff] %vm1765, %v1682
      %1773 = vst.msk [vmem:[#allocation4 + $0x38] sm:$0xff] %vm1765, %v1684
      %1774 = vst.msk [vmem:[#allocation4 + $0x40] sm:$0xff] %vm1765, %v1686
      %1775 = vst.msk [vmem:[#allocation4 + $0x48] sm:$0xff] %vm1765, %v1688
      %1776 = vst.msk [vmem:[#allocation4 + $0x50] sm:$0xff] %vm1765, %v1690
      %1777 = vst.msk [vmem:[#allocation4 + $0x58] sm:$0xff] %vm1765, %v1692
      %1778 = vst.msk [vmem:[#allocation4 + $0x60] sm:$0xff] %vm1765, %v1694
      %1779 = vst.msk [vmem:[#allocation4 + $0x68] sm:$0xff] %vm1765, %v1696
      %1780 = vst.msk [vmem:[#allocation4 + $0x70] sm:$0xff] %vm1765, %v1698
      %1781 = vst.msk [vmem:[#allocation4 + $0x78] sm:$0xff] %vm1765, %v1700
      %1782 = vst.msk [vmem:[#allocation4 + $0x80] sm:$0xff] %vm1765, %v1702
      %1783 = vst.msk [vmem:[#allocation4 + $0x88] sm:$0xff] %vm1765, %v1704
      %1784 = vst.msk [vmem:[#allocation4 + $0x90] sm:$0xff] %vm1765, %v1706
      %1785 = vst.msk [vmem:[#allocation4 + $0x98] sm:$0xff] %vm1765, %v1708
      %1786 = vst.msk [vmem:[#allocation4 + $0xa0] sm:$0xff] %vm1765, %v1710
      %1787 = vst.msk [vmem:[#allocation4 + $0xa8] sm:$0xff] %vm1765, %v1712
      %1788 = vst.msk [vmem:[#allocation4 + $0xb0] sm:$0xff] %vm1765, %v1714
      %1789 = vst.msk [vmem:[#allocation4 + $0xb8] sm:$0xff] %vm1765, %v1716
      %1790 = vst.msk [vmem:[#allocation4 + $0xc0] sm:$0xff] %vm1765, %v1718
      %1791 = vst.msk [vmem:[#allocation4 + $0xc8] sm:$0xff] %vm1765, %v1720
      %1792 = vst.msk [vmem:[#allocation4 + $0xd0] sm:$0xff] %vm1765, %v1722
      %1793 = vst.msk [vmem:[#allocation4 + $0xd8] sm:$0xff] %vm1765, %v1724
      %1794 = vst.msk [vmem:[#allocation4 + $0xe0] sm:$0xff] %vm1765, %v1726
      %1795 = vst.msk [vmem:[#allocation4 + $0xe8] sm:$0xff] %vm1765, %v1728
      %1796 = vst.msk [vmem:[#allocation4 + $0xf0] sm:$0xff] %vm1765, %v1730
      %1797 = vst.msk [vmem:[#allocation4 + $0xf8] sm:$0xff] %vm1765, %v1732
      %v1798 = vld [vmem:[%s1411 + $0x2] sm:$0xff]
      %v1799 = vld [vmem:[%s1411 + $0xa] sm:$0xff]
      %v1800 = vld [vmem:[%s1411 + $0x1a] sm:$0xff]
      %v1801 = vld [vmem:[%s1411 + $0x22] sm:$0xff]
      %v1802 = vld [vmem:[%s1411 + $0x32] sm:$0xff]
      %v1803 = vld [vmem:[%s1411 + $0x3a] sm:$0xff]
      %v1804 = vld [vmem:[%s1411 + $0x4a] sm:$0xff]
      %v1805 = vld [vmem:[%s1411 + $0x52] sm:$0xff]
      %v1806 = vld [vmem:[%s1411 + $0x62] sm:$0xff]
      %v1807 = vld [vmem:[%s1411 + $0x6a] sm:$0xff]
      %v1808 = vld [vmem:[%s1411 + $0x7a] sm:$0xff]
      %v1809 = vld [vmem:[%s1411 + $0x82] sm:$0xff]
      %v1810 = vld [vmem:[%s1411 + $0x92] sm:$0xff]
      %v1811 = vld [vmem:[%s1411 + $0x9a] sm:$0xff]
      %v1812 = vld [vmem:[%s1411 + $0xaa] sm:$0xff]
      %v1813 = vld [vmem:[%s1411 + $0xb2] sm:$0xff]
      %v1814 = vld [vmem:[%s1411 + $0xc2] sm:$0xff]
      %v1815 = vld [vmem:[%s1411 + $0xca] sm:$0xff]
      %v1816 = vld [vmem:[%s1411 + $0xda] sm:$0xff]
      %v1817 = vld [vmem:[%s1411 + $0xe2] sm:$0xff]
      %v1818 = vld [vmem:[%s1411 + $0xf2] sm:$0xff]
      %v1819 = vld [vmem:[%s1411 + $0xfa] sm:$0xff]
      %v1820 = vld [vmem:[%s1411 + $0x10a] sm:$0xff]
      %v1821 = vld [vmem:[%s1411 + $0x112] sm:$0xff]
      %v1822 = vld [vmem:[%s1411 + $0x122] sm:$0xff]
      %v1823 = vld [vmem:[%s1411 + $0x12a] sm:$0xff]
      %v1824 = vld [vmem:[%s1411 + $0x13a] sm:$0xff]
      %v1825 = vld [vmem:[%s1411 + $0x142] sm:$0xff]
      %v1826 = vld [vmem:[%s1411 + $0x152] sm:$0xff]
      %v1827 = vld [vmem:[%s1411 + $0x15a] sm:$0xff]
      %v1828 = vld [vmem:[%s1411 + $0x16a] sm:$0xff]
      %v1829 = vld [vmem:[%s1411 + $0x172] sm:$0xff]
      %1862 = vrot.lane.b32.xlu0 %v1798, 32
      %v1863 = vpop.permute.xlu0 %1862
      %1864 = vrot.lane.b32.xlu0 %v1799, 32
      %v1865 = vpop.permute.xlu0 %1864
      %1866 = vrot.lane.b32.xlu0 %v1800, 32
      %v1867 = vpop.permute.xlu0 %1866
      %1868 = vrot.lane.b32.xlu0 %v1801, 32
      %v1869 = vpop.permute.xlu0 %1868
      %1870 = vrot.lane.b32.xlu0 %v1802, 32
      %v1871 = vpop.permute.xlu0 %1870
      %1872 = vrot.lane.b32.xlu0 %v1803, 32
      %v1873 = vpop.permute.xlu0 %1872
      %1874 = vrot.lane.b32.xlu0 %v1804, 32
      %v1875 = vpop.permute.xlu0 %1874
      %1876 = vrot.lane.b32.xlu0 %v1805, 32
      %v1877 = vpop.permute.xlu0 %1876
      %1878 = vrot.lane.b32.xlu0 %v1806, 32
      %v1879 = vpop.permute.xlu0 %1878
      %1880 = vrot.lane.b32.xlu0 %v1807, 32
      %v1881 = vpop.permute.xlu0 %1880
      %1882 = vrot.lane.b32.xlu0 %v1808, 32
      %v1883 = vpop.permute.xlu0 %1882
      %1884 = vrot.lane.b32.xlu0 %v1809, 32
      %v1885 = vpop.permute.xlu0 %1884
      %1886 = vrot.lane.b32.xlu0 %v1810, 32
      %v1887 = vpop.permute.xlu0 %1886
      %1888 = vrot.lane.b32.xlu0 %v1811, 32
      %v1889 = vpop.permute.xlu0 %1888
      %1890 = vrot.lane.b32.xlu0 %v1812, 32
      %v1891 = vpop.permute.xlu0 %1890
      %1892 = vrot.lane.b32.xlu0 %v1813, 32
      %v1893 = vpop.permute.xlu0 %1892
      %1894 = vrot.lane.b32.xlu0 %v1814, 32
      %v1895 = vpop.permute.xlu0 %1894
      %1896 = vrot.lane.b32.xlu0 %v1815, 32
      %v1897 = vpop.permute.xlu0 %1896
      %1898 = vrot.lane.b32.xlu0 %v1816, 32
      %v1899 = vpop.permute.xlu0 %1898
      %1900 = vrot.lane.b32.xlu0 %v1817, 32
      %v1901 = vpop.permute.xlu0 %1900
      %1902 = vrot.lane.b32.xlu0 %v1818, 32
      %v1903 = vpop.permute.xlu0 %1902
      %1904 = vrot.lane.b32.xlu0 %v1819, 32
      %v1905 = vpop.permute.xlu0 %1904
      %1906 = vrot.lane.b32.xlu0 %v1820, 32
      %v1907 = vpop.permute.xlu0 %1906
      %1908 = vrot.lane.b32.xlu0 %v1821, 32
      %v1909 = vpop.permute.xlu0 %1908
      %1910 = vrot.lane.b32.xlu0 %v1822, 32
      %v1911 = vpop.permute.xlu0 %1910
      %1912 = vrot.lane.b32.xlu0 %v1823, 32
      %v1913 = vpop.permute.xlu0 %1912
      %1914 = vrot.lane.b32.xlu0 %v1824, 32
      %v1915 = vpop.permute.xlu0 %1914
      %1916 = vrot.lane.b32.xlu0 %v1825, 32
      %v1917 = vpop.permute.xlu0 %1916
      %1918 = vrot.lane.b32.xlu0 %v1826, 32
      %v1919 = vpop.permute.xlu0 %1918
      %1920 = vrot.lane.b32.xlu0 %v1827, 32
      %v1921 = vpop.permute.xlu0 %1920
      %1922 = vrot.lane.b32.xlu0 %v1828, 32
      %v1923 = vpop.permute.xlu0 %1922
      %1924 = vrot.lane.b32.xlu0 %v1829, 32
      %v1925 = vpop.permute.xlu0 %1924
      %vm1958 = vcmask 294144
      %1959 = vst.msk [vmem:[#allocation4] sm:$0xff] %vm1958, %v1863
      %1960 = vst.msk [vmem:[#allocation4 + $0x8] sm:$0xff] %vm1958, %v1865
      %1961 = vst.msk [vmem:[#allocation4 + $0x10] sm:$0xff] %vm1958, %v1867
      %1962 = vst.msk [vmem:[#allocation4 + $0x18] sm:$0xff] %vm1958, %v1869
      %1963 = vst.msk [vmem:[#allocation4 + $0x20] sm:$0xff] %vm1958, %v1871
      %1964 = vst.msk [vmem:[#allocation4 + $0x28] sm:$0xff] %vm1958, %v1873
      %1965 = vst.msk [vmem:[#allocation4 + $0x30] sm:$0xff] %vm1958, %v1875
      %1966 = vst.msk [vmem:[#allocation4 + $0x38] sm:$0xff] %vm1958, %v1877
      %1967 = vst.msk [vmem:[#allocation4 + $0x40] sm:$0xff] %vm1958, %v1879
      %1968 = vst.msk [vmem:[#allocation4 + $0x48] sm:$0xff] %vm1958, %v1881
      %1969 = vst.msk [vmem:[#allocation4 + $0x50] sm:$0xff] %vm1958, %v1883
      %1970 = vst.msk [vmem:[#allocation4 + $0x58] sm:$0xff] %vm1958, %v1885
      %1971 = vst.msk [vmem:[#allocation4 + $0x60] sm:$0xff] %vm1958, %v1887
      %1972 = vst.msk [vmem:[#allocation4 + $0x68] sm:$0xff] %vm1958, %v1889
      %1973 = vst.msk [vmem:[#allocation4 + $0x70] sm:$0xff] %vm1958, %v1891
      %1974 = vst.msk [vmem:[#allocation4 + $0x78] sm:$0xff] %vm1958, %v1893
      %1975 = vst.msk [vmem:[#allocation4 + $0x80] sm:$0xff] %vm1958, %v1895
      %1976 = vst.msk [vmem:[#allocation4 + $0x88] sm:$0xff] %vm1958, %v1897
      %1977 = vst.msk [vmem:[#allocation4 + $0x90] sm:$0xff] %vm1958, %v1899
      %1978 = vst.msk [vmem:[#allocation4 + $0x98] sm:$0xff] %vm1958, %v1901
      %1979 = vst.msk [vmem:[#allocation4 + $0xa0] sm:$0xff] %vm1958, %v1903
      %1980 = vst.msk [vmem:[#allocation4 + $0xa8] sm:$0xff] %vm1958, %v1905
      %1981 = vst.msk [vmem:[#allocation4 + $0xb0] sm:$0xff] %vm1958, %v1907
      %1982 = vst.msk [vmem:[#allocation4 + $0xb8] sm:$0xff] %vm1958, %v1909
      %1983 = vst.msk [vmem:[#allocation4 + $0xc0] sm:$0xff] %vm1958, %v1911
      %1984 = vst.msk [vmem:[#allocation4 + $0xc8] sm:$0xff] %vm1958, %v1913
      %1985 = vst.msk [vmem:[#allocation4 + $0xd0] sm:$0xff] %vm1958, %v1915
      %1986 = vst.msk [vmem:[#allocation4 + $0xd8] sm:$0xff] %vm1958, %v1917
      %1987 = vst.msk [vmem:[#allocation4 + $0xe0] sm:$0xff] %vm1958, %v1919
      %1988 = vst.msk [vmem:[#allocation4 + $0xe8] sm:$0xff] %vm1958, %v1921
      %1989 = vst.msk [vmem:[#allocation4 + $0xf0] sm:$0xff] %vm1958, %v1923
      %1990 = vst.msk [vmem:[#allocation4 + $0xf8] sm:$0xff] %vm1958, %v1925
      %v1991 = vld [vmem:[#allocation4] sm:$0xff]
      %v1992 = vld [vmem:[#allocation4 + $0x8] sm:$0xff]
      %v1993 = vld [vmem:[#allocation4 + $0x10] sm:$0xff]
      %v1994 = vld [vmem:[#allocation4 + $0x18] sm:$0xff]
      %v1995 = vld [vmem:[#allocation4 + $0x20] sm:$0xff]
      %v1996 = vld [vmem:[#allocation4 + $0x28] sm:$0xff]
      %v1997 = vld [vmem:[#allocation4 + $0x30] sm:$0xff]
      %v1998 = vld [vmem:[#allocation4 + $0x38] sm:$0xff]
      %v1999 = vld [vmem:[#allocation4 + $0x40] sm:$0xff]
      %v2000 = vld [vmem:[#allocation4 + $0x48] sm:$0xff]
      %v2001 = vld [vmem:[#allocation4 + $0x50] sm:$0xff]
      %v2002 = vld [vmem:[#allocation4 + $0x58] sm:$0xff]
      %v2003 = vld [vmem:[#allocation4 + $0x60] sm:$0xff]
      %v2004 = vld [vmem:[#allocation4 + $0x68] sm:$0xff]
      %v2005 = vld [vmem:[#allocation4 + $0x70] sm:$0xff]
      %v2006 = vld [vmem:[#allocation4 + $0x78] sm:$0xff]
      %v2007 = vld [vmem:[#allocation4 + $0x80] sm:$0xff]
      %v2008 = vld [vmem:[#allocation4 + $0x88] sm:$0xff]
      %v2009 = vld [vmem:[#allocation4 + $0x90] sm:$0xff]
      %v2010 = vld [vmem:[#allocation4 + $0x98] sm:$0xff]
      %v2011 = vld [vmem:[#allocation4 + $0xa0] sm:$0xff]
      %v2012 = vld [vmem:[#allocation4 + $0xa8] sm:$0xff]
      %v2013 = vld [vmem:[#allocation4 + $0xb0] sm:$0xff]
      %v2014 = vld [vmem:[#allocation4 + $0xb8] sm:$0xff]
      %v2015 = vld [vmem:[#allocation4 + $0xc0] sm:$0xff]
      %v2016 = vld [vmem:[#allocation4 + $0xc8] sm:$0xff]
      %v2017 = vld [vmem:[#allocation4 + $0xd0] sm:$0xff]
      %v2018 = vld [vmem:[#allocation4 + $0xd8] sm:$0xff]
      %v2019 = vld [vmem:[#allocation4 + $0xe0] sm:$0xff]
      %v2020 = vld [vmem:[#allocation4 + $0xe8] sm:$0xff]
      %v2021 = vld [vmem:[#allocation4 + $0xf0] sm:$0xff]
      %v2022 = vld [vmem:[#allocation4 + $0xf8] sm:$0xff]
      %v2023 = vld [vmem:[%s1] sm:$0xff]
      %v2024 = vld [vmem:[%s1 + $0x8] sm:$0xff]
      %v2025 = vld [vmem:[%s1 + $0x10] sm:$0xff]
      %v2026 = vld [vmem:[%s1 + $0x18] sm:$0xff]
      %v2027 = vld [vmem:[%s1 + $0x20] sm:$0xf]
      %v2028 = vld [vmem:[%s2] sm:$0x1]
      %v2030 = vlaneseq
      %v2031 = vshrl.u32 %v2030, 7
      %v2032 = vsub.s32 0, %v2031
      %v2033 = vrot.slane %v2028, %v2032
      %vm2035 = vcmask 293888
      %v2037 = vsel %vm2035, %v1991, 0
      %v2040 = vsel %vm2035, %v1992, 0
      %v2043 = vsel %vm2035, %v1993, 0
      %v2046 = vsel %vm2035, %v1994, 0
      %v2049 = vsel %vm2035, %v1995, 0
      %v2052 = vsel %vm2035, %v1996, 0
      %v2055 = vsel %vm2035, %v1997, 0
      %v2058 = vsel %vm2035, %v1998, 0
      %v2061 = vsel %vm2035, %v1999, 0
      %v2064 = vsel %vm2035, %v2000, 0
      %v2067 = vsel %vm2035, %v2001, 0
      %v2070 = vsel %vm2035, %v2002, 0
      %v2073 = vsel %vm2035, %v2003, 0
      %v2076 = vsel %vm2035, %v2004, 0
      %v2079 = vsel %vm2035, %v2005, 0
      %v2082 = vsel %vm2035, %v2006, 0
      %v2085 = vsel %vm2035, %v2007, 0
      %v2088 = vsel %vm2035, %v2008, 0
      %v2091 = vsel %vm2035, %v2009, 0
      %v2094 = vsel %vm2035, %v2010, 0
      %v2097 = vsel %vm2035, %v2011, 0
      %v2100 = vsel %vm2035, %v2012, 0
      %v2103 = vsel %vm2035, %v2013, 0
      %v2106 = vsel %vm2035, %v2014, 0
      %v2109 = vsel %vm2035, %v2015, 0
      %v2112 = vsel %vm2035, %v2016, 0
      %v2115 = vsel %vm2035, %v2017, 0
      %v2118 = vsel %vm2035, %v2018, 0
      %v2121 = vsel %vm2035, %v2019, 0
      %v2124 = vsel %vm2035, %v2020, 0
      %v2127 = vsel %vm2035, %v2021, 0
      %v2130 = vsel %vm2035, %v2022, 0
      %vm2132 = vcmask 1043456
      %v2134 = vsel %vm2132, %v2027, 0
      %2136 = vmatprep.subr.mxu0 0.0
      %2137 = vmatpush1.msra.mxu0 %v2023
      %2138 = vmatprep.subr.mxu0 0.0
      %2139 = vmatpush1.msra.mxu0 %v2024
      %2140 = vmatprep.subr.mxu0 0.0
      %2141 = vmatpush1.msra.mxu0 %v2025
      %2142 = vmatprep.subr.mxu0 0.0
      %2143 = vmatpush1.msra.mxu0 %v2026
      %2144 = vmatprep.subr.mxu0 0.0
      %2145 = vmatpush1.msra.mxu0 %v2134
      %2146 = vmatprep.subr.mxu0 0.0
      %2147 = vmatpush1.msra.mxu0 0.0
      %2148 = vmatprep.subr.mxu0 0.0
      %2149 = vmatpush1.msra.mxu0 0.0
      %2150 = vmatprep.subr.mxu0 0.0
      %2151 = vmatpush1.msra.mxu0 0.0
      %2152 = vmatprep.subr.mxu0 0.0
      %2153 = vmatpush1.msra.mxu0 0.0
      %2154 = vmatprep.subr.mxu0 0.0
      %2155 = vmatpush1.msra.mxu0 0.0
      %2156 = vmatprep.subr.mxu0 0.0
      %2157 = vmatpush1.msra.mxu0 0.0
      %2158 = vmatprep.subr.mxu0 0.0
      %2159 = vmatpush1.msra.mxu0 0.0
      %2160 = vmatprep.subr.mxu0 0.0
      %2161 = vmatpush1.msra.mxu0 0.0
      %2162 = vmatprep.subr.mxu0 0.0
      %2163 = vmatpush1.msra.mxu0 0.0
      %2164 = vmatprep.subr.mxu0 0.0
      %2165 = vmatpush1.msra.mxu0 0.0
      %2166 = vmatprep.subr.mxu0 0.0
      %2167 = vmatpush1.msra.mxu0 0.0
      %2168 = vmatprep.subr.mxu0 0.0
      %2169 = vmatpush1.msra.mxu0 0.0
      %2170 = vmatprep.subr.mxu0 0.0
      %2171 = vmatpush1.msra.mxu0 0.0
      %2172 = vmatprep.subr.mxu0 0.0
      %2173 = vmatpush1.msra.mxu0 0.0
      %2174 = vmatprep.subr.mxu0 0.0
      %2175 = vmatpush1.msra.mxu0 0.0
      %2176 = vmatprep.subr.mxu0 0.0
      %2177 = vmatpush1.msra.mxu0 0.0
      %2178 = vmatprep.subr.mxu0 0.0
      %2179 = vmatpush1.msra.mxu0 0.0
      %2180 = vmatprep.subr.mxu0 0.0
      %2181 = vmatpush1.msra.mxu0 0.0
      %2182 = vmatprep.subr.mxu0 0.0
      %2183 = vmatpush1.msra.mxu0 0.0
      %2184 = vmatprep.subr.mxu0 0.0
      %2185 = vmatpush1.msra.mxu0 0.0
      %2186 = vmatprep.subr.mxu0 0.0
      %2187 = vmatpush1.msra.mxu0 0.0
      %2188 = vmatprep.subr.mxu0 0.0
      %2189 = vmatpush1.msra.mxu0 0.0
      %2190 = vmatprep.subr.mxu0 0.0
      %2191 = vmatpush1.msra.mxu0 0.0
      %2192 = vmatprep.subr.mxu0 0.0
      %2193 = vmatpush1.msra.mxu0 0.0
      %2194 = vmatprep.subr.mxu0 0.0
      %2195 = vmatpush1.msra.mxu0 0.0
      %2196 = vmatprep.subr.mxu0 0.0
      %2197 = vmatpush1.msra.mxu0 0.0
      %2198 = vmatprep.subr.mxu0 0.0
      %2199 = vmatpush1.msra.mxu0 0.0
      %2200 = vmatprep.mubr.f32.mxu0 0.0
      %2201 = vmatmul.mubr.f32.gmra.mrb[0].mxu0 %v2037
      %v2202 = vpop.f32.mrb[0].mxu0
      %v2203 = vadd.f32 %v2033, %v2202
      %v2204 = vpop.f32.mrb[0].mxu0
      %2205 = vmatprep.mubr.f32.mxu0 0.0
      %2206 = vmatmul.mubr.f32.gmra.mrb[0].mxu0 %v2040
      %v2207 = vpop.f32.mrb[0].mxu0
      %v2208 = vadd.f32 %v2033, %v2207
      %v2209 = vpop.f32.mrb[0].mxu0
      %2210 = vmatprep.mubr.f32.mxu0 0.0
      %2211 = vmatmul.mubr.f32.gmra.mrb[0].mxu0 %v2043
      %v2212 = vpop.f32.mrb[0].mxu0
      %v2213 = vadd.f32 %v2033, %v2212
      %v2214 = vpop.f32.mrb[0].mxu0
      %2215 = vmatprep.mubr.f32.mxu0 0.0
      %2216 = vmatmul.mubr.f32.gmra.mrb[0].mxu0 %v2046
      %v2217 = vpop.f32.mrb[0].mxu0
      %v2218 = vadd.f32 %v2033, %v2217
      %v2219 = vpop.f32.mrb[0].mxu0
      %2220 = vmatprep.mubr.f32.mxu0 0.0
      %2221 = vmatmul.mubr.f32.gmra.mrb[0].mxu0 %v2049
      %v2222 = vpop.f32.mrb[0].mxu0
      %v2223 = vadd.f32 %v2033, %v2222
      %v2224 = vpop.f32.mrb[0].mxu0
      %2225 = vmatprep.mubr.f32.mxu0 0.0
      %2226 = vmatmul.mubr.f32.gmra.mrb[0].mxu0 %v2052
      %v2227 = vpop.f32.mrb[0].mxu0
      %v2228 = vadd.f32 %v2033, %v2227
      %v2229 = vpop.f32.mrb[0].mxu0
      %2230 = vmatprep.mubr.f32.mxu0 0.0
      %2231 = vmatmul.mubr.f32.gmra.mrb[0].mxu0 %v2055
      %v2232 = vpop.f32.mrb[0].mxu0
      %v2233 = vadd.f32 %v2033, %v2232
      %v2234 = vpop.f32.mrb[0].mxu0
      %2235 = vmatprep.mubr.f32.mxu0 0.0
      %2236 = vmatmul.mubr.f32.gmra.mrb[0].mxu0 %v2058
      %v2237 = vpop.f32.mrb[0].mxu0
      %v2238 = vadd.f32 %v2033, %v2237
      %v2239 = vpop.f32.mrb[0].mxu0
      %2240 = vmatprep.mubr.f32.mxu0 0.0
      %2241 = vmatmul.mubr.f32.gmra.mrb[0].mxu0 %v2061
      %v2242 = vpop.f32.mrb[0].mxu0
      %v2243 = vadd.f32 %v2033, %v2242
      %v2244 = vpop.f32.mrb[0].mxu0
      %2245 = vmatprep.mubr.f32.mxu0 0.0
      %2246 = vmatmul.mubr.f32.gmra.mrb[0].mxu0 %v2064
      %v2247 = vpop.f32.mrb[0].mxu0
      %v2248 = vadd.f32 %v2033, %v2247
      %v2249 = vpop.f32.mrb[0].mxu0
      %2250 = vmatprep.mubr.f32.mxu0 0.0
      %2251 = vmatmul.mubr.f32.gmra.mrb[0].mxu0 %v2067
      %v2252 = vpop.f32.mrb[0].mxu0
      %v2253 = vadd.f32 %v2033, %v2252
      %v2254 = vpop.f32.mrb[0].mxu0
      %2255 = vmatprep.mubr.f32.mxu0 0.0
      %2256 = vmatmul.mubr.f32.gmra.mrb[0].mxu0 %v2070
      %v2257 = vpop.f32.mrb[0].mxu0
      %v2258 = vadd.f32 %v2033, %v2257
      %v2259 = vpop.f32.mrb[0].mxu0
      %2260 = vmatprep.mubr.f32.mxu0 0.0
      %2261 = vmatmul.mubr.f32.gmra.mrb[0].mxu0 %v2073
      %v2262 = vpop.f32.mrb[0].mxu0
      %v2263 = vadd.f32 %v2033, %v2262
      %v2264 = vpop.f32.mrb[0].mxu0
      %2265 = vmatprep.mubr.f32.mxu0 0.0
      %2266 = vmatmul.mubr.f32.gmra.mrb[0].mxu0 %v2076
      %v2267 = vpop.f32.mrb[0].mxu0
      %v2268 = vadd.f32 %v2033, %v2267
      %v2269 = vpop.f32.mrb[0].mxu0
      %2270 = vmatprep.mubr.f32.mxu0 0.0
      %2271 = vmatmul.mubr.f32.gmra.mrb[0].mxu0 %v2079
      %v2272 = vpop.f32.mrb[0].mxu0
      %v2273 = vadd.f32 %v2033, %v2272
      %v2274 = vpop.f32.mrb[0].mxu0
      %2275 = vmatprep.mubr.f32.mxu0 0.0
      %2276 = vmatmul.mubr.f32.gmra.mrb[0].mxu0 %v2082
      %v2277 = vpop.f32.mrb[0].mxu0
      %v2278 = vadd.f32 %v2033, %v2277
      %v2279 = vpop.f32.mrb[0].mxu0
      %2280 = vmatprep.mubr.f32.mxu0 0.0
      %2281 = vmatmul.mubr.f32.gmra.mrb[0].mxu0 %v2085
      %v2282 = vpop.f32.mrb[0].mxu0
      %v2283 = vadd.f32 %v2033, %v2282
      %v2284 = vpop.f32.mrb[0].mxu0
      %2285 = vmatprep.mubr.f32.mxu0 0.0
      %2286 = vmatmul.mubr.f32.gmra.mrb[0].mxu0 %v2088
      %v2287 = vpop.f32.mrb[0].mxu0
      %v2288 = vadd.f32 %v2033, %v2287
      %v2289 = vpop.f32.mrb[0].mxu0
      %2290 = vmatprep.mubr.f32.mxu0 0.0
      %2291 = vmatmul.mubr.f32.gmra.mrb[0].mxu0 %v2091
      %v2292 = vpop.f32.mrb[0].mxu0
      %v2293 = vadd.f32 %v2033, %v2292
      %v2294 = vpop.f32.mrb[0].mxu0
      %2295 = vmatprep.mubr.f32.mxu0 0.0
      %2296 = vmatmul.mubr.f32.gmra.mrb[0].mxu0 %v2094
      %v2297 = vpop.f32.mrb[0].mxu0
      %v2298 = vadd.f32 %v2033, %v2297
      %v2299 = vpop.f32.mrb[0].mxu0
      %2300 = vmatprep.mubr.f32.mxu0 0.0
      %2301 = vmatmul.mubr.f32.gmra.mrb[0].mxu0 %v2097
      %v2302 = vpop.f32.mrb[0].mxu0
      %v2303 = vadd.f32 %v2033, %v2302
      %v2304 = vpop.f32.mrb[0].mxu0
      %2305 = vmatprep.mubr.f32.mxu0 0.0
      %2306 = vmatmul.mubr.f32.gmra.mrb[0].mxu0 %v2100
      %v2307 = vpop.f32.mrb[0].mxu0
      %v2308 = vadd.f32 %v2033, %v2307
      %v2309 = vpop.f32.mrb[0].mxu0
      %2310 = vmatprep.mubr.f32.mxu0 0.0
      %2311 = vmatmul.mubr.f32.gmra.mrb[0].mxu0 %v2103
      %v2312 = vpop.f32.mrb[0].mxu0
      %v2313 = vadd.f32 %v2033, %v2312
      %v2314 = vpop.f32.mrb[0].mxu0
      %2315 = vmatprep.mubr.f32.mxu0 0.0
      %2316 = vmatmul.mubr.f32.gmra.mrb[0].mxu0 %v2106
      %v2317 = vpop.f32.mrb[0].mxu0
      %v2318 = vadd.f32 %v2033, %v2317
      %v2319 = vpop.f32.mrb[0].mxu0
      %2320 = vmatprep.mubr.f32.mxu0 0.0
      %2321 = vmatmul.mubr.f32.gmra.mrb[0].mxu0 %v2109
      %v2322 = vpop.f32.mrb[0].mxu0
      %v2323 = vadd.f32 %v2033, %v2322
      %v2324 = vpop.f32.mrb[0].mxu0
      %2325 = vmatprep.mubr.f32.mxu0 0.0
      %2326 = vmatmul.mubr.f32.gmra.mrb[0].mxu0 %v2112
      %v2327 = vpop.f32.mrb[0].mxu0
      %v2328 = vadd.f32 %v2033, %v2327
      %v2329 = vpop.f32.mrb[0].mxu0
      %2330 = vmatprep.mubr.f32.mxu0 0.0
      %2331 = vmatmul.mubr.f32.gmra.mrb[0].mxu0 %v2115
      %v2332 = vpop.f32.mrb[0].mxu0
      %v2333 = vadd.f32 %v2033, %v2332
      %v2334 = vpop.f32.mrb[0].mxu0
      %2335 = vmatprep.mubr.f32.mxu0 0.0
      %2336 = vmatmul.mubr.f32.gmra.mrb[0].mxu0 %v2118
      %v2337 = vpop.f32.mrb[0].mxu0
      %v2338 = vadd.f32 %v2033, %v2337
      %v2339 = vpop.f32.mrb[0].mxu0
      %2340 = vmatprep.mubr.f32.mxu0 0.0
      %2341 = vmatmul.mubr.f32.gmra.mrb[0].mxu0 %v2121
      %v2342 = vpop.f32.mrb[0].mxu0
      %v2343 = vadd.f32 %v2033, %v2342
      %v2344 = vpop.f32.mrb[0].mxu0
      %2345 = vmatprep.mubr.f32.mxu0 0.0
      %2346 = vmatmul.mubr.f32.gmra.mrb[0].mxu0 %v2124
      %v2347 = vpop.f32.mrb[0].mxu0
      %v2348 = vadd.f32 %v2033, %v2347
      %v2349 = vpop.f32.mrb[0].mxu0
      %2350 = vmatprep.mubr.f32.mxu0 0.0
      %2351 = vmatmul.mubr.f32.gmra.mrb[0].mxu0 %v2127
      %v2352 = vpop.f32.mrb[0].mxu0
      %v2353 = vadd.f32 %v2033, %v2352
      %v2354 = vpop.f32.mrb[0].mxu0
      %2355 = vmatprep.mubr.f32.mxu0 0.0
      %2356 = vmatmul.mubr.f32.gmra.mrb[0].mxu0 %v2130
      %v2357 = vpop.f32.mrb[0].mxu0
      %v2358 = vadd.f32 %v2033, %v2357
      %v2359 = vpop.f32.mrb[0].mxu0
      %2360 = vdwg.mxu0
      %v2361 = vmax.f32 %v2203, 0.0
      %v2362 = vmax.f32 %v2208, 0.0
      %v2363 = vmax.f32 %v2213, 0.0
      %v2364 = vmax.f32 %v2218, 0.0
      %v2365 = vmax.f32 %v2223, 0.0
      %v2366 = vmax.f32 %v2228, 0.0
      %v2367 = vmax.f32 %v2233, 0.0
      %v2368 = vmax.f32 %v2238, 0.0
      %v2369 = vmax.f32 %v2243, 0.0
      %v2370 = vmax.f32 %v2248, 0.0
      %v2371 = vmax.f32 %v2253, 0.0
      %v2372 = vmax.f32 %v2258, 0.0
      %v2373 = vmax.f32 %v2263, 0.0
      %v2374 = vmax.f32 %v2268, 0.0
      %v2375 = vmax.f32 %v2273, 0.0
      %v2376 = vmax.f32 %v2278, 0.0
      %v2377 = vmax.f32 %v2283, 0.0
      %v2378 = vmax.f32 %v2288, 0.0
      %v2379 = vmax.f32 %v2293, 0.0
      %v2380 = vmax.f32 %v2298, 0.0
      %v2381 = vmax.f32 %v2303, 0.0
      %v2382 = vmax.f32 %v2308, 0.0
      %v2383 = vmax.f32 %v2313, 0.0
      %v2384 = vmax.f32 %v2318, 0.0
      %v2385 = vmax.f32 %v2323, 0.0
      %v2386 = vmax.f32 %v2328, 0.0
      %v2387 = vmax.f32 %v2333, 0.0
      %v2388 = vmax.f32 %v2338, 0.0
      %v2389 = vmax.f32 %v2343, 0.0
      %v2390 = vmax.f32 %v2348, 0.0
      %v2391 = vmax.f32 %v2353, 0.0
      %v2392 = vmax.f32 %v2358, 0.0
      %s2393 = scalar_lea.vmem [#allocation3], 24
      %2394 = vst.msk [vmem:[%s2393 + $0x1] sm:$0xff] %vm271, %v2361
      %2395 = vst.msk [vmem:[%s2393 + $0x9] sm:$0xff] %vm271, %v2362
      %2396 = vst.msk [vmem:[%s2393 + $0x19] sm:$0xff] %vm271, %v2363
      %2397 = vst.msk [vmem:[%s2393 + $0x21] sm:$0xff] %vm271, %v2364
      %2398 = vst.msk [vmem:[%s2393 + $0x31] sm:$0xff] %vm271, %v2365
      %2399 = vst.msk [vmem:[%s2393 + $0x39] sm:$0xff] %vm271, %v2366
      %2400 = vst.msk [vmem:[%s2393 + $0x49] sm:$0xff] %vm271, %v2367
      %2401 = vst.msk [vmem:[%s2393 + $0x51] sm:$0xff] %vm271, %v2368
      %2402 = vst.msk [vmem:[%s2393 + $0x61] sm:$0xff] %vm271, %v2369
      %2403 = vst.msk [vmem:[%s2393 + $0x69] sm:$0xff] %vm271, %v2370
      %2404 = vst.msk [vmem:[%s2393 + $0x79] sm:$0xff] %vm271, %v2371
      %2405 = vst.msk [vmem:[%s2393 + $0x81] sm:$0xff] %vm271, %v2372
      %2406 = vst.msk [vmem:[%s2393 + $0x91] sm:$0xff] %vm271, %v2373
      %2407 = vst.msk [vmem:[%s2393 + $0x99] sm:$0xff] %vm271, %v2374
      %2408 = vst.msk [vmem:[%s2393 + $0xa9] sm:$0xff] %vm271, %v2375
      %2409 = vst.msk [vmem:[%s2393 + $0xb1] sm:$0xff] %vm271, %v2376
      %2410 = vst.msk [vmem:[%s2393 + $0xc1] sm:$0xff] %vm271, %v2377
      %2411 = vst.msk [vmem:[%s2393 + $0xc9] sm:$0xff] %vm271, %v2378
      %2412 = vst.msk [vmem:[%s2393 + $0xd9] sm:$0xff] %vm271, %v2379
      %2413 = vst.msk [vmem:[%s2393 + $0xe1] sm:$0xff] %vm271, %v2380
      %2414 = vst.msk [vmem:[%s2393 + $0xf1] sm:$0xff] %vm271, %v2381
      %2415 = vst.msk [vmem:[%s2393 + $0xf9] sm:$0xff] %vm271, %v2382
      %2416 = vst.msk [vmem:[%s2393 + $0x109] sm:$0xff] %vm271, %v2383
      %2417 = vst.msk [vmem:[%s2393 + $0x111] sm:$0xff] %vm271, %v2384
      %2418 = vst.msk [vmem:[%s2393 + $0x121] sm:$0xff] %vm271, %v2385
      %2419 = vst.msk [vmem:[%s2393 + $0x129] sm:$0xff] %vm271, %v2386
      %2420 = vst.msk [vmem:[%s2393 + $0x139] sm:$0xff] %vm271, %v2387
      %2421 = vst.msk [vmem:[%s2393 + $0x141] sm:$0xff] %vm271, %v2388
      %2422 = vst.msk [vmem:[%s2393 + $0x151] sm:$0xff] %vm271, %v2389
      %2423 = vst.msk [vmem:[%s2393 + $0x159] sm:$0xff] %vm271, %v2390
      %2424 = vst.msk [vmem:[%s2393 + $0x169] sm:$0xff] %vm271, %v2391
      %2425 = vst.msk [vmem:[%s2393 + $0x171] sm:$0xff] %vm271, %v2392
      %v2426 = vld [vmem:[#allocation3] sm:$0xff]
      %v2427 = vld [vmem:[#allocation3 + $0x8] sm:$0xff]
      %v2428 = vld [vmem:[#allocation3 + $0x18] sm:$0xff]
      %v2429 = vld [vmem:[#allocation3 + $0x20] sm:$0xff]
      %v2430 = vld [vmem:[#allocation3 + $0x30] sm:$0xff]
      %v2431 = vld [vmem:[#allocation3 + $0x38] sm:$0xff]
      %v2432 = vld [vmem:[#allocation3 + $0x48] sm:$0xff]
      %v2433 = vld [vmem:[#allocation3 + $0x50] sm:$0xff]
      %v2434 = vld [vmem:[#allocation3 + $0x60] sm:$0xff]
      %v2435 = vld [vmem:[#allocation3 + $0x68] sm:$0xff]
      %v2436 = vld [vmem:[#allocation3 + $0x78] sm:$0xff]
      %v2437 = vld [vmem:[#allocation3 + $0x80] sm:$0xff]
      %v2438 = vld [vmem:[#allocation3 + $0x90] sm:$0xff]
      %v2439 = vld [vmem:[#allocation3 + $0x98] sm:$0xff]
      %v2440 = vld [vmem:[#allocation3 + $0xa8] sm:$0xff]
      %v2441 = vld [vmem:[#allocation3 + $0xb0] sm:$0xff]
      %v2442 = vld [vmem:[#allocation3 + $0xc0] sm:$0xff]
      %v2443 = vld [vmem:[#allocation3 + $0xc8] sm:$0xff]
      %v2444 = vld [vmem:[#allocation3 + $0xd8] sm:$0xff]
      %v2445 = vld [vmem:[#allocation3 + $0xe0] sm:$0xff]
      %v2446 = vld [vmem:[#allocation3 + $0xf0] sm:$0xff]
      %v2447 = vld [vmem:[#allocation3 + $0xf8] sm:$0xff]
      %v2448 = vld [vmem:[#allocation3 + $0x108] sm:$0xff]
      %v2449 = vld [vmem:[#allocation3 + $0x110] sm:$0xff]
      %v2450 = vld [vmem:[#allocation3 + $0x120] sm:$0xff]
      %v2451 = vld [vmem:[#allocation3 + $0x128] sm:$0xff]
      %v2452 = vld [vmem:[#allocation3 + $0x138] sm:$0xff]
      %v2453 = vld [vmem:[#allocation3 + $0x140] sm:$0xff]
      %v2454 = vld [vmem:[#allocation3 + $0x150] sm:$0xff]
      %v2455 = vld [vmem:[#allocation3 + $0x158] sm:$0xff]
      %v2456 = vld [vmem:[#allocation3 + $0x168] sm:$0xff]
      %v2457 = vld [vmem:[#allocation3 + $0x170] sm:$0xff]
      %2458 = vst.msk [vmem:[#allocation5] sm:$0xff] %vm271, %v2426
      %2459 = vst.msk [vmem:[#allocation5 + $0x8] sm:$0xff] %vm271, %v2427
      %2460 = vst.msk [vmem:[#allocation5 + $0x10] sm:$0xff] %vm271, %v2428
      %2461 = vst.msk [vmem:[#allocation5 + $0x18] sm:$0xff] %vm271, %v2429
      %2462 = vst.msk [vmem:[#allocation5 + $0x20] sm:$0xff] %vm271, %v2430
      %2463 = vst.msk [vmem:[#allocation5 + $0x28] sm:$0xff] %vm271, %v2431
      %2464 = vst.msk [vmem:[#allocation5 + $0x30] sm:$0xff] %vm271, %v2432
      %2465 = vst.msk [vmem:[#allocation5 + $0x38] sm:$0xff] %vm271, %v2433
      %2466 = vst.msk [vmem:[#allocation5 + $0x40] sm:$0xff] %vm271, %v2434
      %2467 = vst.msk [vmem:[#allocation5 + $0x48] sm:$0xff] %vm271, %v2435
      %2468 = vst.msk [vmem:[#allocation5 + $0x50] sm:$0xff] %vm271, %v2436
      %2469 = vst.msk [vmem:[#allocation5 + $0x58] sm:$0xff] %vm271, %v2437
      %2470 = vst.msk [vmem:[#allocation5 + $0x60] sm:$0xff] %vm271, %v2438
      %2471 = vst.msk [vmem:[#allocation5 + $0x68] sm:$0xff] %vm271, %v2439
      %2472 = vst.msk [vmem:[#allocation5 + $0x70] sm:$0xff] %vm271, %v2440
      %2473 = vst.msk [vmem:[#allocation5 + $0x78] sm:$0xff] %vm271, %v2441
      %2474 = vst.msk [vmem:[#allocation5 + $0x80] sm:$0xff] %vm271, %v2442
      %2475 = vst.msk [vmem:[#allocation5 + $0x88] sm:$0xff] %vm271, %v2443
      %2476 = vst.msk [vmem:[#allocation5 + $0x90] sm:$0xff] %vm271, %v2444
      %2477 = vst.msk [vmem:[#allocation5 + $0x98] sm:$0xff] %vm271, %v2445
      %2478 = vst.msk [vmem:[#allocation5 + $0xa0] sm:$0xff] %vm271, %v2446
      %2479 = vst.msk [vmem:[#allocation5 + $0xa8] sm:$0xff] %vm271, %v2447
      %2480 = vst.msk [vmem:[#allocation5 + $0xb0] sm:$0xff] %vm271, %v2448
      %2481 = vst.msk [vmem:[#allocation5 + $0xb8] sm:$0xff] %vm271, %v2449
      %2482 = vst.msk [vmem:[#allocation5 + $0xc0] sm:$0xff] %vm271, %v2450
      %2483 = vst.msk [vmem:[#allocation5 + $0xc8] sm:$0xff] %vm271, %v2451
      %2484 = vst.msk [vmem:[#allocation5 + $0xd0] sm:$0xff] %vm271, %v2452
      %2485 = vst.msk [vmem:[#allocation5 + $0xd8] sm:$0xff] %vm271, %v2453
      %2486 = vst.msk [vmem:[#allocation5 + $0xe0] sm:$0xff] %vm271, %v2454
      %2487 = vst.msk [vmem:[#allocation5 + $0xe8] sm:$0xff] %vm271, %v2455
      %2488 = vst.msk [vmem:[#allocation5 + $0xf0] sm:$0xff] %vm271, %v2456
      %2489 = vst.msk [vmem:[#allocation5 + $0xf8] sm:$0xff] %vm271, %v2457
      %v2490 = vld [vmem:[#allocation3 + $0x1] sm:$0xff]
      %v2491 = vld [vmem:[#allocation3 + $0x9] sm:$0xff]
      %v2492 = vld [vmem:[#allocation3 + $0x19] sm:$0xff]
      %v2493 = vld [vmem:[#allocation3 + $0x21] sm:$0xff]
      %v2494 = vld [vmem:[#allocation3 + $0x31] sm:$0xff]
      %v2495 = vld [vmem:[#allocation3 + $0x39] sm:$0xff]
      %v2496 = vld [vmem:[#allocation3 + $0x49] sm:$0xff]
      %v2497 = vld [vmem:[#allocation3 + $0x51] sm:$0xff]
      %v2498 = vld [vmem:[#allocation3 + $0x61] sm:$0xff]
      %v2499 = vld [vmem:[#allocation3 + $0x69] sm:$0xff]
      %v2500 = vld [vmem:[#allocation3 + $0x79] sm:$0xff]
      %v2501 = vld [vmem:[#allocation3 + $0x81] sm:$0xff]
      %v2502 = vld [vmem:[#allocation3 + $0x91] sm:$0xff]
      %v2503 = vld [vmem:[#allocation3 + $0x99] sm:$0xff]
      %v2504 = vld [vmem:[#allocation3 + $0xa9] sm:$0xff]
      %v2505 = vld [vmem:[#allocation3 + $0xb1] sm:$0xff]
      %v2506 = vld [vmem:[#allocation3 + $0xc1] sm:$0xff]
      %v2507 = vld [vmem:[#allocation3 + $0xc9] sm:$0xff]
      %v2508 = vld [vmem:[#allocation3 + $0xd9] sm:$0xff]
      %v2509 = vld [vmem:[#allocation3 + $0xe1] sm:$0xff]
      %v2510 = vld [vmem:[#allocation3 + $0xf1] sm:$0xff]
      %v2511 = vld [vmem:[#allocation3 + $0xf9] sm:$0xff]
      %v2512 = vld [vmem:[#allocation3 + $0x109] sm:$0xff]
      %v2513 = vld [vmem:[#allocation3 + $0x111] sm:$0xff]
      %v2514 = vld [vmem:[#allocation3 + $0x121] sm:$0xff]
      %v2515 = vld [vmem:[#allocation3 + $0x129] sm:$0xff]
      %v2516 = vld [vmem:[#allocation3 + $0x139] sm:$0xff]
      %v2517 = vld [vmem:[#allocation3 + $0x141] sm:$0xff]
      %v2518 = vld [vmem:[#allocation3 + $0x151] sm:$0xff]
      %v2519 = vld [vmem:[#allocation3 + $0x159] sm:$0xff]
      %v2520 = vld [vmem:[#allocation3 + $0x169] sm:$0xff]
      %v2521 = vld [vmem:[#allocation3 + $0x171] sm:$0xff]
      %2554 = vrot.lane.b32.xlu0 %v2490, 8
      %v2555 = vpop.permute.xlu0 %2554
      %2556 = vrot.lane.b32.xlu0 %v2491, 8
      %v2557 = vpop.permute.xlu0 %2556
      %2558 = vrot.lane.b32.xlu0 %v2492, 8
      %v2559 = vpop.permute.xlu0 %2558
      %2560 = vrot.lane.b32.xlu0 %v2493, 8
      %v2561 = vpop.permute.xlu0 %2560
      %2562 = vrot.lane.b32.xlu0 %v2494, 8
      %v2563 = vpop.permute.xlu0 %2562
      %2564 = vrot.lane.b32.xlu0 %v2495, 8
      %v2565 = vpop.permute.xlu0 %2564
      %2566 = vrot.lane.b32.xlu0 %v2496, 8
      %v2567 = vpop.permute.xlu0 %2566
      %2568 = vrot.lane.b32.xlu0 %v2497, 8
      %v2569 = vpop.permute.xlu0 %2568
      %2570 = vrot.lane.b32.xlu0 %v2498, 8
      %v2571 = vpop.permute.xlu0 %2570
      %2572 = vrot.lane.b32.xlu0 %v2499, 8
      %v2573 = vpop.permute.xlu0 %2572
      %2574 = vrot.lane.b32.xlu0 %v2500, 8
      %v2575 = vpop.permute.xlu0 %2574
      %2576 = vrot.lane.b32.xlu0 %v2501, 8
      %v2577 = vpop.permute.xlu0 %2576
      %2578 = vrot.lane.b32.xlu0 %v2502, 8
      %v2579 = vpop.permute.xlu0 %2578
      %2580 = vrot.lane.b32.xlu0 %v2503, 8
      %v2581 = vpop.permute.xlu0 %2580
      %2582 = vrot.lane.b32.xlu0 %v2504, 8
      %v2583 = vpop.permute.xlu0 %2582
      %2584 = vrot.lane.b32.xlu0 %v2505, 8
      %v2585 = vpop.permute.xlu0 %2584
      %2586 = vrot.lane.b32.xlu0 %v2506, 8
      %v2587 = vpop.permute.xlu0 %2586
      %2588 = vrot.lane.b32.xlu0 %v2507, 8
      %v2589 = vpop.permute.xlu0 %2588
      %2590 = vrot.lane.b32.xlu0 %v2508, 8
      %v2591 = vpop.permute.xlu0 %2590
      %2592 = vrot.lane.b32.xlu0 %v2509, 8
      %v2593 = vpop.permute.xlu0 %2592
      %2594 = vrot.lane.b32.xlu0 %v2510, 8
      %v2595 = vpop.permute.xlu0 %2594
      %2596 = vrot.lane.b32.xlu0 %v2511, 8
      %v2597 = vpop.permute.xlu0 %2596
      %2598 = vrot.lane.b32.xlu0 %v2512, 8
      %v2599 = vpop.permute.xlu0 %2598
      %2600 = vrot.lane.b32.xlu0 %v2513, 8
      %v2601 = vpop.permute.xlu0 %2600
      %2602 = vrot.lane.b32.xlu0 %v2514, 8
      %v2603 = vpop.permute.xlu0 %2602
      %2604 = vrot.lane.b32.xlu0 %v2515, 8
      %v2605 = vpop.permute.xlu0 %2604
      %2606 = vrot.lane.b32.xlu0 %v2516, 8
      %v2607 = vpop.permute.xlu0 %2606
      %2608 = vrot.lane.b32.xlu0 %v2517, 8
      %v2609 = vpop.permute.xlu0 %2608
      %2610 = vrot.lane.b32.xlu0 %v2518, 8
      %v2611 = vpop.permute.xlu0 %2610
      %2612 = vrot.lane.b32.xlu0 %v2519, 8
      %v2613 = vpop.permute.xlu0 %2612
      %2614 = vrot.lane.b32.xlu0 %v2520, 8
      %v2615 = vpop.permute.xlu0 %2614
      %2616 = vrot.lane.b32.xlu0 %v2521, 8
      %v2617 = vpop.permute.xlu0 %2616
      %vm2650 = vcmask 130112
      %2651 = vst.msk [vmem:[#allocation5] sm:$0xff] %vm2650, %v2555
      %2652 = vst.msk [vmem:[#allocation5 + $0x8] sm:$0xff] %vm2650, %v2557
      %2653 = vst.msk [vmem:[#allocation5 + $0x10] sm:$0xff] %vm2650, %v2559
      %2654 = vst.msk [vmem:[#allocation5 + $0x18] sm:$0xff] %vm2650, %v2561
      %2655 = vst.msk [vmem:[#allocation5 + $0x20] sm:$0xff] %vm2650, %v2563
      %2656 = vst.msk [vmem:[#allocation5 + $0x28] sm:$0xff] %vm2650, %v2565
      %2657 = vst.msk [vmem:[#allocation5 + $0x30] sm:$0xff] %vm2650, %v2567
      %2658 = vst.msk [vmem:[#allocation5 + $0x38] sm:$0xff] %vm2650, %v2569
      %2659 = vst.msk [vmem:[#allocation5 + $0x40] sm:$0xff] %vm2650, %v2571
      %2660 = vst.msk [vmem:[#allocation5 + $0x48] sm:$0xff] %vm2650, %v2573
      %2661 = vst.msk [vmem:[#allocation5 + $0x50] sm:$0xff] %vm2650, %v2575
      %2662 = vst.msk [vmem:[#allocation5 + $0x58] sm:$0xff] %vm2650, %v2577
      %2663 = vst.msk [vmem:[#allocation5 + $0x60] sm:$0xff] %vm2650, %v2579
      %2664 = vst.msk [vmem:[#allocation5 + $0x68] sm:$0xff] %vm2650, %v2581
      %2665 = vst.msk [vmem:[#allocation5 + $0x70] sm:$0xff] %vm2650, %v2583
      %2666 = vst.msk [vmem:[#allocation5 + $0x78] sm:$0xff] %vm2650, %v2585
      %2667 = vst.msk [vmem:[#allocation5 + $0x80] sm:$0xff] %vm2650, %v2587
      %2668 = vst.msk [vmem:[#allocation5 + $0x88] sm:$0xff] %vm2650, %v2589
      %2669 = vst.msk [vmem:[#allocation5 + $0x90] sm:$0xff] %vm2650, %v2591
      %2670 = vst.msk [vmem:[#allocation5 + $0x98] sm:$0xff] %vm2650, %v2593
      %2671 = vst.msk [vmem:[#allocation5 + $0xa0] sm:$0xff] %vm2650, %v2595
      %2672 = vst.msk [vmem:[#allocation5 + $0xa8] sm:$0xff] %vm2650, %v2597
      %2673 = vst.msk [vmem:[#allocation5 + $0xb0] sm:$0xff] %vm2650, %v2599
      %2674 = vst.msk [vmem:[#allocation5 + $0xb8] sm:$0xff] %vm2650, %v2601
      %2675 = vst.msk [vmem:[#allocation5 + $0xc0] sm:$0xff] %vm2650, %v2603
      %2676 = vst.msk [vmem:[#allocation5 + $0xc8] sm:$0xff] %vm2650, %v2605
      %2677 = vst.msk [vmem:[#allocation5 + $0xd0] sm:$0xff] %vm2650, %v2607
      %2678 = vst.msk [vmem:[#allocation5 + $0xd8] sm:$0xff] %vm2650, %v2609
      %2679 = vst.msk [vmem:[#allocation5 + $0xe0] sm:$0xff] %vm2650, %v2611
      %2680 = vst.msk [vmem:[#allocation5 + $0xe8] sm:$0xff] %vm2650, %v2613
      %2681 = vst.msk [vmem:[#allocation5 + $0xf0] sm:$0xff] %vm2650, %v2615
      %2682 = vst.msk [vmem:[#allocation5 + $0xf8] sm:$0xff] %vm2650, %v2617
      %v2683 = vld [vmem:[#allocation3 + $0x2] sm:$0xff]
      %v2684 = vld [vmem:[#allocation3 + $0xa] sm:$0xff]
      %v2685 = vld [vmem:[#allocation3 + $0x1a] sm:$0xff]
      %v2686 = vld [vmem:[#allocation3 + $0x22] sm:$0xff]
      %v2687 = vld [vmem:[#allocation3 + $0x32] sm:$0xff]
      %v2688 = vld [vmem:[#allocation3 + $0x3a] sm:$0xff]
      %v2689 = vld [vmem:[#allocation3 + $0x4a] sm:$0xff]
      %v2690 = vld [vmem:[#allocation3 + $0x52] sm:$0xff]
      %v2691 = vld [vmem:[#allocation3 + $0x62] sm:$0xff]
      %v2692 = vld [vmem:[#allocation3 + $0x6a] sm:$0xff]
      %v2693 = vld [vmem:[#allocation3 + $0x7a] sm:$0xff]
      %v2694 = vld [vmem:[#allocation3 + $0x82] sm:$0xff]
      %v2695 = vld [vmem:[#allocation3 + $0x92] sm:$0xff]
      %v2696 = vld [vmem:[#allocation3 + $0x9a] sm:$0xff]
      %v2697 = vld [vmem:[#allocation3 + $0xaa] sm:$0xff]
      %v2698 = vld [vmem:[#allocation3 + $0xb2] sm:$0xff]
      %v2699 = vld [vmem:[#allocation3 + $0xc2] sm:$0xff]
      %v2700 = vld [vmem:[#allocation3 + $0xca] sm:$0xff]
      %v2701 = vld [vmem:[#allocation3 + $0xda] sm:$0xff]
      %v2702 = vld [vmem:[#allocation3 + $0xe2] sm:$0xff]
      %v2703 = vld [vmem:[#allocation3 + $0xf2] sm:$0xff]
      %v2704 = vld [vmem:[#allocation3 + $0xfa] sm:$0xff]
      %v2705 = vld [vmem:[#allocation3 + $0x10a] sm:$0xff]
      %v2706 = vld [vmem:[#allocation3 + $0x112] sm:$0xff]
      %v2707 = vld [vmem:[#allocation3 + $0x122] sm:$0xff]
      %v2708 = vld [vmem:[#allocation3 + $0x12a] sm:$0xff]
      %v2709 = vld [vmem:[#allocation3 + $0x13a] sm:$0xff]
      %v2710 = vld [vmem:[#allocation3 + $0x142] sm:$0xff]
      %v2711 = vld [vmem:[#allocation3 + $0x152] sm:$0xff]
      %v2712 = vld [vmem:[#allocation3 + $0x15a] sm:$0xff]
      %v2713 = vld [vmem:[#allocation3 + $0x16a] sm:$0xff]
      %v2714 = vld [vmem:[#allocation3 + $0x172] sm:$0xff]
      %2747 = vrot.lane.b32.xlu0 %v2683, 16
      %v2748 = vpop.permute.xlu0 %2747
      %2749 = vrot.lane.b32.xlu0 %v2684, 16
      %v2750 = vpop.permute.xlu0 %2749
      %2751 = vrot.lane.b32.xlu0 %v2685, 16
      %v2752 = vpop.permute.xlu0 %2751
      %2753 = vrot.lane.b32.xlu0 %v2686, 16
      %v2754 = vpop.permute.xlu0 %2753
      %2755 = vrot.lane.b32.xlu0 %v2687, 16
      %v2756 = vpop.permute.xlu0 %2755
      %2757 = vrot.lane.b32.xlu0 %v2688, 16
      %v2758 = vpop.permute.xlu0 %2757
      %2759 = vrot.lane.b32.xlu0 %v2689, 16
      %v2760 = vpop.permute.xlu0 %2759
      %2761 = vrot.lane.b32.xlu0 %v2690, 16
      %v2762 = vpop.permute.xlu0 %2761
      %2763 = vrot.lane.b32.xlu0 %v2691, 16
      %v2764 = vpop.permute.xlu0 %2763
      %2765 = vrot.lane.b32.xlu0 %v2692, 16
      %v2766 = vpop.permute.xlu0 %2765
      %2767 = vrot.lane.b32.xlu0 %v2693, 16
      %v2768 = vpop.permute.xlu0 %2767
      %2769 = vrot.lane.b32.xlu0 %v2694, 16
      %v2770 = vpop.permute.xlu0 %2769
      %2771 = vrot.lane.b32.xlu0 %v2695, 16
      %v2772 = vpop.permute.xlu0 %2771
      %2773 = vrot.lane.b32.xlu0 %v2696, 16
      %v2774 = vpop.permute.xlu0 %2773
      %2775 = vrot.lane.b32.xlu0 %v2697, 16
      %v2776 = vpop.permute.xlu0 %2775
      %2777 = vrot.lane.b32.xlu0 %v2698, 16
      %v2778 = vpop.permute.xlu0 %2777
      %2779 = vrot.lane.b32.xlu0 %v2699, 16
      %v2780 = vpop.permute.xlu0 %2779
      %2781 = vrot.lane.b32.xlu0 %v2700, 16
      %v2782 = vpop.permute.xlu0 %2781
      %2783 = vrot.lane.b32.xlu0 %v2701, 16
      %v2784 = vpop.permute.xlu0 %2783
      %2785 = vrot.lane.b32.xlu0 %v2702, 16
      %v2786 = vpop.permute.xlu0 %2785
      %2787 = vrot.lane.b32.xlu0 %v2703, 16
      %v2788 = vpop.permute.xlu0 %2787
      %2789 = vrot.lane.b32.xlu0 %v2704, 16
      %v2790 = vpop.permute.xlu0 %2789
      %2791 = vrot.lane.b32.xlu0 %v2705, 16
      %v2792 = vpop.permute.xlu0 %2791
      %2793 = vrot.lane.b32.xlu0 %v2706, 16
      %v2794 = vpop.permute.xlu0 %2793
      %2795 = vrot.lane.b32.xlu0 %v2707, 16
      %v2796 = vpop.permute.xlu0 %2795
      %2797 = vrot.lane.b32.xlu0 %v2708, 16
      %v2798 = vpop.permute.xlu0 %2797
      %2799 = vrot.lane.b32.xlu0 %v2709, 16
      %v2800 = vpop.permute.xlu0 %2799
      %2801 = vrot.lane.b32.xlu0 %v2710, 16
      %v2802 = vpop.permute.xlu0 %2801
      %2803 = vrot.lane.b32.xlu0 %v2711, 16
      %v2804 = vpop.permute.xlu0 %2803
      %2805 = vrot.lane.b32.xlu0 %v2712, 16
      %v2806 = vpop.permute.xlu0 %2805
      %2807 = vrot.lane.b32.xlu0 %v2713, 16
      %v2808 = vpop.permute.xlu0 %2807
      %2809 = vrot.lane.b32.xlu0 %v2714, 16
      %v2810 = vpop.permute.xlu0 %2809
      %vm2843 = vcmask 195712
      %2844 = vst.msk [vmem:[#allocation5] sm:$0xff] %vm2843, %v2748
      %2845 = vst.msk [vmem:[#allocation5 + $0x8] sm:$0xff] %vm2843, %v2750
      %2846 = vst.msk [vmem:[#allocation5 + $0x10] sm:$0xff] %vm2843, %v2752
      %2847 = vst.msk [vmem:[#allocation5 + $0x18] sm:$0xff] %vm2843, %v2754
      %2848 = vst.msk [vmem:[#allocation5 + $0x20] sm:$0xff] %vm2843, %v2756
      %2849 = vst.msk [vmem:[#allocation5 + $0x28] sm:$0xff] %vm2843, %v2758
      %2850 = vst.msk [vmem:[#allocation5 + $0x30] sm:$0xff] %vm2843, %v2760
      %2851 = vst.msk [vmem:[#allocation5 + $0x38] sm:$0xff] %vm2843, %v2762
      %2852 = vst.msk [vmem:[#allocation5 + $0x40] sm:$0xff] %vm2843, %v2764
      %2853 = vst.msk [vmem:[#allocation5 + $0x48] sm:$0xff] %vm2843, %v2766
      %2854 = vst.msk [vmem:[#allocation5 + $0x50] sm:$0xff] %vm2843, %v2768
      %2855 = vst.msk [vmem:[#allocation5 + $0x58] sm:$0xff] %vm2843, %v2770
      %2856 = vst.msk [vmem:[#allocation5 + $0x60] sm:$0xff] %vm2843, %v2772
      %2857 = vst.msk [vmem:[#allocation5 + $0x68] sm:$0xff] %vm2843, %v2774
      %2858 = vst.msk [vmem:[#allocation5 + $0x70] sm:$0xff] %vm2843, %v2776
      %2859 = vst.msk [vmem:[#allocation5 + $0x78] sm:$0xff] %vm2843, %v2778
      %2860 = vst.msk [vmem:[#allocation5 + $0x80] sm:$0xff] %vm2843, %v2780
      %2861 = vst.msk [vmem:[#allocation5 + $0x88] sm:$0xff] %vm2843, %v2782
      %2862 = vst.msk [vmem:[#allocation5 + $0x90] sm:$0xff] %vm2843, %v2784
      %2863 = vst.msk [vmem:[#allocation5 + $0x98] sm:$0xff] %vm2843, %v2786
      %2864 = vst.msk [vmem:[#allocation5 + $0xa0] sm:$0xff] %vm2843, %v2788
      %2865 = vst.msk [vmem:[#allocation5 + $0xa8] sm:$0xff] %vm2843, %v2790
      %2866 = vst.msk [vmem:[#allocation5 + $0xb0] sm:$0xff] %vm2843, %v2792
      %2867 = vst.msk [vmem:[#allocation5 + $0xb8] sm:$0xff] %vm2843, %v2794
      %2868 = vst.msk [vmem:[#allocation5 + $0xc0] sm:$0xff] %vm2843, %v2796
      %2869 = vst.msk [vmem:[#allocation5 + $0xc8] sm:$0xff] %vm2843, %v2798
      %2870 = vst.msk [vmem:[#allocation5 + $0xd0] sm:$0xff] %vm2843, %v2800
      %2871 = vst.msk [vmem:[#allocation5 + $0xd8] sm:$0xff] %vm2843, %v2802
      %2872 = vst.msk [vmem:[#allocation5 + $0xe0] sm:$0xff] %vm2843, %v2804
      %2873 = vst.msk [vmem:[#allocation5 + $0xe8] sm:$0xff] %vm2843, %v2806
      %2874 = vst.msk [vmem:[#allocation5 + $0xf0] sm:$0xff] %vm2843, %v2808
      %2875 = vst.msk [vmem:[#allocation5 + $0xf8] sm:$0xff] %vm2843, %v2810
      %v2876 = vld [vmem:[%s2393] sm:$0xff]
      %v2877 = vld [vmem:[%s2393 + $0x8] sm:$0xff]
      %v2878 = vld [vmem:[%s2393 + $0x18] sm:$0xff]
      %v2879 = vld [vmem:[%s2393 + $0x20] sm:$0xff]
      %v2880 = vld [vmem:[%s2393 + $0x30] sm:$0xff]
      %v2881 = vld [vmem:[%s2393 + $0x38] sm:$0xff]
      %v2882 = vld [vmem:[%s2393 + $0x48] sm:$0xff]
      %v2883 = vld [vmem:[%s2393 + $0x50] sm:$0xff]
      %v2884 = vld [vmem:[%s2393 + $0x60] sm:$0xff]
      %v2885 = vld [vmem:[%s2393 + $0x68] sm:$0xff]
      %v2886 = vld [vmem:[%s2393 + $0x78] sm:$0xff]
      %v2887 = vld [vmem:[%s2393 + $0x80] sm:$0xff]
      %v2888 = vld [vmem:[%s2393 + $0x90] sm:$0xff]
      %v2889 = vld [vmem:[%s2393 + $0x98] sm:$0xff]
      %v2890 = vld [vmem:[%s2393 + $0xa8] sm:$0xff]
      %v2891 = vld [vmem:[%s2393 + $0xb0] sm:$0xff]
      %v2892 = vld [vmem:[%s2393 + $0xc0] sm:$0xff]
      %v2893 = vld [vmem:[%s2393 + $0xc8] sm:$0xff]
      %v2894 = vld [vmem:[%s2393 + $0xd8] sm:$0xff]
      %v2895 = vld [vmem:[%s2393 + $0xe0] sm:$0xff]
      %v2896 = vld [vmem:[%s2393 + $0xf0] sm:$0xff]
      %v2897 = vld [vmem:[%s2393 + $0xf8] sm:$0xff]
      %v2898 = vld [vmem:[%s2393 + $0x108] sm:$0xff]
      %v2899 = vld [vmem:[%s2393 + $0x110] sm:$0xff]
      %v2900 = vld [vmem:[%s2393 + $0x120] sm:$0xff]
      %v2901 = vld [vmem:[%s2393 + $0x128] sm:$0xff]
      %v2902 = vld [vmem:[%s2393 + $0x138] sm:$0xff]
      %v2903 = vld [vmem:[%s2393 + $0x140] sm:$0xff]
      %v2904 = vld [vmem:[%s2393 + $0x150] sm:$0xff]
      %v2905 = vld [vmem:[%s2393 + $0x158] sm:$0xff]
      %v2906 = vld [vmem:[%s2393 + $0x168] sm:$0xff]
      %v2907 = vld [vmem:[%s2393 + $0x170] sm:$0xff]
      %2940 = vrot.lane.b32.xlu0 %v2876, 24
      %v2941 = vpop.permute.xlu0 %2940
      %2942 = vrot.lane.b32.xlu0 %v2877, 24
      %v2943 = vpop.permute.xlu0 %2942
      %2944 = vrot.lane.b32.xlu0 %v2878, 24
      %v2945 = vpop.permute.xlu0 %2944
      %2946 = vrot.lane.b32.xlu0 %v2879, 24
      %v2947 = vpop.permute.xlu0 %2946
      %2948 = vrot.lane.b32.xlu0 %v2880, 24
      %v2949 = vpop.permute.xlu0 %2948
      %2950 = vrot.lane.b32.xlu0 %v2881, 24
      %v2951 = vpop.permute.xlu0 %2950
      %2952 = vrot.lane.b32.xlu0 %v2882, 24
      %v2953 = vpop.permute.xlu0 %2952
      %2954 = vrot.lane.b32.xlu0 %v2883, 24
      %v2955 = vpop.permute.xlu0 %2954
      %2956 = vrot.lane.b32.xlu0 %v2884, 24
      %v2957 = vpop.permute.xlu0 %2956
      %2958 = vrot.lane.b32.xlu0 %v2885, 24
      %v2959 = vpop.permute.xlu0 %2958
      %2960 = vrot.lane.b32.xlu0 %v2886, 24
      %v2961 = vpop.permute.xlu0 %2960
      %2962 = vrot.lane.b32.xlu0 %v2887, 24
      %v2963 = vpop.permute.xlu0 %2962
      %2964 = vrot.lane.b32.xlu0 %v2888, 24
      %v2965 = vpop.permute.xlu0 %2964
      %2966 = vrot.lane.b32.xlu0 %v2889, 24
      %v2967 = vpop.permute.xlu0 %2966
      %2968 = vrot.lane.b32.xlu0 %v2890, 24
      %v2969 = vpop.permute.xlu0 %2968
      %2970 = vrot.lane.b32.xlu0 %v2891, 24
      %v2971 = vpop.permute.xlu0 %2970
      %2972 = vrot.lane.b32.xlu0 %v2892, 24
      %v2973 = vpop.permute.xlu0 %2972
      %2974 = vrot.lane.b32.xlu0 %v2893, 24
      %v2975 = vpop.permute.xlu0 %2974
      %2976 = vrot.lane.b32.xlu0 %v2894, 24
      %v2977 = vpop.permute.xlu0 %2976
      %2978 = vrot.lane.b32.xlu0 %v2895, 24
      %v2979 = vpop.permute.xlu0 %2978
      %2980 = vrot.lane.b32.xlu0 %v2896, 24
      %v2981 = vpop.permute.xlu0 %2980
      %2982 = vrot.lane.b32.xlu0 %v2897, 24
      %v2983 = vpop.permute.xlu0 %2982
      %2984 = vrot.lane.b32.xlu0 %v2898, 24
      %v2985 = vpop.permute.xlu0 %2984
      %2986 = vrot.lane.b32.xlu0 %v2899, 24
      %v2987 = vpop.permute.xlu0 %2986
      %2988 = vrot.lane.b32.xlu0 %v2900, 24
      %v2989 = vpop.permute.xlu0 %2988
      %2990 = vrot.lane.b32.xlu0 %v2901, 24
      %v2991 = vpop.permute.xlu0 %2990
      %2992 = vrot.lane.b32.xlu0 %v2902, 24
      %v2993 = vpop.permute.xlu0 %2992
      %2994 = vrot.lane.b32.xlu0 %v2903, 24
      %v2995 = vpop.permute.xlu0 %2994
      %2996 = vrot.lane.b32.xlu0 %v2904, 24
      %v2997 = vpop.permute.xlu0 %2996
      %2998 = vrot.lane.b32.xlu0 %v2905, 24
      %v2999 = vpop.permute.xlu0 %2998
      %3000 = vrot.lane.b32.xlu0 %v2906, 24
      %v3001 = vpop.permute.xlu0 %3000
      %3002 = vrot.lane.b32.xlu0 %v2907, 24
      %v3003 = vpop.permute.xlu0 %3002
      %vm3036 = vcmask 261312
      %3037 = vst.msk [vmem:[#allocation5] sm:$0xff] %vm3036, %v2941
      %3038 = vst.msk [vmem:[#allocation5 + $0x8] sm:$0xff] %vm3036, %v2943
      %3039 = vst.msk [vmem:[#allocation5 + $0x10] sm:$0xff] %vm3036, %v2945
      %3040 = vst.msk [vmem:[#allocation5 + $0x18] sm:$0xff] %vm3036, %v2947
      %3041 = vst.msk [vmem:[#allocation5 + $0x20] sm:$0xff] %vm3036, %v2949
      %3042 = vst.msk [vmem:[#allocation5 + $0x28] sm:$0xff] %vm3036, %v2951
      %3043 = vst.msk [vmem:[#allocation5 + $0x30] sm:$0xff] %vm3036, %v2953
      %3044 = vst.msk [vmem:[#allocation5 + $0x38] sm:$0xff] %vm3036, %v2955
      %3045 = vst.msk [vmem:[#allocation5 + $0x40] sm:$0xff] %vm3036, %v2957
      %3046 = vst.msk [vmem:[#allocation5 + $0x48] sm:$0xff] %vm3036, %v2959
      %3047 = vst.msk [vmem:[#allocation5 + $0x50] sm:$0xff] %vm3036, %v2961
      %3048 = vst.msk [vmem:[#allocation5 + $0x58] sm:$0xff] %vm3036, %v2963
      %3049 = vst.msk [vmem:[#allocation5 + $0x60] sm:$0xff] %vm3036, %v2965
      %3050 = vst.msk [vmem:[#allocation5 + $0x68] sm:$0xff] %vm3036, %v2967
      %3051 = vst.msk [vmem:[#allocation5 + $0x70] sm:$0xff] %vm3036, %v2969
      %3052 = vst.msk [vmem:[#allocation5 + $0x78] sm:$0xff] %vm3036, %v2971
      %3053 = vst.msk [vmem:[#allocation5 + $0x80] sm:$0xff] %vm3036, %v2973
      %3054 = vst.msk [vmem:[#allocation5 + $0x88] sm:$0xff] %vm3036, %v2975
      %3055 = vst.msk [vmem:[#allocation5 + $0x90] sm:$0xff] %vm3036, %v2977
      %3056 = vst.msk [vmem:[#allocation5 + $0x98] sm:$0xff] %vm3036, %v2979
      %3057 = vst.msk [vmem:[#allocation5 + $0xa0] sm:$0xff] %vm3036, %v2981
      %3058 = vst.msk [vmem:[#allocation5 + $0xa8] sm:$0xff] %vm3036, %v2983
      %3059 = vst.msk [vmem:[#allocation5 + $0xb0] sm:$0xff] %vm3036, %v2985
      %3060 = vst.msk [vmem:[#allocation5 + $0xb8] sm:$0xff] %vm3036, %v2987
      %3061 = vst.msk [vmem:[#allocation5 + $0xc0] sm:$0xff] %vm3036, %v2989
      %3062 = vst.msk [vmem:[#allocation5 + $0xc8] sm:$0xff] %vm3036, %v2991
      %3063 = vst.msk [vmem:[#allocation5 + $0xd0] sm:$0xff] %vm3036, %v2993
      %3064 = vst.msk [vmem:[#allocation5 + $0xd8] sm:$0xff] %vm3036, %v2995
      %3065 = vst.msk [vmem:[#allocation5 + $0xe0] sm:$0xff] %vm3036, %v2997
      %3066 = vst.msk [vmem:[#allocation5 + $0xe8] sm:$0xff] %vm3036, %v2999
      %3067 = vst.msk [vmem:[#allocation5 + $0xf0] sm:$0xff] %vm3036, %v3001
      %3068 = vst.msk [vmem:[#allocation5 + $0xf8] sm:$0xff] %vm3036, %v3003
      %v3069 = vld [vmem:[%s2393 + $0x1] sm:$0xff]
      %v3070 = vld [vmem:[%s2393 + $0x9] sm:$0xff]
      %v3071 = vld [vmem:[%s2393 + $0x19] sm:$0xff]
      %v3072 = vld [vmem:[%s2393 + $0x21] sm:$0xff]
      %v3073 = vld [vmem:[%s2393 + $0x31] sm:$0xff]
      %v3074 = vld [vmem:[%s2393 + $0x39] sm:$0xff]
      %v3075 = vld [vmem:[%s2393 + $0x49] sm:$0xff]
      %v3076 = vld [vmem:[%s2393 + $0x51] sm:$0xff]
      %v3077 = vld [vmem:[%s2393 + $0x61] sm:$0xff]
      %v3078 = vld [vmem:[%s2393 + $0x69] sm:$0xff]
      %v3079 = vld [vmem:[%s2393 + $0x79] sm:$0xff]
      %v3080 = vld [vmem:[%s2393 + $0x81] sm:$0xff]
      %v3081 = vld [vmem:[%s2393 + $0x91] sm:$0xff]
      %v3082 = vld [vmem:[%s2393 + $0x99] sm:$0xff]
      %v3083 = vld [vmem:[%s2393 + $0xa9] sm:$0xff]
      %v3084 = vld [vmem:[%s2393 + $0xb1] sm:$0xff]
      %v3085 = vld [vmem:[%s2393 + $0xc1] sm:$0xff]
      %v3086 = vld [vmem:[%s2393 + $0xc9] sm:$0xff]
      %v3087 = vld [vmem:[%s2393 + $0xd9] sm:$0xff]
      %v3088 = vld [vmem:[%s2393 + $0xe1] sm:$0xff]
      %v3089 = vld [vmem:[%s2393 + $0xf1] sm:$0xff]
      %v3090 = vld [vmem:[%s2393 + $0xf9] sm:$0xff]
      %v3091 = vld [vmem:[%s2393 + $0x109] sm:$0xff]
      %v3092 = vld [vmem:[%s2393 + $0x111] sm:$0xff]
      %v3093 = vld [vmem:[%s2393 + $0x121] sm:$0xff]
      %v3094 = vld [vmem:[%s2393 + $0x129] sm:$0xff]
      %v3095 = vld [vmem:[%s2393 + $0x139] sm:$0xff]
      %v3096 = vld [vmem:[%s2393 + $0x141] sm:$0xff]
      %v3097 = vld [vmem:[%s2393 + $0x151] sm:$0xff]
      %v3098 = vld [vmem:[%s2393 + $0x159] sm:$0xff]
      %v3099 = vld [vmem:[%s2393 + $0x169] sm:$0xff]
      %v3100 = vld [vmem:[%s2393 + $0x171] sm:$0xff]
      %3133 = vrot.lane.b32.xlu0 %v3069, 32
      %v3134 = vpop.permute.xlu0 %3133
      %3135 = vrot.lane.b32.xlu0 %v3070, 32
      %v3136 = vpop.permute.xlu0 %3135
      %3137 = vrot.lane.b32.xlu0 %v3071, 32
      %v3138 = vpop.permute.xlu0 %3137
      %3139 = vrot.lane.b32.xlu0 %v3072, 32
      %v3140 = vpop.permute.xlu0 %3139
      %3141 = vrot.lane.b32.xlu0 %v3073, 32
      %v3142 = vpop.permute.xlu0 %3141
      %3143 = vrot.lane.b32.xlu0 %v3074, 32
      %v3144 = vpop.permute.xlu0 %3143
      %3145 = vrot.lane.b32.xlu0 %v3075, 32
      %v3146 = vpop.permute.xlu0 %3145
      %3147 = vrot.lane.b32.xlu0 %v3076, 32
      %v3148 = vpop.permute.xlu0 %3147
      %3149 = vrot.lane.b32.xlu0 %v3077, 32
      %v3150 = vpop.permute.xlu0 %3149
      %3151 = vrot.lane.b32.xlu0 %v3078, 32
      %v3152 = vpop.permute.xlu0 %3151
      %3153 = vrot.lane.b32.xlu0 %v3079, 32
      %v3154 = vpop.permute.xlu0 %3153
      %3155 = vrot.lane.b32.xlu0 %v3080, 32
      %v3156 = vpop.permute.xlu0 %3155
      %3157 = vrot.lane.b32.xlu0 %v3081, 32
      %v3158 = vpop.permute.xlu0 %3157
      %3159 = vrot.lane.b32.xlu0 %v3082, 32
      %v3160 = vpop.permute.xlu0 %3159
      %3161 = vrot.lane.b32.xlu0 %v3083, 32
      %v3162 = vpop.permute.xlu0 %3161
      %3163 = vrot.lane.b32.xlu0 %v3084, 32
      %v3164 = vpop.permute.xlu0 %3163
      %3165 = vrot.lane.b32.xlu0 %v3085, 32
      %v3166 = vpop.permute.xlu0 %3165
      %3167 = vrot.lane.b32.xlu0 %v3086, 32
      %v3168 = vpop.permute.xlu0 %3167
      %3169 = vrot.lane.b32.xlu0 %v3087, 32
      %v3170 = vpop.permute.xlu0 %3169
      %3171 = vrot.lane.b32.xlu0 %v3088, 32
      %v3172 = vpop.permute.xlu0 %3171
      %3173 = vrot.lane.b32.xlu0 %v3089, 32
      %v3174 = vpop.permute.xlu0 %3173
      %3175 = vrot.lane.b32.xlu0 %v3090, 32
      %v3176 = vpop.permute.xlu0 %3175
      %3177 = vrot.lane.b32.xlu0 %v3091, 32
      %v3178 = vpop.permute.xlu0 %3177
      %3179 = vrot.lane.b32.xlu0 %v3092, 32
      %v3180 = vpop.permute.xlu0 %3179
      %3181 = vrot.lane.b32.xlu0 %v3093, 32
      %v3182 = vpop.permute.xlu0 %3181
      %3183 = vrot.lane.b32.xlu0 %v3094, 32
      %v3184 = vpop.permute.xlu0 %3183
      %3185 = vrot.lane.b32.xlu0 %v3095, 32
      %v3186 = vpop.permute.xlu0 %3185
      %3187 = vrot.lane.b32.xlu0 %v3096, 32
      %v3188 = vpop.permute.xlu0 %3187
      %3189 = vrot.lane.b32.xlu0 %v3097, 32
      %v3190 = vpop.permute.xlu0 %3189
      %3191 = vrot.lane.b32.xlu0 %v3098, 32
      %v3192 = vpop.permute.xlu0 %3191
      %3193 = vrot.lane.b32.xlu0 %v3099, 32
      %v3194 = vpop.permute.xlu0 %3193
      %3195 = vrot.lane.b32.xlu0 %v3100, 32
      %v3196 = vpop.permute.xlu0 %3195
      %vm3229 = vcmask 326912
      %3230 = vst.msk [vmem:[#allocation5] sm:$0xff] %vm3229, %v3134
      %3231 = vst.msk [vmem:[#allocation5 + $0x8] sm:$0xff] %vm3229, %v3136
      %3232 = vst.msk [vmem:[#allocation5 + $0x10] sm:$0xff] %vm3229, %v3138
      %3233 = vst.msk [vmem:[#allocation5 + $0x18] sm:$0xff] %vm3229, %v3140
      %3234 = vst.msk [vmem:[#allocation5 + $0x20] sm:$0xff] %vm3229, %v3142
      %3235 = vst.msk [vmem:[#allocation5 + $0x28] sm:$0xff] %vm3229, %v3144
      %3236 = vst.msk [vmem:[#allocation5 + $0x30] sm:$0xff] %vm3229, %v3146
      %3237 = vst.msk [vmem:[#allocation5 + $0x38] sm:$0xff] %vm3229, %v3148
      %3238 = vst.msk [vmem:[#allocation5 + $0x40] sm:$0xff] %vm3229, %v3150
      %3239 = vst.msk [vmem:[#allocation5 + $0x48] sm:$0xff] %vm3229, %v3152
      %3240 = vst.msk [vmem:[#allocation5 + $0x50] sm:$0xff] %vm3229, %v3154
      %3241 = vst.msk [vmem:[#allocation5 + $0x58] sm:$0xff] %vm3229, %v3156
      %3242 = vst.msk [vmem:[#allocation5 + $0x60] sm:$0xff] %vm3229, %v3158
      %3243 = vst.msk [vmem:[#allocation5 + $0x68] sm:$0xff] %vm3229, %v3160
      %3244 = vst.msk [vmem:[#allocation5 + $0x70] sm:$0xff] %vm3229, %v3162
      %3245 = vst.msk [vmem:[#allocation5 + $0x78] sm:$0xff] %vm3229, %v3164
      %3246 = vst.msk [vmem:[#allocation5 + $0x80] sm:$0xff] %vm3229, %v3166
      %3247 = vst.msk [vmem:[#allocation5 + $0x88] sm:$0xff] %vm3229, %v3168
      %3248 = vst.msk [vmem:[#allocation5 + $0x90] sm:$0xff] %vm3229, %v3170
      %3249 = vst.msk [vmem:[#allocation5 + $0x98] sm:$0xff] %vm3229, %v3172
      %3250 = vst.msk [vmem:[#allocation5 + $0xa0] sm:$0xff] %vm3229, %v3174
      %3251 = vst.msk [vmem:[#allocation5 + $0xa8] sm:$0xff] %vm3229, %v3176
      %3252 = vst.msk [vmem:[#allocation5 + $0xb0] sm:$0xff] %vm3229, %v3178
      %3253 = vst.msk [vmem:[#allocation5 + $0xb8] sm:$0xff] %vm3229, %v3180
      %3254 = vst.msk [vmem:[#allocation5 + $0xc0] sm:$0xff] %vm3229, %v3182
      %3255 = vst.msk [vmem:[#allocation5 + $0xc8] sm:$0xff] %vm3229, %v3184
      %3256 = vst.msk [vmem:[#allocation5 + $0xd0] sm:$0xff] %vm3229, %v3186
      %3257 = vst.msk [vmem:[#allocation5 + $0xd8] sm:$0xff] %vm3229, %v3188
      %3258 = vst.msk [vmem:[#allocation5 + $0xe0] sm:$0xff] %vm3229, %v3190
      %3259 = vst.msk [vmem:[#allocation5 + $0xe8] sm:$0xff] %vm3229, %v3192
      %3260 = vst.msk [vmem:[#allocation5 + $0xf0] sm:$0xff] %vm3229, %v3194
      %3261 = vst.msk [vmem:[#allocation5 + $0xf8] sm:$0xff] %vm3229, %v3196
      %v3262 = vld [vmem:[%s2393 + $0x2] sm:$0xff]
      %v3263 = vld [vmem:[%s2393 + $0xa] sm:$0xff]
      %v3264 = vld [vmem:[%s2393 + $0x1a] sm:$0xff]
      %v3265 = vld [vmem:[%s2393 + $0x22] sm:$0xff]
      %v3266 = vld [vmem:[%s2393 + $0x32] sm:$0xff]
      %v3267 = vld [vmem:[%s2393 + $0x3a] sm:$0xff]
      %v3268 = vld [vmem:[%s2393 + $0x4a] sm:$0xff]
      %v3269 = vld [vmem:[%s2393 + $0x52] sm:$0xff]
      %v3270 = vld [vmem:[%s2393 + $0x62] sm:$0xff]
      %v3271 = vld [vmem:[%s2393 + $0x6a] sm:$0xff]
      %v3272 = vld [vmem:[%s2393 + $0x7a] sm:$0xff]
      %v3273 = vld [vmem:[%s2393 + $0x82] sm:$0xff]
      %v3274 = vld [vmem:[%s2393 + $0x92] sm:$0xff]
      %v3275 = vld [vmem:[%s2393 + $0x9a] sm:$0xff]
      %v3276 = vld [vmem:[%s2393 + $0xaa] sm:$0xff]
      %v3277 = vld [vmem:[%s2393 + $0xb2] sm:$0xff]
      %v3278 = vld [vmem:[%s2393 + $0xc2] sm:$0xff]
      %v3279 = vld [vmem:[%s2393 + $0xca] sm:$0xff]
      %v3280 = vld [vmem:[%s2393 + $0xda] sm:$0xff]
      %v3281 = vld [vmem:[%s2393 + $0xe2] sm:$0xff]
      %v3282 = vld [vmem:[%s2393 + $0xf2] sm:$0xff]
      %v3283 = vld [vmem:[%s2393 + $0xfa] sm:$0xff]
      %v3284 = vld [vmem:[%s2393 + $0x10a] sm:$0xff]
      %v3285 = vld [vmem:[%s2393 + $0x112] sm:$0xff]
      %v3286 = vld [vmem:[%s2393 + $0x122] sm:$0xff]
      %v3287 = vld [vmem:[%s2393 + $0x12a] sm:$0xff]
      %v3288 = vld [vmem:[%s2393 + $0x13a] sm:$0xff]
      %v3289 = vld [vmem:[%s2393 + $0x142] sm:$0xff]
      %v3290 = vld [vmem:[%s2393 + $0x152] sm:$0xff]
      %v3291 = vld [vmem:[%s2393 + $0x15a] sm:$0xff]
      %v3292 = vld [vmem:[%s2393 + $0x16a] sm:$0xff]
      %v3293 = vld [vmem:[%s2393 + $0x172] sm:$0xff]
      %3326 = vrot.lane.b32.xlu0 %v3262, 40
      %v3327 = vpop.permute.xlu0 %3326
      %3328 = vrot.lane.b32.xlu0 %v3263, 40
      %v3329 = vpop.permute.xlu0 %3328
      %3330 = vrot.lane.b32.xlu0 %v3264, 40
      %v3331 = vpop.permute.xlu0 %3330
      %3332 = vrot.lane.b32.xlu0 %v3265, 40
      %v3333 = vpop.permute.xlu0 %3332
      %3334 = vrot.lane.b32.xlu0 %v3266, 40
      %v3335 = vpop.permute.xlu0 %3334
      %3336 = vrot.lane.b32.xlu0 %v3267, 40
      %v3337 = vpop.permute.xlu0 %3336
      %3338 = vrot.lane.b32.xlu0 %v3268, 40
      %v3339 = vpop.permute.xlu0 %3338
      %3340 = vrot.lane.b32.xlu0 %v3269, 40
      %v3341 = vpop.permute.xlu0 %3340
      %3342 = vrot.lane.b32.xlu0 %v3270, 40
      %v3343 = vpop.permute.xlu0 %3342
      %3344 = vrot.lane.b32.xlu0 %v3271, 40
      %v3345 = vpop.permute.xlu0 %3344
      %3346 = vrot.lane.b32.xlu0 %v3272, 40
      %v3347 = vpop.permute.xlu0 %3346
      %3348 = vrot.lane.b32.xlu0 %v3273, 40
      %v3349 = vpop.permute.xlu0 %3348
      %3350 = vrot.lane.b32.xlu0 %v3274, 40
      %v3351 = vpop.permute.xlu0 %3350
      %3352 = vrot.lane.b32.xlu0 %v3275, 40
      %v3353 = vpop.permute.xlu0 %3352
      %3354 = vrot.lane.b32.xlu0 %v3276, 40
      %v3355 = vpop.permute.xlu0 %3354
      %3356 = vrot.lane.b32.xlu0 %v3277, 40
      %v3357 = vpop.permute.xlu0 %3356
      %3358 = vrot.lane.b32.xlu0 %v3278, 40
      %v3359 = vpop.permute.xlu0 %3358
      %3360 = vrot.lane.b32.xlu0 %v3279, 40
      %v3361 = vpop.permute.xlu0 %3360
      %3362 = vrot.lane.b32.xlu0 %v3280, 40
      %v3363 = vpop.permute.xlu0 %3362
      %3364 = vrot.lane.b32.xlu0 %v3281, 40
      %v3365 = vpop.permute.xlu0 %3364
      %3366 = vrot.lane.b32.xlu0 %v3282, 40
      %v3367 = vpop.permute.xlu0 %3366
      %3368 = vrot.lane.b32.xlu0 %v3283, 40
      %v3369 = vpop.permute.xlu0 %3368
      %3370 = vrot.lane.b32.xlu0 %v3284, 40
      %v3371 = vpop.permute.xlu0 %3370
      %3372 = vrot.lane.b32.xlu0 %v3285, 40
      %v3373 = vpop.permute.xlu0 %3372
      %3374 = vrot.lane.b32.xlu0 %v3286, 40
      %v3375 = vpop.permute.xlu0 %3374
      %3376 = vrot.lane.b32.xlu0 %v3287, 40
      %v3377 = vpop.permute.xlu0 %3376
      %3378 = vrot.lane.b32.xlu0 %v3288, 40
      %v3379 = vpop.permute.xlu0 %3378
      %3380 = vrot.lane.b32.xlu0 %v3289, 40
      %v3381 = vpop.permute.xlu0 %3380
      %3382 = vrot.lane.b32.xlu0 %v3290, 40
      %v3383 = vpop.permute.xlu0 %3382
      %3384 = vrot.lane.b32.xlu0 %v3291, 40
      %v3385 = vpop.permute.xlu0 %3384
      %3386 = vrot.lane.b32.xlu0 %v3292, 40
      %v3387 = vpop.permute.xlu0 %3386
      %3388 = vrot.lane.b32.xlu0 %v3293, 40
      %v3389 = vpop.permute.xlu0 %3388
      %vm3422 = vcmask 392512
      %3423 = vst.msk [vmem:[#allocation5] sm:$0xff] %vm3422, %v3327
      %3424 = vst.msk [vmem:[#allocation5 + $0x8] sm:$0xff] %vm3422, %v3329
      %3425 = vst.msk [vmem:[#allocation5 + $0x10] sm:$0xff] %vm3422, %v3331
      %3426 = vst.msk [vmem:[#allocation5 + $0x18] sm:$0xff] %vm3422, %v3333
      %3427 = vst.msk [vmem:[#allocation5 + $0x20] sm:$0xff] %vm3422, %v3335
      %3428 = vst.msk [vmem:[#allocation5 + $0x28] sm:$0xff] %vm3422, %v3337
      %3429 = vst.msk [vmem:[#allocation5 + $0x30] sm:$0xff] %vm3422, %v3339
      %3430 = vst.msk [vmem:[#allocation5 + $0x38] sm:$0xff] %vm3422, %v3341
      %3431 = vst.msk [vmem:[#allocation5 + $0x40] sm:$0xff] %vm3422, %v3343
      %3432 = vst.msk [vmem:[#allocation5 + $0x48] sm:$0xff] %vm3422, %v3345
      %3433 = vst.msk [vmem:[#allocation5 + $0x50] sm:$0xff] %vm3422, %v3347
      %3434 = vst.msk [vmem:[#allocation5 + $0x58] sm:$0xff] %vm3422, %v3349
      %3435 = vst.msk [vmem:[#allocation5 + $0x60] sm:$0xff] %vm3422, %v3351
      %3436 = vst.msk [vmem:[#allocation5 + $0x68] sm:$0xff] %vm3422, %v3353
      %3437 = vst.msk [vmem:[#allocation5 + $0x70] sm:$0xff] %vm3422, %v3355
      %3438 = vst.msk [vmem:[#allocation5 + $0x78] sm:$0xff] %vm3422, %v3357
      %3439 = vst.msk [vmem:[#allocation5 + $0x80] sm:$0xff] %vm3422, %v3359
      %3440 = vst.msk [vmem:[#allocation5 + $0x88] sm:$0xff] %vm3422, %v3361
      %3441 = vst.msk [vmem:[#allocation5 + $0x90] sm:$0xff] %vm3422, %v3363
      %3442 = vst.msk [vmem:[#allocation5 + $0x98] sm:$0xff] %vm3422, %v3365
      %3443 = vst.msk [vmem:[#allocation5 + $0xa0] sm:$0xff] %vm3422, %v3367
      %3444 = vst.msk [vmem:[#allocation5 + $0xa8] sm:$0xff] %vm3422, %v3369
      %3445 = vst.msk [vmem:[#allocation5 + $0xb0] sm:$0xff] %vm3422, %v3371
      %3446 = vst.msk [vmem:[#allocation5 + $0xb8] sm:$0xff] %vm3422, %v3373
      %3447 = vst.msk [vmem:[#allocation5 + $0xc0] sm:$0xff] %vm3422, %v3375
      %3448 = vst.msk [vmem:[#allocation5 + $0xc8] sm:$0xff] %vm3422, %v3377
      %3449 = vst.msk [vmem:[#allocation5 + $0xd0] sm:$0xff] %vm3422, %v3379
      %3450 = vst.msk [vmem:[#allocation5 + $0xd8] sm:$0xff] %vm3422, %v3381
      %3451 = vst.msk [vmem:[#allocation5 + $0xe0] sm:$0xff] %vm3422, %v3383
      %3452 = vst.msk [vmem:[#allocation5 + $0xe8] sm:$0xff] %vm3422, %v3385
      %3453 = vst.msk [vmem:[#allocation5 + $0xf0] sm:$0xff] %vm3422, %v3387
      %3454 = vst.msk [vmem:[#allocation5 + $0xf8] sm:$0xff] %vm3422, %v3389
      %s3455 = scalar_lea.vmem [#allocation3], 48
      %v3456 = vld [vmem:[%s3455] sm:$0xff]
      %v3457 = vld [vmem:[%s3455 + $0x8] sm:$0xff]
      %v3458 = vld [vmem:[%s3455 + $0x18] sm:$0xff]
      %v3459 = vld [vmem:[%s3455 + $0x20] sm:$0xff]
      %v3460 = vld [vmem:[%s3455 + $0x30] sm:$0xff]
      %v3461 = vld [vmem:[%s3455 + $0x38] sm:$0xff]
      %v3462 = vld [vmem:[%s3455 + $0x48] sm:$0xff]
      %v3463 = vld [vmem:[%s3455 + $0x50] sm:$0xff]
      %v3464 = vld [vmem:[%s3455 + $0x60] sm:$0xff]
      %v3465 = vld [vmem:[%s3455 + $0x68] sm:$0xff]
      %v3466 = vld [vmem:[%s3455 + $0x78] sm:$0xff]
      %v3467 = vld [vmem:[%s3455 + $0x80] sm:$0xff]
      %v3468 = vld [vmem:[%s3455 + $0x90] sm:$0xff]
      %v3469 = vld [vmem:[%s3455 + $0x98] sm:$0xff]
      %v3470 = vld [vmem:[%s3455 + $0xa8] sm:$0xff]
      %v3471 = vld [vmem:[%s3455 + $0xb0] sm:$0xff]
      %v3472 = vld [vmem:[%s3455 + $0xc0] sm:$0xff]
      %v3473 = vld [vmem:[%s3455 + $0xc8] sm:$0xff]
      %v3474 = vld [vmem:[%s3455 + $0xd8] sm:$0xff]
      %v3475 = vld [vmem:[%s3455 + $0xe0] sm:$0xff]
      %v3476 = vld [vmem:[%s3455 + $0xf0] sm:$0xff]
      %v3477 = vld [vmem:[%s3455 + $0xf8] sm:$0xff]
      %v3478 = vld [vmem:[%s3455 + $0x108] sm:$0xff]
      %v3479 = vld [vmem:[%s3455 + $0x110] sm:$0xff]
      %v3480 = vld [vmem:[%s3455 + $0x120] sm:$0xff]
      %v3481 = vld [vmem:[%s3455 + $0x128] sm:$0xff]
      %v3482 = vld [vmem:[%s3455 + $0x138] sm:$0xff]
      %v3483 = vld [vmem:[%s3455 + $0x140] sm:$0xff]
      %v3484 = vld [vmem:[%s3455 + $0x150] sm:$0xff]
      %v3485 = vld [vmem:[%s3455 + $0x158] sm:$0xff]
      %v3486 = vld [vmem:[%s3455 + $0x168] sm:$0xff]
      %v3487 = vld [vmem:[%s3455 + $0x170] sm:$0xff]
      %3520 = vrot.lane.b32.xlu0 %v3456, 48
      %v3521 = vpop.permute.xlu0 %3520
      %3522 = vrot.lane.b32.xlu0 %v3457, 48
      %v3523 = vpop.permute.xlu0 %3522
      %3524 = vrot.lane.b32.xlu0 %v3458, 48
      %v3525 = vpop.permute.xlu0 %3524
      %3526 = vrot.lane.b32.xlu0 %v3459, 48
      %v3527 = vpop.permute.xlu0 %3526
      %3528 = vrot.lane.b32.xlu0 %v3460, 48
      %v3529 = vpop.permute.xlu0 %3528
      %3530 = vrot.lane.b32.xlu0 %v3461, 48
      %v3531 = vpop.permute.xlu0 %3530
      %3532 = vrot.lane.b32.xlu0 %v3462, 48
      %v3533 = vpop.permute.xlu0 %3532
      %3534 = vrot.lane.b32.xlu0 %v3463, 48
      %v3535 = vpop.permute.xlu0 %3534
      %3536 = vrot.lane.b32.xlu0 %v3464, 48
      %v3537 = vpop.permute.xlu0 %3536
      %3538 = vrot.lane.b32.xlu0 %v3465, 48
      %v3539 = vpop.permute.xlu0 %3538
      %3540 = vrot.lane.b32.xlu0 %v3466, 48
      %v3541 = vpop.permute.xlu0 %3540
      %3542 = vrot.lane.b32.xlu0 %v3467, 48
      %v3543 = vpop.permute.xlu0 %3542
      %3544 = vrot.lane.b32.xlu0 %v3468, 48
      %v3545 = vpop.permute.xlu0 %3544
      %3546 = vrot.lane.b32.xlu0 %v3469, 48
      %v3547 = vpop.permute.xlu0 %3546
      %3548 = vrot.lane.b32.xlu0 %v3470, 48
      %v3549 = vpop.permute.xlu0 %3548
      %3550 = vrot.lane.b32.xlu0 %v3471, 48
      %v3551 = vpop.permute.xlu0 %3550
      %3552 = vrot.lane.b32.xlu0 %v3472, 48
      %v3553 = vpop.permute.xlu0 %3552
      %3554 = vrot.lane.b32.xlu0 %v3473, 48
      %v3555 = vpop.permute.xlu0 %3554
      %3556 = vrot.lane.b32.xlu0 %v3474, 48
      %v3557 = vpop.permute.xlu0 %3556
      %3558 = vrot.lane.b32.xlu0 %v3475, 48
      %v3559 = vpop.permute.xlu0 %3558
      %3560 = vrot.lane.b32.xlu0 %v3476, 48
      %v3561 = vpop.permute.xlu0 %3560
      %3562 = vrot.lane.b32.xlu0 %v3477, 48
      %v3563 = vpop.permute.xlu0 %3562
      %3564 = vrot.lane.b32.xlu0 %v3478, 48
      %v3565 = vpop.permute.xlu0 %3564
      %3566 = vrot.lane.b32.xlu0 %v3479, 48
      %v3567 = vpop.permute.xlu0 %3566
      %3568 = vrot.lane.b32.xlu0 %v3480, 48
      %v3569 = vpop.permute.xlu0 %3568
      %3570 = vrot.lane.b32.xlu0 %v3481, 48
      %v3571 = vpop.permute.xlu0 %3570
      %3572 = vrot.lane.b32.xlu0 %v3482, 48
      %v3573 = vpop.permute.xlu0 %3572
      %3574 = vrot.lane.b32.xlu0 %v3483, 48
      %v3575 = vpop.permute.xlu0 %3574
      %3576 = vrot.lane.b32.xlu0 %v3484, 48
      %v3577 = vpop.permute.xlu0 %3576
      %3578 = vrot.lane.b32.xlu0 %v3485, 48
      %v3579 = vpop.permute.xlu0 %3578
      %3580 = vrot.lane.b32.xlu0 %v3486, 48
      %v3581 = vpop.permute.xlu0 %3580
      %3582 = vrot.lane.b32.xlu0 %v3487, 48
      %v3583 = vpop.permute.xlu0 %3582
      %vm3616 = vcmask 458112
      %3617 = vst.msk [vmem:[#allocation5] sm:$0xff] %vm3616, %v3521
      %3618 = vst.msk [vmem:[#allocation5 + $0x8] sm:$0xff] %vm3616, %v3523
      %3619 = vst.msk [vmem:[#allocation5 + $0x10] sm:$0xff] %vm3616, %v3525
      %3620 = vst.msk [vmem:[#allocation5 + $0x18] sm:$0xff] %vm3616, %v3527
      %3621 = vst.msk [vmem:[#allocation5 + $0x20] sm:$0xff] %vm3616, %v3529
      %3622 = vst.msk [vmem:[#allocation5 + $0x28] sm:$0xff] %vm3616, %v3531
      %3623 = vst.msk [vmem:[#allocation5 + $0x30] sm:$0xff] %vm3616, %v3533
      %3624 = vst.msk [vmem:[#allocation5 + $0x38] sm:$0xff] %vm3616, %v3535
      %3625 = vst.msk [vmem:[#allocation5 + $0x40] sm:$0xff] %vm3616, %v3537
      %3626 = vst.msk [vmem:[#allocation5 + $0x48] sm:$0xff] %vm3616, %v3539
      %3627 = vst.msk [vmem:[#allocation5 + $0x50] sm:$0xff] %vm3616, %v3541
      %3628 = vst.msk [vmem:[#allocation5 + $0x58] sm:$0xff] %vm3616, %v3543
      %3629 = vst.msk [vmem:[#allocation5 + $0x60] sm:$0xff] %vm3616, %v3545
      %3630 = vst.msk [vmem:[#allocation5 + $0x68] sm:$0xff] %vm3616, %v3547
      %3631 = vst.msk [vmem:[#allocation5 + $0x70] sm:$0xff] %vm3616, %v3549
      %3632 = vst.msk [vmem:[#allocation5 + $0x78] sm:$0xff] %vm3616, %v3551
      %3633 = vst.msk [vmem:[#allocation5 + $0x80] sm:$0xff] %vm3616, %v3553
      %3634 = vst.msk [vmem:[#allocation5 + $0x88] sm:$0xff] %vm3616, %v3555
      %3635 = vst.msk [vmem:[#allocation5 + $0x90] sm:$0xff] %vm3616, %v3557
      %3636 = vst.msk [vmem:[#allocation5 + $0x98] sm:$0xff] %vm3616, %v3559
      %3637 = vst.msk [vmem:[#allocation5 + $0xa0] sm:$0xff] %vm3616, %v3561
      %3638 = vst.msk [vmem:[#allocation5 + $0xa8] sm:$0xff] %vm3616, %v3563
      %3639 = vst.msk [vmem:[#allocation5 + $0xb0] sm:$0xff] %vm3616, %v3565
      %3640 = vst.msk [vmem:[#allocation5 + $0xb8] sm:$0xff] %vm3616, %v3567
      %3641 = vst.msk [vmem:[#allocation5 + $0xc0] sm:$0xff] %vm3616, %v3569
      %3642 = vst.msk [vmem:[#allocation5 + $0xc8] sm:$0xff] %vm3616, %v3571
      %3643 = vst.msk [vmem:[#allocation5 + $0xd0] sm:$0xff] %vm3616, %v3573
      %3644 = vst.msk [vmem:[#allocation5 + $0xd8] sm:$0xff] %vm3616, %v3575
      %3645 = vst.msk [vmem:[#allocation5 + $0xe0] sm:$0xff] %vm3616, %v3577
      %3646 = vst.msk [vmem:[#allocation5 + $0xe8] sm:$0xff] %vm3616, %v3579
      %3647 = vst.msk [vmem:[#allocation5 + $0xf0] sm:$0xff] %vm3616, %v3581
      %3648 = vst.msk [vmem:[#allocation5 + $0xf8] sm:$0xff] %vm3616, %v3583
      %v3649 = vld [vmem:[%s3455 + $0x1] sm:$0xff]
      %v3650 = vld [vmem:[%s3455 + $0x9] sm:$0xff]
      %v3651 = vld [vmem:[%s3455 + $0x19] sm:$0xff]
      %v3652 = vld [vmem:[%s3455 + $0x21] sm:$0xff]
      %v3653 = vld [vmem:[%s3455 + $0x31] sm:$0xff]
      %v3654 = vld [vmem:[%s3455 + $0x39] sm:$0xff]
      %v3655 = vld [vmem:[%s3455 + $0x49] sm:$0xff]
      %v3656 = vld [vmem:[%s3455 + $0x51] sm:$0xff]
      %v3657 = vld [vmem:[%s3455 + $0x61] sm:$0xff]
      %v3658 = vld [vmem:[%s3455 + $0x69] sm:$0xff]
      %v3659 = vld [vmem:[%s3455 + $0x79] sm:$0xff]
      %v3660 = vld [vmem:[%s3455 + $0x81] sm:$0xff]
      %v3661 = vld [vmem:[%s3455 + $0x91] sm:$0xff]
      %v3662 = vld [vmem:[%s3455 + $0x99] sm:$0xff]
      %v3663 = vld [vmem:[%s3455 + $0xa9] sm:$0xff]
      %v3664 = vld [vmem:[%s3455 + $0xb1] sm:$0xff]
      %v3665 = vld [vmem:[%s3455 + $0xc1] sm:$0xff]
      %v3666 = vld [vmem:[%s3455 + $0xc9] sm:$0xff]
      %v3667 = vld [vmem:[%s3455 + $0xd9] sm:$0xff]
      %v3668 = vld [vmem:[%s3455 + $0xe1] sm:$0xff]
      %v3669 = vld [vmem:[%s3455 + $0xf1] sm:$0xff]
      %v3670 = vld [vmem:[%s3455 + $0xf9] sm:$0xff]
      %v3671 = vld [vmem:[%s3455 + $0x109] sm:$0xff]
      %v3672 = vld [vmem:[%s3455 + $0x111] sm:$0xff]
      %v3673 = vld [vmem:[%s3455 + $0x121] sm:$0xff]
      %v3674 = vld [vmem:[%s3455 + $0x129] sm:$0xff]
      %v3675 = vld [vmem:[%s3455 + $0x139] sm:$0xff]
      %v3676 = vld [vmem:[%s3455 + $0x141] sm:$0xff]
      %v3677 = vld [vmem:[%s3455 + $0x151] sm:$0xff]
      %v3678 = vld [vmem:[%s3455 + $0x159] sm:$0xff]
      %v3679 = vld [vmem:[%s3455 + $0x169] sm:$0xff]
      %v3680 = vld [vmem:[%s3455 + $0x171] sm:$0xff]
      %3713 = vrot.lane.b32.xlu0 %v3649, 56
      %v3714 = vpop.permute.xlu0 %3713
      %3715 = vrot.lane.b32.xlu0 %v3650, 56
      %v3716 = vpop.permute.xlu0 %3715
      %3717 = vrot.lane.b32.xlu0 %v3651, 56
      %v3718 = vpop.permute.xlu0 %3717
      %3719 = vrot.lane.b32.xlu0 %v3652, 56
      %v3720 = vpop.permute.xlu0 %3719
      %3721 = vrot.lane.b32.xlu0 %v3653, 56
      %v3722 = vpop.permute.xlu0 %3721
      %3723 = vrot.lane.b32.xlu0 %v3654, 56
      %v3724 = vpop.permute.xlu0 %3723
      %3725 = vrot.lane.b32.xlu0 %v3655, 56
      %v3726 = vpop.permute.xlu0 %3725
      %3727 = vrot.lane.b32.xlu0 %v3656, 56
      %v3728 = vpop.permute.xlu0 %3727
      %3729 = vrot.lane.b32.xlu0 %v3657, 56
      %v3730 = vpop.permute.xlu0 %3729
      %3731 = vrot.lane.b32.xlu0 %v3658, 56
      %v3732 = vpop.permute.xlu0 %3731
      %3733 = vrot.lane.b32.xlu0 %v3659, 56
      %v3734 = vpop.permute.xlu0 %3733
      %3735 = vrot.lane.b32.xlu0 %v3660, 56
      %v3736 = vpop.permute.xlu0 %3735
      %3737 = vrot.lane.b32.xlu0 %v3661, 56
      %v3738 = vpop.permute.xlu0 %3737
      %3739 = vrot.lane.b32.xlu0 %v3662, 56
      %v3740 = vpop.permute.xlu0 %3739
      %3741 = vrot.lane.b32.xlu0 %v3663, 56
      %v3742 = vpop.permute.xlu0 %3741
      %3743 = vrot.lane.b32.xlu0 %v3664, 56
      %v3744 = vpop.permute.xlu0 %3743
      %3745 = vrot.lane.b32.xlu0 %v3665, 56
      %v3746 = vpop.permute.xlu0 %3745
      %3747 = vrot.lane.b32.xlu0 %v3666, 56
      %v3748 = vpop.permute.xlu0 %3747
      %3749 = vrot.lane.b32.xlu0 %v3667, 56
      %v3750 = vpop.permute.xlu0 %3749
      %3751 = vrot.lane.b32.xlu0 %v3668, 56
      %v3752 = vpop.permute.xlu0 %3751
      %3753 = vrot.lane.b32.xlu0 %v3669, 56
      %v3754 = vpop.permute.xlu0 %3753
      %3755 = vrot.lane.b32.xlu0 %v3670, 56
      %v3756 = vpop.permute.xlu0 %3755
      %3757 = vrot.lane.b32.xlu0 %v3671, 56
      %v3758 = vpop.permute.xlu0 %3757
      %3759 = vrot.lane.b32.xlu0 %v3672, 56
      %v3760 = vpop.permute.xlu0 %3759
      %3761 = vrot.lane.b32.xlu0 %v3673, 56
      %v3762 = vpop.permute.xlu0 %3761
      %3763 = vrot.lane.b32.xlu0 %v3674, 56
      %v3764 = vpop.permute.xlu0 %3763
      %3765 = vrot.lane.b32.xlu0 %v3675, 56
      %v3766 = vpop.permute.xlu0 %3765
      %3767 = vrot.lane.b32.xlu0 %v3676, 56
      %v3768 = vpop.permute.xlu0 %3767
      %3769 = vrot.lane.b32.xlu0 %v3677, 56
      %v3770 = vpop.permute.xlu0 %3769
      %3771 = vrot.lane.b32.xlu0 %v3678, 56
      %v3772 = vpop.permute.xlu0 %3771
      %3773 = vrot.lane.b32.xlu0 %v3679, 56
      %v3774 = vpop.permute.xlu0 %3773
      %3775 = vrot.lane.b32.xlu0 %v3680, 56
      %v3776 = vpop.permute.xlu0 %3775
      %vm3809 = vcmask 523712
      %3810 = vst.msk [vmem:[#allocation5] sm:$0xff] %vm3809, %v3714
      %3811 = vst.msk [vmem:[#allocation5 + $0x8] sm:$0xff] %vm3809, %v3716
      %3812 = vst.msk [vmem:[#allocation5 + $0x10] sm:$0xff] %vm3809, %v3718
      %3813 = vst.msk [vmem:[#allocation5 + $0x18] sm:$0xff] %vm3809, %v3720
      %3814 = vst.msk [vmem:[#allocation5 + $0x20] sm:$0xff] %vm3809, %v3722
      %3815 = vst.msk [vmem:[#allocation5 + $0x28] sm:$0xff] %vm3809, %v3724
      %3816 = vst.msk [vmem:[#allocation5 + $0x30] sm:$0xff] %vm3809, %v3726
      %3817 = vst.msk [vmem:[#allocation5 + $0x38] sm:$0xff] %vm3809, %v3728
      %3818 = vst.msk [vmem:[#allocation5 + $0x40] sm:$0xff] %vm3809, %v3730
      %3819 = vst.msk [vmem:[#allocation5 + $0x48] sm:$0xff] %vm3809, %v3732
      %3820 = vst.msk [vmem:[#allocation5 + $0x50] sm:$0xff] %vm3809, %v3734
      %3821 = vst.msk [vmem:[#allocation5 + $0x58] sm:$0xff] %vm3809, %v3736
      %3822 = vst.msk [vmem:[#allocation5 + $0x60] sm:$0xff] %vm3809, %v3738
      %3823 = vst.msk [vmem:[#allocation5 + $0x68] sm:$0xff] %vm3809, %v3740
      %3824 = vst.msk [vmem:[#allocation5 + $0x70] sm:$0xff] %vm3809, %v3742
      %3825 = vst.msk [vmem:[#allocation5 + $0x78] sm:$0xff] %vm3809, %v3744
      %3826 = vst.msk [vmem:[#allocation5 + $0x80] sm:$0xff] %vm3809, %v3746
      %3827 = vst.msk [vmem:[#allocation5 + $0x88] sm:$0xff] %vm3809, %v3748
      %3828 = vst.msk [vmem:[#allocation5 + $0x90] sm:$0xff] %vm3809, %v3750
      %3829 = vst.msk [vmem:[#allocation5 + $0x98] sm:$0xff] %vm3809, %v3752
      %3830 = vst.msk [vmem:[#allocation5 + $0xa0] sm:$0xff] %vm3809, %v3754
      %3831 = vst.msk [vmem:[#allocation5 + $0xa8] sm:$0xff] %vm3809, %v3756
      %3832 = vst.msk [vmem:[#allocation5 + $0xb0] sm:$0xff] %vm3809, %v3758
      %3833 = vst.msk [vmem:[#allocation5 + $0xb8] sm:$0xff] %vm3809, %v3760
      %3834 = vst.msk [vmem:[#allocation5 + $0xc0] sm:$0xff] %vm3809, %v3762
      %3835 = vst.msk [vmem:[#allocation5 + $0xc8] sm:$0xff] %vm3809, %v3764
      %3836 = vst.msk [vmem:[#allocation5 + $0xd0] sm:$0xff] %vm3809, %v3766
      %3837 = vst.msk [vmem:[#allocation5 + $0xd8] sm:$0xff] %vm3809, %v3768
      %3838 = vst.msk [vmem:[#allocation5 + $0xe0] sm:$0xff] %vm3809, %v3770
      %3839 = vst.msk [vmem:[#allocation5 + $0xe8] sm:$0xff] %vm3809, %v3772
      %3840 = vst.msk [vmem:[#allocation5 + $0xf0] sm:$0xff] %vm3809, %v3774
      %3841 = vst.msk [vmem:[#allocation5 + $0xf8] sm:$0xff] %vm3809, %v3776
      %v3842 = vld [vmem:[%s3455 + $0x2] sm:$0xff]
      %v3843 = vld [vmem:[%s3455 + $0xa] sm:$0xff]
      %v3844 = vld [vmem:[%s3455 + $0x1a] sm:$0xff]
      %v3845 = vld [vmem:[%s3455 + $0x22] sm:$0xff]
      %v3846 = vld [vmem:[%s3455 + $0x32] sm:$0xff]
      %v3847 = vld [vmem:[%s3455 + $0x3a] sm:$0xff]
      %v3848 = vld [vmem:[%s3455 + $0x4a] sm:$0xff]
      %v3849 = vld [vmem:[%s3455 + $0x52] sm:$0xff]
      %v3850 = vld [vmem:[%s3455 + $0x62] sm:$0xff]
      %v3851 = vld [vmem:[%s3455 + $0x6a] sm:$0xff]
      %v3852 = vld [vmem:[%s3455 + $0x7a] sm:$0xff]
      %v3853 = vld [vmem:[%s3455 + $0x82] sm:$0xff]
      %v3854 = vld [vmem:[%s3455 + $0x92] sm:$0xff]
      %v3855 = vld [vmem:[%s3455 + $0x9a] sm:$0xff]
      %v3856 = vld [vmem:[%s3455 + $0xaa] sm:$0xff]
      %v3857 = vld [vmem:[%s3455 + $0xb2] sm:$0xff]
      %v3858 = vld [vmem:[%s3455 + $0xc2] sm:$0xff]
      %v3859 = vld [vmem:[%s3455 + $0xca] sm:$0xff]
      %v3860 = vld [vmem:[%s3455 + $0xda] sm:$0xff]
      %v3861 = vld [vmem:[%s3455 + $0xe2] sm:$0xff]
      %v3862 = vld [vmem:[%s3455 + $0xf2] sm:$0xff]
      %v3863 = vld [vmem:[%s3455 + $0xfa] sm:$0xff]
      %v3864 = vld [vmem:[%s3455 + $0x10a] sm:$0xff]
      %v3865 = vld [vmem:[%s3455 + $0x112] sm:$0xff]
      %v3866 = vld [vmem:[%s3455 + $0x122] sm:$0xff]
      %v3867 = vld [vmem:[%s3455 + $0x12a] sm:$0xff]
      %v3868 = vld [vmem:[%s3455 + $0x13a] sm:$0xff]
      %v3869 = vld [vmem:[%s3455 + $0x142] sm:$0xff]
      %v3870 = vld [vmem:[%s3455 + $0x152] sm:$0xff]
      %v3871 = vld [vmem:[%s3455 + $0x15a] sm:$0xff]
      %v3872 = vld [vmem:[%s3455 + $0x16a] sm:$0xff]
      %v3873 = vld [vmem:[%s3455 + $0x172] sm:$0xff]
      %3906 = vrot.lane.b32.xlu0 %v3842, 64
      %v3907 = vpop.permute.xlu0 %3906
      %3908 = vrot.lane.b32.xlu0 %v3843, 64
      %v3909 = vpop.permute.xlu0 %3908
      %3910 = vrot.lane.b32.xlu0 %v3844, 64
      %v3911 = vpop.permute.xlu0 %3910
      %3912 = vrot.lane.b32.xlu0 %v3845, 64
      %v3913 = vpop.permute.xlu0 %3912
      %3914 = vrot.lane.b32.xlu0 %v3846, 64
      %v3915 = vpop.permute.xlu0 %3914
      %3916 = vrot.lane.b32.xlu0 %v3847, 64
      %v3917 = vpop.permute.xlu0 %3916
      %3918 = vrot.lane.b32.xlu0 %v3848, 64
      %v3919 = vpop.permute.xlu0 %3918
      %3920 = vrot.lane.b32.xlu0 %v3849, 64
      %v3921 = vpop.permute.xlu0 %3920
      %3922 = vrot.lane.b32.xlu0 %v3850, 64
      %v3923 = vpop.permute.xlu0 %3922
      %3924 = vrot.lane.b32.xlu0 %v3851, 64
      %v3925 = vpop.permute.xlu0 %3924
      %3926 = vrot.lane.b32.xlu0 %v3852, 64
      %v3927 = vpop.permute.xlu0 %3926
      %3928 = vrot.lane.b32.xlu0 %v3853, 64
      %v3929 = vpop.permute.xlu0 %3928
      %3930 = vrot.lane.b32.xlu0 %v3854, 64
      %v3931 = vpop.permute.xlu0 %3930
      %3932 = vrot.lane.b32.xlu0 %v3855, 64
      %v3933 = vpop.permute.xlu0 %3932
      %3934 = vrot.lane.b32.xlu0 %v3856, 64
      %v3935 = vpop.permute.xlu0 %3934
      %3936 = vrot.lane.b32.xlu0 %v3857, 64
      %v3937 = vpop.permute.xlu0 %3936
      %3938 = vrot.lane.b32.xlu0 %v3858, 64
      %v3939 = vpop.permute.xlu0 %3938
      %3940 = vrot.lane.b32.xlu0 %v3859, 64
      %v3941 = vpop.permute.xlu0 %3940
      %3942 = vrot.lane.b32.xlu0 %v3860, 64
      %v3943 = vpop.permute.xlu0 %3942
      %3944 = vrot.lane.b32.xlu0 %v3861, 64
      %v3945 = vpop.permute.xlu0 %3944
      %3946 = vrot.lane.b32.xlu0 %v3862, 64
      %v3947 = vpop.permute.xlu0 %3946
      %3948 = vrot.lane.b32.xlu0 %v3863, 64
      %v3949 = vpop.permute.xlu0 %3948
      %3950 = vrot.lane.b32.xlu0 %v3864, 64
      %v3951 = vpop.permute.xlu0 %3950
      %3952 = vrot.lane.b32.xlu0 %v3865, 64
      %v3953 = vpop.permute.xlu0 %3952
      %3954 = vrot.lane.b32.xlu0 %v3866, 64
      %v3955 = vpop.permute.xlu0 %3954
      %3956 = vrot.lane.b32.xlu0 %v3867, 64
      %v3957 = vpop.permute.xlu0 %3956
      %3958 = vrot.lane.b32.xlu0 %v3868, 64
      %v3959 = vpop.permute.xlu0 %3958
      %3960 = vrot.lane.b32.xlu0 %v3869, 64
      %v3961 = vpop.permute.xlu0 %3960
      %3962 = vrot.lane.b32.xlu0 %v3870, 64
      %v3963 = vpop.permute.xlu0 %3962
      %3964 = vrot.lane.b32.xlu0 %v3871, 64
      %v3965 = vpop.permute.xlu0 %3964
      %3966 = vrot.lane.b32.xlu0 %v3872, 64
      %v3967 = vpop.permute.xlu0 %3966
      %3968 = vrot.lane.b32.xlu0 %v3873, 64
      %v3969 = vpop.permute.xlu0 %3968
      %vm4002 = vcmask 589312
      %4003 = vst.msk [vmem:[#allocation5] sm:$0xff] %vm4002, %v3907
      %4004 = vst.msk [vmem:[#allocation5 + $0x8] sm:$0xff] %vm4002, %v3909
      %4005 = vst.msk [vmem:[#allocation5 + $0x10] sm:$0xff] %vm4002, %v3911
      %4006 = vst.msk [vmem:[#allocation5 + $0x18] sm:$0xff] %vm4002, %v3913
      %4007 = vst.msk [vmem:[#allocation5 + $0x20] sm:$0xff] %vm4002, %v3915
      %4008 = vst.msk [vmem:[#allocation5 + $0x28] sm:$0xff] %vm4002, %v3917
      %4009 = vst.msk [vmem:[#allocation5 + $0x30] sm:$0xff] %vm4002, %v3919
      %4010 = vst.msk [vmem:[#allocation5 + $0x38] sm:$0xff] %vm4002, %v3921
      %4011 = vst.msk [vmem:[#allocation5 + $0x40] sm:$0xff] %vm4002, %v3923
      %4012 = vst.msk [vmem:[#allocation5 + $0x48] sm:$0xff] %vm4002, %v3925
      %4013 = vst.msk [vmem:[#allocation5 + $0x50] sm:$0xff] %vm4002, %v3927
      %4014 = vst.msk [vmem:[#allocation5 + $0x58] sm:$0xff] %vm4002, %v3929
      %4015 = vst.msk [vmem:[#allocation5 + $0x60] sm:$0xff] %vm4002, %v3931
      %4016 = vst.msk [vmem:[#allocation5 + $0x68] sm:$0xff] %vm4002, %v3933
      %4017 = vst.msk [vmem:[#allocation5 + $0x70] sm:$0xff] %vm4002, %v3935
      %4018 = vst.msk [vmem:[#allocation5 + $0x78] sm:$0xff] %vm4002, %v3937
      %4019 = vst.msk [vmem:[#allocation5 + $0x80] sm:$0xff] %vm4002, %v3939
      %4020 = vst.msk [vmem:[#allocation5 + $0x88] sm:$0xff] %vm4002, %v3941
      %4021 = vst.msk [vmem:[#allocation5 + $0x90] sm:$0xff] %vm4002, %v3943
      %4022 = vst.msk [vmem:[#allocation5 + $0x98] sm:$0xff] %vm4002, %v3945
      %4023 = vst.msk [vmem:[#allocation5 + $0xa0] sm:$0xff] %vm4002, %v3947
      %4024 = vst.msk [vmem:[#allocation5 + $0xa8] sm:$0xff] %vm4002, %v3949
      %4025 = vst.msk [vmem:[#allocation5 + $0xb0] sm:$0xff] %vm4002, %v3951
      %4026 = vst.msk [vmem:[#allocation5 + $0xb8] sm:$0xff] %vm4002, %v3953
      %4027 = vst.msk [vmem:[#allocation5 + $0xc0] sm:$0xff] %vm4002, %v3955
      %4028 = vst.msk [vmem:[#allocation5 + $0xc8] sm:$0xff] %vm4002, %v3957
      %4029 = vst.msk [vmem:[#allocation5 + $0xd0] sm:$0xff] %vm4002, %v3959
      %4030 = vst.msk [vmem:[#allocation5 + $0xd8] sm:$0xff] %vm4002, %v3961
      %4031 = vst.msk [vmem:[#allocation5 + $0xe0] sm:$0xff] %vm4002, %v3963
      %4032 = vst.msk [vmem:[#allocation5 + $0xe8] sm:$0xff] %vm4002, %v3965
      %4033 = vst.msk [vmem:[#allocation5 + $0xf0] sm:$0xff] %vm4002, %v3967
      %4034 = vst.msk [vmem:[#allocation5 + $0xf8] sm:$0xff] %vm4002, %v3969
      %v4035 = vld [vmem:[#allocation5] sm:$0xff]
      %v4036 = vld [vmem:[#allocation5 + $0x8] sm:$0xff]
      %v4037 = vld [vmem:[#allocation5 + $0x10] sm:$0xff]
      %v4038 = vld [vmem:[#allocation5 + $0x18] sm:$0xff]
      %v4039 = vld [vmem:[#allocation5 + $0x20] sm:$0xff]
      %v4040 = vld [vmem:[#allocation5 + $0x28] sm:$0xff]
      %v4041 = vld [vmem:[#allocation5 + $0x30] sm:$0xff]
      %v4042 = vld [vmem:[#allocation5 + $0x38] sm:$0xff]
      %v4043 = vld [vmem:[#allocation5 + $0x40] sm:$0xff]
      %v4044 = vld [vmem:[#allocation5 + $0x48] sm:$0xff]
      %v4045 = vld [vmem:[#allocation5 + $0x50] sm:$0xff]
      %v4046 = vld [vmem:[#allocation5 + $0x58] sm:$0xff]
      %v4047 = vld [vmem:[#allocation5 + $0x60] sm:$0xff]
      %v4048 = vld [vmem:[#allocation5 + $0x68] sm:$0xff]
      %v4049 = vld [vmem:[#allocation5 + $0x70] sm:$0xff]
      %v4050 = vld [vmem:[#allocation5 + $0x78] sm:$0xff]
      %v4051 = vld [vmem:[#allocation5 + $0x80] sm:$0xff]
      %v4052 = vld [vmem:[#allocation5 + $0x88] sm:$0xff]
      %v4053 = vld [vmem:[#allocation5 + $0x90] sm:$0xff]
      %v4054 = vld [vmem:[#allocation5 + $0x98] sm:$0xff]
      %v4055 = vld [vmem:[#allocation5 + $0xa0] sm:$0xff]
      %v4056 = vld [vmem:[#allocation5 + $0xa8] sm:$0xff]
      %v4057 = vld [vmem:[#allocation5 + $0xb0] sm:$0xff]
      %v4058 = vld [vmem:[#allocation5 + $0xb8] sm:$0xff]
      %v4059 = vld [vmem:[#allocation5 + $0xc0] sm:$0xff]
      %v4060 = vld [vmem:[#allocation5 + $0xc8] sm:$0xff]
      %v4061 = vld [vmem:[#allocation5 + $0xd0] sm:$0xff]
      %v4062 = vld [vmem:[#allocation5 + $0xd8] sm:$0xff]
      %v4063 = vld [vmem:[#allocation5 + $0xe0] sm:$0xff]
      %v4064 = vld [vmem:[#allocation5 + $0xe8] sm:$0xff]
      %v4065 = vld [vmem:[#allocation5 + $0xf0] sm:$0xff]
      %v4066 = vld [vmem:[#allocation5 + $0xf8] sm:$0xff]
      %v4067 = vld [vmem:[%s3] sm:$0xff]
      %v4068 = vld [vmem:[%s3 + $0x8] sm:$0xff]
      %v4069 = vld [vmem:[%s3 + $0x10] sm:$0xff]
      %v4070 = vld [vmem:[%s3 + $0x18] sm:$0xff]
      %v4071 = vld [vmem:[%s3 + $0x20] sm:$0xff]
      %v4072 = vld [vmem:[%s3 + $0x28] sm:$0xff]
      %v4073 = vld [vmem:[%s3 + $0x30] sm:$0xff]
      %v4074 = vld [vmem:[%s3 + $0x38] sm:$0xff]
      %v4075 = vld [vmem:[%s3 + $0x40] sm:$0xff]
      %v4076 = vld [vmem:[%s4] sm:$0x1]
      %v4078 = vlaneseq
      %v4079 = vshrl.u32 %v4078, 7
      %v4080 = vsub.s32 0, %v4079
      %v4081 = vrot.slane %v4076, %v4080
      %vm4083 = vcmask 588800
      %v4085 = vsel %vm4083, %v4035, 0
      %v4088 = vsel %vm4083, %v4036, 0
      %v4091 = vsel %vm4083, %v4037, 0
      %v4094 = vsel %vm4083, %v4038, 0
      %v4097 = vsel %vm4083, %v4039, 0
      %v4100 = vsel %vm4083, %v4040, 0
      %v4103 = vsel %vm4083, %v4041, 0
      %v4106 = vsel %vm4083, %v4042, 0
      %v4109 = vsel %vm4083, %v4043, 0
      %v4112 = vsel %vm4083, %v4044, 0
      %v4115 = vsel %vm4083, %v4045, 0
      %v4118 = vsel %vm4083, %v4046, 0
      %v4121 = vsel %vm4083, %v4047, 0
      %v4124 = vsel %vm4083, %v4048, 0
      %v4127 = vsel %vm4083, %v4049, 0
      %v4130 = vsel %vm4083, %v4050, 0
      %v4133 = vsel %vm4083, %v4051, 0
      %v4136 = vsel %vm4083, %v4052, 0
      %v4139 = vsel %vm4083, %v4053, 0
      %v4142 = vsel %vm4083, %v4054, 0
      %v4145 = vsel %vm4083, %v4055, 0
      %v4148 = vsel %vm4083, %v4056, 0
      %v4151 = vsel %vm4083, %v4057, 0
      %v4154 = vsel %vm4083, %v4058, 0
      %v4157 = vsel %vm4083, %v4059, 0
      %v4160 = vsel %vm4083, %v4060, 0
      %v4163 = vsel %vm4083, %v4061, 0
      %v4166 = vsel %vm4083, %v4062, 0
      %v4169 = vsel %vm4083, %v4063, 0
      %v4172 = vsel %vm4083, %v4064, 0
      %v4175 = vsel %vm4083, %v4065, 0
      %v4178 = vsel %vm4083, %v4066, 0
      %4180 = vmatprep.subr.mxu0 0.0
      %4181 = vmatpush1.msra.mxu0 %v4067
      %4182 = vmatprep.subr.mxu0 0.0
      %4183 = vmatpush1.msra.mxu0 %v4068
      %4184 = vmatprep.subr.mxu0 0.0
      %4185 = vmatpush1.msra.mxu0 %v4069
      %4186 = vmatprep.subr.mxu0 0.0
      %4187 = vmatpush1.msra.mxu0 %v4070
      %4188 = vmatprep.subr.mxu0 0.0
      %4189 = vmatpush1.msra.mxu0 %v4071
      %4190 = vmatprep.subr.mxu0 0.0
      %4191 = vmatpush1.msra.mxu0 %v4072
      %4192 = vmatprep.subr.mxu0 0.0
      %4193 = vmatpush1.msra.mxu0 %v4073
      %4194 = vmatprep.subr.mxu0 0.0
      %4195 = vmatpush1.msra.mxu0 %v4074
      %4196 = vmatprep.subr.mxu0 0.0
      %4197 = vmatpush1.msra.mxu0 %v4075
      %4198 = vmatprep.subr.mxu0 0.0
      %4199 = vmatpush1.msra.mxu0 0.0
      %4200 = vmatprep.subr.mxu0 0.0
      %4201 = vmatpush1.msra.mxu0 0.0
      %4202 = vmatprep.subr.mxu0 0.0
      %4203 = vmatpush1.msra.mxu0 0.0
      %4204 = vmatprep.subr.mxu0 0.0
      %4205 = vmatpush1.msra.mxu0 0.0
      %4206 = vmatprep.subr.mxu0 0.0
      %4207 = vmatpush1.msra.mxu0 0.0
      %4208 = vmatprep.subr.mxu0 0.0
      %4209 = vmatpush1.msra.mxu0 0.0
      %4210 = vmatprep.subr.mxu0 0.0
      %4211 = vmatpush1.msra.mxu0 0.0
      %4212 = vmatprep.subr.mxu0 0.0
      %4213 = vmatpush1.msra.mxu0 0.0
      %4214 = vmatprep.subr.mxu0 0.0
      %4215 = vmatpush1.msra.mxu0 0.0
      %4216 = vmatprep.subr.mxu0 0.0
      %4217 = vmatpush1.msra.mxu0 0.0
      %4218 = vmatprep.subr.mxu0 0.0
      %4219 = vmatpush1.msra.mxu0 0.0
      %4220 = vmatprep.subr.mxu0 0.0
      %4221 = vmatpush1.msra.mxu0 0.0
      %4222 = vmatprep.subr.mxu0 0.0
      %4223 = vmatpush1.msra.mxu0 0.0
      %4224 = vmatprep.subr.mxu0 0.0
      %4225 = vmatpush1.msra.mxu0 0.0
      %4226 = vmatprep.subr.mxu0 0.0
      %4227 = vmatpush1.msra.mxu0 0.0
      %4228 = vmatprep.subr.mxu0 0.0
      %4229 = vmatpush1.msra.mxu0 0.0
      %4230 = vmatprep.subr.mxu0 0.0
      %4231 = vmatpush1.msra.mxu0 0.0
      %4232 = vmatprep.subr.mxu0 0.0
      %4233 = vmatpush1.msra.mxu0 0.0
      %4234 = vmatprep.subr.mxu0 0.0
      %4235 = vmatpush1.msra.mxu0 0.0
      %4236 = vmatprep.subr.mxu0 0.0
      %4237 = vmatpush1.msra.mxu0 0.0
      %4238 = vmatprep.subr.mxu0 0.0
      %4239 = vmatpush1.msra.mxu0 0.0
      %4240 = vmatprep.subr.mxu0 0.0
      %4241 = vmatpush1.msra.mxu0 0.0
      %4242 = vmatprep.subr.mxu0 0.0
      %4243 = vmatpush1.msra.mxu0 0.0
      %4244 = vmatprep.mubr.f32.mxu0 0.0
      %4245 = vmatmul.mubr.f32.gmra.mrb[0].mxu0 %v4085
      %v4246 = vpop.f32.mrb[0].mxu0
      %v4247 = vadd.f32 %v4081, %v4246
      %v4248 = vpop.f32.mrb[0].mxu0
      %4249 = vmatprep.mubr.f32.mxu0 0.0
      %4250 = vmatmul.mubr.f32.gmra.mrb[0].mxu0 %v4088
      %v4251 = vpop.f32.mrb[0].mxu0
      %v4252 = vadd.f32 %v4081, %v4251
      %v4253 = vpop.f32.mrb[0].mxu0
      %4254 = vmatprep.mubr.f32.mxu0 0.0
      %4255 = vmatmul.mubr.f32.gmra.mrb[0].mxu0 %v4091
      %v4256 = vpop.f32.mrb[0].mxu0
      %v4257 = vadd.f32 %v4081, %v4256
      %v4258 = vpop.f32.mrb[0].mxu0
      %4259 = vmatprep.mubr.f32.mxu0 0.0
      %4260 = vmatmul.mubr.f32.gmra.mrb[0].mxu0 %v4094
      %v4261 = vpop.f32.mrb[0].mxu0
      %v4262 = vadd.f32 %v4081, %v4261
      %v4263 = vpop.f32.mrb[0].mxu0
      %4264 = vmatprep.mubr.f32.mxu0 0.0
      %4265 = vmatmul.mubr.f32.gmra.mrb[0].mxu0 %v4097
      %v4266 = vpop.f32.mrb[0].mxu0
      %v4267 = vadd.f32 %v4081, %v4266
      %v4268 = vpop.f32.mrb[0].mxu0
      %4269 = vmatprep.mubr.f32.mxu0 0.0
      %4270 = vmatmul.mubr.f32.gmra.mrb[0].mxu0 %v4100
      %v4271 = vpop.f32.mrb[0].mxu0
      %v4272 = vadd.f32 %v4081, %v4271
      %v4273 = vpop.f32.mrb[0].mxu0
      %4274 = vmatprep.mubr.f32.mxu0 0.0
      %4275 = vmatmul.mubr.f32.gmra.mrb[0].mxu0 %v4103
      %v4276 = vpop.f32.mrb[0].mxu0
      %v4277 = vadd.f32 %v4081, %v4276
      %v4278 = vpop.f32.mrb[0].mxu0
      %4279 = vmatprep.mubr.f32.mxu0 0.0
      %4280 = vmatmul.mubr.f32.gmra.mrb[0].mxu0 %v4106
      %v4281 = vpop.f32.mrb[0].mxu0
      %v4282 = vadd.f32 %v4081, %v4281
      %v4283 = vpop.f32.mrb[0].mxu0
      %4284 = vmatprep.mubr.f32.mxu0 0.0
      %4285 = vmatmul.mubr.f32.gmra.mrb[0].mxu0 %v4109
      %v4286 = vpop.f32.mrb[0].mxu0
      %v4287 = vadd.f32 %v4081, %v4286
      %v4288 = vpop.f32.mrb[0].mxu0
      %4289 = vmatprep.mubr.f32.mxu0 0.0
      %4290 = vmatmul.mubr.f32.gmra.mrb[0].mxu0 %v4112
      %v4291 = vpop.f32.mrb[0].mxu0
      %v4292 = vadd.f32 %v4081, %v4291
      %v4293 = vpop.f32.mrb[0].mxu0
      %4294 = vmatprep.mubr.f32.mxu0 0.0
      %4295 = vmatmul.mubr.f32.gmra.mrb[0].mxu0 %v4115
      %v4296 = vpop.f32.mrb[0].mxu0
      %v4297 = vadd.f32 %v4081, %v4296
      %v4298 = vpop.f32.mrb[0].mxu0
      %4299 = vmatprep.mubr.f32.mxu0 0.0
      %4300 = vmatmul.mubr.f32.gmra.mrb[0].mxu0 %v4118
      %v4301 = vpop.f32.mrb[0].mxu0
      %v4302 = vadd.f32 %v4081, %v4301
      %v4303 = vpop.f32.mrb[0].mxu0
      %4304 = vmatprep.mubr.f32.mxu0 0.0
      %4305 = vmatmul.mubr.f32.gmra.mrb[0].mxu0 %v4121
      %v4306 = vpop.f32.mrb[0].mxu0
      %v4307 = vadd.f32 %v4081, %v4306
      %v4308 = vpop.f32.mrb[0].mxu0
      %4309 = vmatprep.mubr.f32.mxu0 0.0
      %4310 = vmatmul.mubr.f32.gmra.mrb[0].mxu0 %v4124
      %v4311 = vpop.f32.mrb[0].mxu0
      %v4312 = vadd.f32 %v4081, %v4311
      %v4313 = vpop.f32.mrb[0].mxu0
      %4314 = vmatprep.mubr.f32.mxu0 0.0
      %4315 = vmatmul.mubr.f32.gmra.mrb[0].mxu0 %v4127
      %v4316 = vpop.f32.mrb[0].mxu0
      %v4317 = vadd.f32 %v4081, %v4316
      %v4318 = vpop.f32.mrb[0].mxu0
      %4319 = vmatprep.mubr.f32.mxu0 0.0
      %4320 = vmatmul.mubr.f32.gmra.mrb[0].mxu0 %v4130
      %v4321 = vpop.f32.mrb[0].mxu0
      %v4322 = vadd.f32 %v4081, %v4321
      %v4323 = vpop.f32.mrb[0].mxu0
      %4324 = vmatprep.mubr.f32.mxu0 0.0
      %4325 = vmatmul.mubr.f32.gmra.mrb[0].mxu0 %v4133
      %v4326 = vpop.f32.mrb[0].mxu0
      %v4327 = vadd.f32 %v4081, %v4326
      %v4328 = vpop.f32.mrb[0].mxu0
      %4329 = vmatprep.mubr.f32.mxu0 0.0
      %4330 = vmatmul.mubr.f32.gmra.mrb[0].mxu0 %v4136
      %v4331 = vpop.f32.mrb[0].mxu0
      %v4332 = vadd.f32 %v4081, %v4331
      %v4333 = vpop.f32.mrb[0].mxu0
      %4334 = vmatprep.mubr.f32.mxu0 0.0
      %4335 = vmatmul.mubr.f32.gmra.mrb[0].mxu0 %v4139
      %v4336 = vpop.f32.mrb[0].mxu0
      %v4337 = vadd.f32 %v4081, %v4336
      %v4338 = vpop.f32.mrb[0].mxu0
      %4339 = vmatprep.mubr.f32.mxu0 0.0
      %4340 = vmatmul.mubr.f32.gmra.mrb[0].mxu0 %v4142
      %v4341 = vpop.f32.mrb[0].mxu0
      %v4342 = vadd.f32 %v4081, %v4341
      %v4343 = vpop.f32.mrb[0].mxu0
      %4344 = vmatprep.mubr.f32.mxu0 0.0
      %4345 = vmatmul.mubr.f32.gmra.mrb[0].mxu0 %v4145
      %v4346 = vpop.f32.mrb[0].mxu0
      %v4347 = vadd.f32 %v4081, %v4346
      %v4348 = vpop.f32.mrb[0].mxu0
      %4349 = vmatprep.mubr.f32.mxu0 0.0
      %4350 = vmatmul.mubr.f32.gmra.mrb[0].mxu0 %v4148
      %v4351 = vpop.f32.mrb[0].mxu0
      %v4352 = vadd.f32 %v4081, %v4351
      %v4353 = vpop.f32.mrb[0].mxu0
      %4354 = vmatprep.mubr.f32.mxu0 0.0
      %4355 = vmatmul.mubr.f32.gmra.mrb[0].mxu0 %v4151
      %v4356 = vpop.f32.mrb[0].mxu0
      %v4357 = vadd.f32 %v4081, %v4356
      %v4358 = vpop.f32.mrb[0].mxu0
      %4359 = vmatprep.mubr.f32.mxu0 0.0
      %4360 = vmatmul.mubr.f32.gmra.mrb[0].mxu0 %v4154
      %v4361 = vpop.f32.mrb[0].mxu0
      %v4362 = vadd.f32 %v4081, %v4361
      %v4363 = vpop.f32.mrb[0].mxu0
      %4364 = vmatprep.mubr.f32.mxu0 0.0
      %4365 = vmatmul.mubr.f32.gmra.mrb[0].mxu0 %v4157
      %v4366 = vpop.f32.mrb[0].mxu0
      %v4367 = vadd.f32 %v4081, %v4366
      %v4368 = vpop.f32.mrb[0].mxu0
      %4369 = vmatprep.mubr.f32.mxu0 0.0
      %4370 = vmatmul.mubr.f32.gmra.mrb[0].mxu0 %v4160
      %v4371 = vpop.f32.mrb[0].mxu0
      %v4372 = vadd.f32 %v4081, %v4371
      %v4373 = vpop.f32.mrb[0].mxu0
      %4374 = vmatprep.mubr.f32.mxu0 0.0
      %4375 = vmatmul.mubr.f32.gmra.mrb[0].mxu0 %v4163
      %v4376 = vpop.f32.mrb[0].mxu0
      %v4377 = vadd.f32 %v4081, %v4376
      %v4378 = vpop.f32.mrb[0].mxu0
      %4379 = vmatprep.mubr.f32.mxu0 0.0
      %4380 = vmatmul.mubr.f32.gmra.mrb[0].mxu0 %v4166
      %v4381 = vpop.f32.mrb[0].mxu0
      %v4382 = vadd.f32 %v4081, %v4381
      %v4383 = vpop.f32.mrb[0].mxu0
      %4384 = vmatprep.mubr.f32.mxu0 0.0
      %4385 = vmatmul.mubr.f32.gmra.mrb[0].mxu0 %v4169
      %v4386 = vpop.f32.mrb[0].mxu0
      %v4387 = vadd.f32 %v4081, %v4386
      %v4388 = vpop.f32.mrb[0].mxu0
      %4389 = vmatprep.mubr.f32.mxu0 0.0
      %4390 = vmatmul.mubr.f32.gmra.mrb[0].mxu0 %v4172
      %v4391 = vpop.f32.mrb[0].mxu0
      %v4392 = vadd.f32 %v4081, %v4391
      %v4393 = vpop.f32.mrb[0].mxu0
      %4394 = vmatprep.mubr.f32.mxu0 0.0
      %4395 = vmatmul.mubr.f32.gmra.mrb[0].mxu0 %v4175
      %v4396 = vpop.f32.mrb[0].mxu0
      %v4397 = vadd.f32 %v4081, %v4396
      %v4398 = vpop.f32.mrb[0].mxu0
      %4399 = vmatprep.mubr.f32.mxu0 0.0
      %4400 = vmatmul.mubr.f32.gmra.mrb[0].mxu0 %v4178
      %v4401 = vpop.f32.mrb[0].mxu0
      %v4402 = vadd.f32 %v4081, %v4401
      %v4403 = vpop.f32.mrb[0].mxu0
      %4404 = vdwg.mxu0
      %4405 = vst.msk [vmem:[%s224] sm:$0xff] %vm271, %v4247
      %4406 = vst.msk [vmem:[%s224 + $0x8] sm:$0xff] %vm271, %v4252
      %4407 = vst.msk [vmem:[%s224 + $0x10] sm:$0xff] %vm271, %v4257
      %4408 = vst.msk [vmem:[%s224 + $0x18] sm:$0xff] %vm271, %v4262
      %4409 = vst.msk [vmem:[%s224 + $0x20] sm:$0xff] %vm271, %v4267
      %4410 = vst.msk [vmem:[%s224 + $0x28] sm:$0xff] %vm271, %v4272
      %4411 = vst.msk [vmem:[%s224 + $0x30] sm:$0xff] %vm271, %v4277
      %4412 = vst.msk [vmem:[%s224 + $0x38] sm:$0xff] %vm271, %v4282
      %4413 = vst.msk [vmem:[%s224 + $0x40] sm:$0xff] %vm271, %v4287
      %4414 = vst.msk [vmem:[%s224 + $0x48] sm:$0xff] %vm271, %v4292
      %4415 = vst.msk [vmem:[%s224 + $0x50] sm:$0xff] %vm271, %v4297
      %4416 = vst.msk [vmem:[%s224 + $0x58] sm:$0xff] %vm271, %v4302
      %4417 = vst.msk [vmem:[%s224 + $0x60] sm:$0xff] %vm271, %v4307
      %4418 = vst.msk [vmem:[%s224 + $0x68] sm:$0xff] %vm271, %v4312
      %4419 = vst.msk [vmem:[%s224 + $0x70] sm:$0xff] %vm271, %v4317
      %4420 = vst.msk [vmem:[%s224 + $0x78] sm:$0xff] %vm271, %v4322
      %4421 = vst.msk [vmem:[%s224 + $0x80] sm:$0xff] %vm271, %v4327
      %4422 = vst.msk [vmem:[%s224 + $0x88] sm:$0xff] %vm271, %v4332
      %4423 = vst.msk [vmem:[%s224 + $0x90] sm:$0xff] %vm271, %v4337
      %4424 = vst.msk [vmem:[%s224 + $0x98] sm:$0xff] %vm271, %v4342
      %4425 = vst.msk [vmem:[%s224 + $0xa0] sm:$0xff] %vm271, %v4347
      %4426 = vst.msk [vmem:[%s224 + $0xa8] sm:$0xff] %vm271, %v4352
      %4427 = vst.msk [vmem:[%s224 + $0xb0] sm:$0xff] %vm271, %v4357
      %4428 = vst.msk [vmem:[%s224 + $0xb8] sm:$0xff] %vm271, %v4362
      %4429 = vst.msk [vmem:[%s224 + $0xc0] sm:$0xff] %vm271, %v4367
      %4430 = vst.msk [vmem:[%s224 + $0xc8] sm:$0xff] %vm271, %v4372
      %4431 = vst.msk [vmem:[%s224 + $0xd0] sm:$0xff] %vm271, %v4377
      %4432 = vst.msk [vmem:[%s224 + $0xd8] sm:$0xff] %vm271, %v4382
      %4433 = vst.msk [vmem:[%s224 + $0xe0] sm:$0xff] %vm271, %v4387
      %4434 = vst.msk [vmem:[%s224 + $0xe8] sm:$0xff] %vm271, %v4392
      %4435 = vst.msk [vmem:[%s224 + $0xf0] sm:$0xff] %vm271, %v4397
      %4436 = vst.msk [vmem:[%s224 + $0xf8] sm:$0xff] %vm271, %v4402
      %p4437 = scmp.lt.s32.totalorder %s16, 1
      %s4438 = scalar_select %p4437, %s16, 1
      %s4439 = smul.addr %s4438, 32
      %s4440 = smul.addr %s4439, 8
      %s4441 = scalar_lea.vmem %s5, %s4440
      // Predicated region
      $region41: #{hor_block_forward.1} parent=39 // pred_check
        %p4442 = pneg %p144
      $region42: #{hor_block_forward.1} parent=39 // pred_check_branch
        %4444 = sbr.rel (%p4442) target = $region44
      $region43: #{hor_block_forward.1} parent=39 // pred_region
        _
      $region44: #{hor_block_forward.1} parent=39 // pred_fallthru
        _
    $region40: #{hor_block_forward.1} parent=5 // pred_fallthru
      _
    %p4445 = scmp.le.s32.totalorder 2, %s11
    // Predicated region
    $region45: #{hor_block_forward.1} parent=5 // pred_check
      %p4446 = pneg %p4445
    $region46: #{hor_block_forward.1} parent=5 // pred_check_branch
      %4448 = sbr.rel (%p4446) target = $region48
    $region47: #{hor_block_forward.1} parent=5 // pred_region
      %s4449 = ssub.s32 %s11, 2
      // Predicated region
      $region49: #{hor_block_forward.1} parent=47 // pred_check
        %p4450 = pneg %p150
      $region50: #{hor_block_forward.1} parent=47 // pred_check_branch
        %4452 = sbr.rel (%p4450) target = $region52
      $region51: #{hor_block_forward.1} parent=47 // pred_region
        %p4453 = scmp.lt.s32.totalorder %s17, 1
        %s4454 = scalar_select %p4453, %s17, 1
        %s4455 = smul.addr %s4454, 32
        %s4456 = smul.addr %s4455, 8
        %s4457 = scalar_lea.vmem %s5, %s4456
      $region52: #{hor_block_forward.1} parent=47 // pred_fallthru
        _
    $region48: #{hor_block_forward.1} parent=5 // pred_fallthru
      _
  $region6: #{hor_block_forward.1} parent=0 // loop_footer
    %s15 = sadd.s32 1, %s11
  $region7: #{hor_block_forward.1} parent=0 // loop_footer_branch
    %10 = sbr.rel target = $region3
  $region8: #{hor_block_forward.1} parent=0 // loop_exit
    _

</llo_original>
